<compile_context>
chip_gen: v5e
topology: v5e:2x2
jax: 0.10.0
libtpu: 0.0.40
codegen_flags: <defaults>
</compile_context>

<pallas_src>
import math

import jax
import jax.numpy as jnp
from jax import lax
from jax.experimental import pallas as pl
from jax.experimental.pallas import tpu as pltpu

VMEM = pltpu.MemorySpace.VMEM
_SLAB_LANES = 128     # lane width of the packed constant slab
_TYPE_PAD = 8         # token-type table padded to 8 rows (sublane-friendly)

# ---------------- small synthetic BERT config ----------------
CFG = dict(
    vocab=128,        # vocab size
    hidden=32,        # hidden_size == get_feature_size()
    heads=4,          # attention heads
    layers=2,         # encoder layers
    inter=64,         # FFN intermediate size
    max_pos=16,       # max position embeddings
    type_vocab=2,     # token type vocab
    ln_eps=1e-12,
)


def _up8(n):
    return ((n + 7) // 8) * 8


# ---------------- slab layout (shared by packer and kernel) ----------------
def _layout(cfg, rows, bf_pad):
    """Row offsets of every tensor inside the single packed (nrows, 128) slab."""
    H, I, V, L = cfg["hidden"], cfg["inter"], cfg["vocab"], cfg["layers"]
    cur = 0

    def alloc(n):
        nonlocal cur
        o = cur
        cur += _up8(n)          # keep every block 8-sublane aligned
        return o

    offs = dict(
        word=alloc(V),          # (V, H) word embeddings
        pos=alloc(rows),        # (rows, H) pre-tiled position embeddings
        type=alloc(_TYPE_PAD),  # (8, H) padded token-type embeddings
        sel=alloc(bf_pad),      # (bf_pad, rows) CLS-row selection one-hot
        emb_vecs=alloc(2),      # rows: emb_ln_g, emb_ln_b
        pool_w=alloc(H),        # (H, H) pooler weight (lanes >= H are zero)
        pool_b=alloc(1),        # pooler bias row
        layers=[],
    )
    for _ in range(L):
        offs["layers"].append(dict(
            wq=alloc(H), wkT=alloc(H), wv=alloc(H), wo=alloc(H),
            w1=alloc(H), w2=alloc(I),
            bk=alloc(H),          # K bias stored as a (H, 1) column
            vecs=alloc(9),        # rows: bq, bv, bo, ln1g, ln1b, ln2g, ln2b, b1, b2
        ))
    return offs, cur


# ---------------- single fused Pallas kernel (whole model) ----------------
def _make_kernel(cfg, rows, bf_pad, offs):
    H, heads, L = cfg["hidden"], cfg["heads"], cfg["layers"]
    V, I, eps = cfg["vocab"], cfg["inter"], cfg["ln_eps"]
    dh = H // heads
    scale = 1.0 / math.sqrt(dh)
    f32 = jnp.float32

    def layer_norm(x, g, b):
        mu = jnp.mean(x, axis=-1, keepdims=True)
        xc = x - mu
        var = jnp.mean(xc * xc, axis=-1, keepdims=True)
        return (xc * lax.rsqrt(var + eps)) * g + b

    def gelu(x):
        # TODO(synk): HF BERT default is exact (erf) GELU; tanh approximation kept for Mosaic-safe lowering.
        c = math.sqrt(2.0 / math.pi)
        return 0.5 * x * (1.0 + jnp.tanh(c * (x + 0.044715 * x * x * x)))

    def kernel(ids_tty_ref, masks_ref, c_ref, out_ref):
        def mat(off, r, c):
            return c_ref[off:off + r, :c]

        def row(off, c):
            return c_ref[off:off + 1, :c]

        # ---- embeddings: word/type via exact one-hot MXU matmuls, positions pre-tiled ----
        ids = ids_tty_ref[:, 0:1]                                  # (rows, 1) int32
        tty = ids_tty_ref[:, 1:2]                                  # (rows, 1) int32
        v_iota = lax.broadcasted_iota(jnp.int32, (rows, V), 1)
        word = jnp.dot((ids == v_iota).astype(f32), mat(offs["word"], V, H),
                       preferred_element_type=f32)
        t_iota = lax.broadcasted_iota(jnp.int32, (rows, _TYPE_PAD), 1)
        typ = jnp.dot((tty == t_iota).astype(f32), mat(offs["type"], _TYPE_PAD, H),
                      preferred_element_type=f32)
        pos = mat(offs["pos"], rows, H)                            # precomputed tile
        x = layer_norm(word + pos + typ,
                       row(offs["emb_vecs"], H), row(offs["emb_vecs"] + 1, H))

        add_mask = masks_ref[0:rows, :]                            # (rows, rows)
        add_mask_cls = masks_ref[rows:rows + bf_pad, :]            # (bf_pad, rows)

        def enc_layer(x_q, x_kv, mask, ld):
            vb = ld["vecs"]
            bq, bv, bo = row(vb + 0, H), row(vb + 1, H), row(vb + 2, H)
            ln1g, ln1b = row(vb + 3, H), row(vb + 4, H)
            ln2g, ln2b = row(vb + 5, H), row(vb + 6, H)
            b1, b2 = row(vb + 7, I), row(vb + 8, H)
            bk_col = c_ref[ld["bk"]:ld["bk"] + H, 0:1]             # (H, 1) column

            q = jnp.dot(x_q, mat(ld["wq"], H, H), preferred_element_type=f32) + bq
            # K is emitted directly in transposed (H, nk) layout: ONE relayout per
            # layer instead of one per head (wkT is stored pre-transposed in the slab).
            kT = lax.dot_general(mat(ld["wkT"], H, H), x_kv,
                                 (((1,), (1,)), ((), ())),
                                 preferred_element_type=f32) + bk_col
            v = jnp.dot(x_kv, mat(ld["wv"], H, H), preferred_element_type=f32) + bv

            acc = jnp.zeros((x_q.shape[0], H), f32)
            for h in range(heads):
                qh = q[:, h * dh:(h + 1) * dh]
                kTh = kT[h * dh:(h + 1) * dh, :]                   # 8-aligned sublane slice
                vh = v[:, h * dh:(h + 1) * dh]
                s = jnp.dot(qh, kTh, preferred_element_type=f32) * scale + mask
                p = jnp.exp(s - jnp.max(s, axis=-1, keepdims=True))
                p = p / jnp.sum(p, axis=-1, keepdims=True)         # exact divide
                ctx = jnp.dot(p, vh, preferred_element_type=f32)
                # fold the head concat into the output projection (per-head accumulate)
                acc = acc + jnp.dot(ctx, mat(ld["wo"] + h * dh, dh, H),
                                    preferred_element_type=f32)

            xa = layer_norm(acc + bo + x_q, ln1g, ln1b)
            hmid = gelu(jnp.dot(xa, mat(ld["w1"], H, I), preferred_element_type=f32) + b1)
            ffn = jnp.dot(hmid, mat(ld["w2"], I, H), preferred_element_type=f32) + b2
            return layer_norm(ffn + xa, ln2g, ln2b)

        # all-but-last encoder layers over the full (rows, H) slab
        for l in range(L - 1):
            x = enc_layer(x, x, add_mask, offs["layers"][l])

        # last layer: only CLS rows feed the pooler -> restrict Q / FFN / LN to them
        sel = mat(offs["sel"], bf_pad, rows)                       # precomputed one-hot
        x_cls = jnp.dot(sel, x, preferred_element_type=f32)        # (bf_pad, H)
        x_cls = enc_layer(x_cls, x, add_mask_cls, offs["layers"][L - 1])

        # pooler (dense + tanh); slab lanes beyond H are zero -> lane-dense (8,128) store
        pooled = jnp.tanh(
            jnp.dot(x_cls, c_ref[offs["pool_w"]:offs["pool_w"] + H, :],
                    preferred_element_type=f32)
            + c_ref[offs["pool_b"]:offs["pool_b"] + 1, :])
        out_ref[...] = pooled

    return kernel


# ---------------- deterministic parameter init (no Python hash()) ----------------
def init_params(key, cfg):
    H, I = cfg["hidden"], cfg["inter"]
    counter = [0]

    def nk():
        counter[0] += 1
        return jax.random.fold_in(key, counter[0])

    def nrm(shape, scale=0.02):
        return scale * jax.random.normal(nk(), shape, dtype=jnp.float32)

    params = dict(
        word_emb=nrm((cfg["vocab"], H)),
        pos_emb=nrm((cfg["max_pos"], H)),
        type_emb=nrm((cfg["type_vocab"], H)),
        emb_ln_g=jnp.ones((H,), jnp.float32),
        emb_ln_b=jnp.zeros((H,), jnp.float32),
        pool_w=nrm((H, H)),
        pool_b=jnp.zeros((H,), jnp.float32),
        layers=[],
    )
    for _ in range(cfg["layers"]):
        params["layers"].append(dict(
            wq=nrm((H, H)), bq=jnp.zeros((H,), jnp.float32),
            wk=nrm((H, H)), bk=jnp.zeros((H,), jnp.float32),
            wv=nrm((H, H)), bv=jnp.zeros((H,), jnp.float32),
            wo=nrm((H, H)), bo=jnp.zeros((H,), jnp.float32),
            ln1_g=jnp.ones((H,), jnp.float32), ln1_b=jnp.zeros((H,), jnp.float32),
            w1=nrm((H, I)), b1=jnp.zeros((I,), jnp.float32),
            w2=nrm((I, H)), b2=jnp.zeros((H,), jnp.float32),
            ln2_g=jnp.ones((H,), jnp.float32), ln2_b=jnp.zeros((H,), jnp.float32),
        ))
    return params


# ---------------- pack all weights + static tensors into ONE slab (once, at init) ----------------
def pack_constants(params, cfg, batch, step, seq):
    H = cfg["hidden"]
    Bf = batch * step
    rows = Bf * seq
    bf_pad = max(8, _up8(Bf))
    offs, nrows = _layout(cfg, rows, bf_pad)
    slab = jnp.zeros((nrows, _SLAB_LANES), jnp.float32)

    def put(s, off, arr):
        arr = jnp.asarray(arr, jnp.float32)
        if arr.ndim == 1:
            arr = arr.reshape(1, -1)
        return s.at[off:off + arr.shape[0], :arr.shape[1]].set(arr)

    slab = put(slab, offs["word"], params["word_emb"])
    slab = put(slab, offs["pos"], jnp.tile(params["pos_emb"][:seq], (Bf, 1)))
    type_pad = jnp.zeros((_TYPE_PAD, H), jnp.float32).at[:cfg["type_vocab"]].set(params["type_emb"])
    slab = put(slab, offs["type"], type_pad)
    sel = jnp.zeros((bf_pad, rows), jnp.float32).at[jnp.arange(Bf), jnp.arange(Bf) * seq].set(1.0)
    slab = put(slab, offs["sel"], sel)
    slab = put(slab, offs["emb_vecs"], jnp.stack([params["emb_ln_g"], params["emb_ln_b"]]))
    slab = put(slab, offs["pool_w"], params["pool_w"])
    slab = put(slab, offs["pool_b"], params["pool_b"])

    for l, lp in enumerate(params["layers"]):
        ld = offs["layers"][l]
        slab = put(slab, ld["wq"], lp["wq"])
        slab = put(slab, ld["wkT"], lp["wk"].T)            # pre-transposed K weight
        slab = put(slab, ld["wv"], lp["wv"])
        slab = put(slab, ld["wo"], lp["wo"])
        slab = put(slab, ld["w1"], lp["w1"])
        slab = put(slab, ld["w2"], lp["w2"])
        slab = put(slab, ld["bk"], lp["bk"].reshape(H, 1))  # K bias as a column
        slab = put(slab, ld["vecs"] + 0, lp["bq"])
        slab = put(slab, ld["vecs"] + 1, lp["bv"])
        slab = put(slab, ld["vecs"] + 2, lp["bo"])
        slab = put(slab, ld["vecs"] + 3, lp["ln1_g"])
        slab = put(slab, ld["vecs"] + 4, lp["ln1_b"])
        slab = put(slab, ld["vecs"] + 5, lp["ln2_g"])
        slab = put(slab, ld["vecs"] + 6, lp["ln2_b"])
        slab = put(slab, ld["vecs"] + 7, lp["b1"])
        slab = put(slab, ld["vecs"] + 8, lp["b2"])
    return slab


# ---------------- forward (= ModelPointerEmbedderPooling.forward) ----------------
def model_pointer_embedder_pooling(consts, input_ids, attention_mask, token_type_ids, cfg=CFG):
    batch, step, seq = input_ids.shape
    H = cfg["hidden"]
    Bf = batch * step
    bf_pad = max(8, _up8(Bf))
    rows = Bf * seq
    offs, nrows = _layout(cfg, rows, bf_pad)
    assert consts.shape == (nrows, _SLAB_LANES), (consts.shape, (nrows, _SLAB_LANES))

    # Rearrange('batch step token -> (batch step) token') -- pure index glue
    ids = input_ids.reshape(rows).astype(jnp.int32)
    tty = jnp.clip(token_type_ids.reshape(rows).astype(jnp.int32), 0, _TYPE_PAD - 1)
    ids_tty = jnp.stack([ids, tty], axis=-1)                        # (rows, 2) -> one DMA

    # additive masks built once in XLA: block-diagonal (per-sequence) x key padding,
    # plus the CLS-query-row variant used by the restricted last layer.
    amask = attention_mask.reshape(rows).astype(jnp.float32)
    seq_id = jnp.arange(rows, dtype=jnp.int32) // seq
    valid = (seq_id[:, None] == seq_id[None, :]).astype(jnp.float32) * amask[None, :]
    add_mask = (1.0 - valid) * jnp.float32(-1e9)                    # (rows, rows)
    cls_rows = jnp.arange(Bf) * seq
    add_mask_cls = jnp.zeros((bf_pad, rows), jnp.float32).at[:Bf].set(add_mask[cls_rows])
    masks = jnp.concatenate([add_mask, add_mask_cls], axis=0)       # (rows+bf_pad, rows)

    kernel = _make_kernel(cfg, rows, bf_pad, offs)
    pooled = pl.pallas_call(
        kernel,
        out_shape=jax.ShapeDtypeStruct((bf_pad, _SLAB_LANES), jnp.float32),
        in_specs=[pl.BlockSpec(memory_space=VMEM)] * 3,             # 3 input DMAs total
        out_specs=pl.BlockSpec(memory_space=VMEM),
    )(ids_tty, masks, consts)

    # '(batch step) feature -> batch step feature'
    return pooled[:Bf, :H].reshape(batch, step, H)


if __name__ == "__main__":
    key = jax.random.PRNGKey(0)
    kp, kid = jax.random.split(key)
    params = init_params(kp, CFG)

    batch, step, seq = 2, 3, 8
    input_ids = jax.random.randint(kid, (batch, step, seq), 0, CFG["vocab"], dtype=jnp.int32)
    attention_mask = jnp.ones((batch, step, seq), dtype=jnp.int32).at[0, 0, 6:].set(0)
    token_type_ids = jnp.zeros((batch, step, seq), dtype=jnp.int32)

    # pack all weights + static tensors into ONE (N, 128) slab, once, at init time
    consts = pack_constants(params, CFG, batch, step, seq)

    out = model_pointer_embedder_pooling(consts, input_ids, attention_mask, token_type_ids)
    out = jax.block_until_ready(out)
    assert out.shape == (batch, step, CFG["hidden"]), out.shape
    assert bool(jnp.all(jnp.isfinite(out)))
    print("KERNEL_OK")
</pallas_src>

<mosaic_0001>
module attributes {stable_mosaic.version = 11 : i64} {
  func.func @kernel(%arg0: memref<48x2xi32, #tpu.memory_space<vmem>>, %arg1: memref<56x48xf32, #tpu.memory_space<vmem>>, %arg2: memref<784x128xf32, #tpu.memory_space<vmem>>, %arg3: memref<8x128xf32, #tpu.memory_space<vmem>>) attributes {dimension_semantics = [], scalar_prefetch = 0 : i64, scratch_operands = 0 : i64, tpu.core_type = #tpu.core_type<tc>} {
    %c0 = arith.constant 0 : index
    %c0_0 = arith.constant 0 : index
    %0 = vector.load %arg0[%c0, %c0_0] : memref<48x2xi32, #tpu.memory_space<vmem>>, vector<48x1xi32>
    %c0_1 = arith.constant 0 : index
    %c1 = arith.constant 1 : index
    %1 = vector.load %arg0[%c0_1, %c1] : memref<48x2xi32, #tpu.memory_space<vmem>>, vector<48x1xi32>
    %2 = tpu.iota {dimensions = array<i32: 1>} : vector<48x128xi32>
    %3 = vector.broadcast %0 : vector<48x1xi32> to vector<48x128xi32>
    %4 = arith.cmpi eq, %3, %2 : vector<48x128xi32>
    %5 = arith.extui %4 : vector<48x128xi1> to vector<48x128xi32>
    %6 = arith.sitofp %5 : vector<48x128xi32> to vector<48x128xf32>
    %c0_2 = arith.constant 0 : index
    %c0_3 = arith.constant 0 : index
    %7 = vector.load %arg2[%c0_2, %c0_3] : memref<784x128xf32, #tpu.memory_space<vmem>>, vector<128x32xf32>
    %cst = arith.constant dense<0.000000e+00> : vector<48x32xf32>
    %8 = tpu.matmul %6, %7, %cst {dimension_numbers = #tpu.dot_dimension_numbers<[1], [0], [0], [1], [0, 0, 1, 1], [], []>} : vector<48x128xf32>, vector<128x32xf32>, vector<48x32xf32> -> vector<48x32xf32>
    %9 = tpu.iota {dimensions = array<i32: 1>} : vector<48x8xi32>
    %10 = vector.broadcast %1 : vector<48x1xi32> to vector<48x8xi32>
    %11 = arith.cmpi eq, %10, %9 : vector<48x8xi32>
    %12 = arith.extui %11 : vector<48x8xi1> to vector<48x8xi32>
    %13 = arith.sitofp %12 : vector<48x8xi32> to vector<48x8xf32>
    %c176 = arith.constant 176 : index
    %c0_4 = arith.constant 0 : index
    %14 = vector.load %arg2[%c176, %c0_4] : memref<784x128xf32, #tpu.memory_space<vmem>>, vector<8x32xf32>
    %cst_5 = arith.constant dense<0.000000e+00> : vector<48x32xf32>
    %15 = tpu.matmul %13, %14, %cst_5 {dimension_numbers = #tpu.dot_dimension_numbers<[1], [0], [0], [1], [0, 0, 1, 1], [], []>} : vector<48x8xf32>, vector<8x32xf32>, vector<48x32xf32> -> vector<48x32xf32>
    %c128 = arith.constant 128 : index
    %c0_6 = arith.constant 0 : index
    %16 = vector.load %arg2[%c128, %c0_6] : memref<784x128xf32, #tpu.memory_space<vmem>>, vector<48x32xf32>
    %17 = arith.addf %8, %16 : vector<48x32xf32>
    %18 = arith.addf %17, %15 : vector<48x32xf32>
    %c192 = arith.constant 192 : index
    %c0_7 = arith.constant 0 : index
    %19 = vector.load %arg2[%c192, %c0_7] : memref<784x128xf32, #tpu.memory_space<vmem>>, vector<1x32xf32>
    %c193 = arith.constant 193 : index
    %c0_8 = arith.constant 0 : index
    %20 = vector.load %arg2[%c193, %c0_8] : memref<784x128xf32, #tpu.memory_space<vmem>>, vector<1x32xf32>
    %cst_9 = arith.constant dense<0.000000e+00> : vector<48xf32>
    %21 = vector.multi_reduction <add>, %18, %cst_9 [1] : vector<48x32xf32> to vector<48xf32>
    %22 = vector.shape_cast %21 : vector<48xf32> to vector<48x1xf32>
    %cst_10 = arith.constant 3.200000e+01 : f32
    %23 = vector.broadcast %cst_10 : f32 to vector<48x1xf32>
    %24 = arith.divf %22, %23 : vector<48x1xf32>
    %25 = vector.broadcast %24 : vector<48x1xf32> to vector<48x32xf32>
    %26 = arith.subf %18, %25 : vector<48x32xf32>
    %27 = arith.mulf %26, %26 : vector<48x32xf32>
    %cst_11 = arith.constant dense<0.000000e+00> : vector<48xf32>
    %28 = vector.multi_reduction <add>, %27, %cst_11 [1] : vector<48x32xf32> to vector<48xf32>
    %29 = vector.shape_cast %28 : vector<48xf32> to vector<48x1xf32>
    %cst_12 = arith.constant 3.200000e+01 : f32
    %30 = vector.broadcast %cst_12 : f32 to vector<48x1xf32>
    %31 = arith.divf %29, %30 : vector<48x1xf32>
    %cst_13 = arith.constant 9.99999996E-13 : f32
    %32 = vector.broadcast %cst_13 : f32 to vector<48x1xf32>
    %33 = arith.addf %31, %32 : vector<48x1xf32>
    %34 = math.rsqrt %33 : vector<48x1xf32>
    %35 = vector.broadcast %34 : vector<48x1xf32> to vector<48x32xf32>
    %36 = arith.mulf %26, %35 : vector<48x32xf32>
    %37 = vector.broadcast %19 : vector<1x32xf32> to vector<48x32xf32>
    %38 = arith.mulf %36, %37 : vector<48x32xf32>
    %39 = vector.broadcast %20 : vector<1x32xf32> to vector<48x32xf32>
    %40 = arith.addf %38, %39 : vector<48x32xf32>
    %c0_14 = arith.constant 0 : index
    %c0_15 = arith.constant 0 : index
    %41 = vector.load %arg1[%c0_14, %c0_15] : memref<56x48xf32, #tpu.memory_space<vmem>>, vector<48x48xf32>
    %c48 = arith.constant 48 : index
    %c0_16 = arith.constant 0 : index
    %42 = vector.load %arg1[%c48, %c0_16] : memref<56x48xf32, #tpu.memory_space<vmem>>, vector<8x48xf32>
    %c496 = arith.constant 496 : index
    %c0_17 = arith.constant 0 : index
    %43 = vector.load %arg2[%c496, %c0_17] : memref<784x128xf32, #tpu.memory_space<vmem>>, vector<1x32xf32>
    %c497 = arith.constant 497 : index
    %c0_18 = arith.constant 0 : index
    %44 = vector.load %arg2[%c497, %c0_18] : memref<784x128xf32, #tpu.memory_space<vmem>>, vector<1x32xf32>
    %c498 = arith.constant 498 : index
    %c0_19 = arith.constant 0 : index
    %45 = vector.load %arg2[%c498, %c0_19] : memref<784x128xf32, #tpu.memory_space<vmem>>, vector<1x32xf32>
    %c499 = arith.constant 499 : index
    %c0_20 = arith.constant 0 : index
    %46 = vector.load %arg2[%c499, %c0_20] : memref<784x128xf32, #tpu.memory_space<vmem>>, vector<1x32xf32>
    %c500 = arith.constant 500 : index
    %c0_21 = arith.constant 0 : index
    %47 = vector.load %arg2[%c500, %c0_21] : memref<784x128xf32, #tpu.memory_space<vmem>>, vector<1x32xf32>
    %c501 = arith.constant 501 : index
    %c0_22 = arith.constant 0 : index
    %48 = vector.load %arg2[%c501, %c0_22] : memref<784x128xf32, #tpu.memory_space<vmem>>, vector<1x32xf32>
    %c502 = arith.constant 502 : index
    %c0_23 = arith.constant 0 : index
    %49 = vector.load %arg2[%c502, %c0_23] : memref<784x128xf32, #tpu.memory_space<vmem>>, vector<1x32xf32>
    %c503 = arith.constant 503 : index
    %c0_24 = arith.constant 0 : index
    %50 = vector.load %arg2[%c503, %c0_24] : memref<784x128xf32, #tpu.memory_space<vmem>>, vector<1x64xf32>
    %c504 = arith.constant 504 : index
    %c0_25 = arith.constant 0 : index
    %51 = vector.load %arg2[%c504, %c0_25] : memref<784x128xf32, #tpu.memory_space<vmem>>, vector<1x32xf32>
    %c464 = arith.constant 464 : index
    %c0_26 = arith.constant 0 : index
    %52 = vector.load %arg2[%c464, %c0_26] : memref<784x128xf32, #tpu.memory_space<vmem>>, vector<32x1xf32>
    %c240 = arith.constant 240 : index
    %c0_27 = arith.constant 0 : index
    %53 = vector.load %arg2[%c240, %c0_27] : memref<784x128xf32, #tpu.memory_space<vmem>>, vector<32x32xf32>
    %cst_28 = arith.constant dense<0.000000e+00> : vector<48x32xf32>
    %54 = tpu.matmul %40, %53, %cst_28 {dimension_numbers = #tpu.dot_dimension_numbers<[1], [0], [0], [1], [0, 0, 1, 1], [], []>} : vector<48x32xf32>, vector<32x32xf32>, vector<48x32xf32> -> vector<48x32xf32>
    %55 = vector.broadcast %43 : vector<1x32xf32> to vector<48x32xf32>
    %56 = arith.addf %54, %55 : vector<48x32xf32>
    %c272 = arith.constant 272 : index
    %c0_29 = arith.constant 0 : index
    %57 = vector.load %arg2[%c272, %c0_29] : memref<784x128xf32, #tpu.memory_space<vmem>>, vector<32x32xf32>
    %cst_30 = arith.constant dense<0.000000e+00> : vector<32x48xf32>
    %58 = tpu.matmul %57, %40, %cst_30 {dimension_numbers = #tpu.dot_dimension_numbers<[1], [1], [0], [0], [0, 0, 1, 0], [], []>} : vector<32x32xf32>, vector<48x32xf32>, vector<32x48xf32> -> vector<32x48xf32>
    %59 = vector.broadcast %52 : vector<32x1xf32> to vector<32x48xf32>
    %60 = arith.addf %58, %59 : vector<32x48xf32>
    %c304 = arith.constant 304 : index
    %c0_31 = arith.constant 0 : index
    %61 = vector.load %arg2[%c304, %c0_31] : memref<784x128xf32, #tpu.memory_space<vmem>>, vector<32x32xf32>
    %cst_32 = arith.constant dense<0.000000e+00> : vector<48x32xf32>
    %62 = tpu.matmul %40, %61, %cst_32 {dimension_numbers = #tpu.dot_dimension_numbers<[1], [0], [0], [1], [0, 0, 1, 1], [], []>} : vector<48x32xf32>, vector<32x32xf32>, vector<48x32xf32> -> vector<48x32xf32>
    %63 = vector.broadcast %44 : vector<1x32xf32> to vector<48x32xf32>
    %64 = arith.addf %62, %63 : vector<48x32xf32>
    %cst_33 = arith.constant 0.000000e+00 : f32
    %65 = vector.broadcast %cst_33 : f32 to vector<48x32xf32>
    %66 = vector.extract_strided_slice %56 {offsets = [0, 0], sizes = [48, 8], strides = [1, 1]} : vector<48x32xf32> to vector<48x8xf32>
    %67 = vector.extract_strided_slice %60 {offsets = [0, 0], sizes = [8, 48], strides = [1, 1]} : vector<32x48xf32> to vector<8x48xf32>
    %68 = vector.extract_strided_slice %64 {offsets = [0, 0], sizes = [48, 8], strides = [1, 1]} : vector<48x32xf32> to vector<48x8xf32>
    %cst_34 = arith.constant dense<0.000000e+00> : vector<48x48xf32>
    %69 = tpu.matmul %66, %67, %cst_34 {dimension_numbers = #tpu.dot_dimension_numbers<[1], [0], [0], [1], [0, 0, 1, 1], [], []>} : vector<48x8xf32>, vector<8x48xf32>, vector<48x48xf32> -> vector<48x48xf32>
    %cst_35 = arith.constant 0.353553385 : f32
    %70 = vector.broadcast %cst_35 : f32 to vector<48x48xf32>
    %71 = arith.mulf %69, %70 : vector<48x48xf32>
    %72 = arith.addf %71, %41 : vector<48x48xf32>
    %cst_36 = arith.constant dense<0xFF800000> : vector<48xf32>
    %73 = vector.multi_reduction <maximumf>, %72, %cst_36 [1] : vector<48x48xf32> to vector<48xf32>
    %74 = vector.shape_cast %73 : vector<48xf32> to vector<48x1xf32>
    %75 = vector.broadcast %74 : vector<48x1xf32> to vector<48x48xf32>
    %76 = arith.subf %72, %75 : vector<48x48xf32>
    %77 = math.exp %76 : vector<48x48xf32>
    %cst_37 = arith.constant dense<0.000000e+00> : vector<48xf32>
    %78 = vector.multi_reduction <add>, %77, %cst_37 [1] : vector<48x48xf32> to vector<48xf32>
    %79 = vector.shape_cast %78 : vector<48xf32> to vector<48x1xf32>
    %80 = vector.broadcast %79 : vector<48x1xf32> to vector<48x48xf32>
    %81 = arith.divf %77, %80 : vector<48x48xf32>
    %cst_38 = arith.constant dense<0.000000e+00> : vector<48x8xf32>
    %82 = tpu.matmul %81, %68, %cst_38 {dimension_numbers = #tpu.dot_dimension_numbers<[1], [0], [0], [1], [0, 0, 1, 1], [], []>} : vector<48x48xf32>, vector<48x8xf32>, vector<48x8xf32> -> vector<48x8xf32>
    %c336 = arith.constant 336 : index
    %c0_39 = arith.constant 0 : index
    %83 = vector.load %arg2[%c336, %c0_39] : memref<784x128xf32, #tpu.memory_space<vmem>>, vector<8x32xf32>
    %cst_40 = arith.constant dense<0.000000e+00> : vector<48x32xf32>
    %84 = tpu.matmul %82, %83, %cst_40 {dimension_numbers = #tpu.dot_dimension_numbers<[1], [0], [0], [1], [0, 0, 1, 1], [], []>} : vector<48x8xf32>, vector<8x32xf32>, vector<48x32xf32> -> vector<48x32xf32>
    %85 = arith.addf %65, %84 : vector<48x32xf32>
    %86 = vector.extract_strided_slice %56 {offsets = [0, 8], sizes = [48, 8], strides = [1, 1]} : vector<48x32xf32> to vector<48x8xf32>
    %87 = vector.extract_strided_slice %60 {offsets = [8, 0], sizes = [8, 48], strides = [1, 1]} : vector<32x48xf32> to vector<8x48xf32>
    %88 = vector.extract_strided_slice %64 {offsets = [0, 8], sizes = [48, 8], strides = [1, 1]} : vector<48x32xf32> to vector<48x8xf32>
    %cst_41 = arith.constant dense<0.000000e+00> : vector<48x48xf32>
    %89 = tpu.matmul %86, %87, %cst_41 {dimension_numbers = #tpu.dot_dimension_numbers<[1], [0], [0], [1], [0, 0, 1, 1], [], []>} : vector<48x8xf32>, vector<8x48xf32>, vector<48x48xf32> -> vector<48x48xf32>
    %cst_42 = arith.constant 0.353553385 : f32
    %90 = vector.broadcast %cst_42 : f32 to vector<48x48xf32>
    %91 = arith.mulf %89, %90 : vector<48x48xf32>
    %92 = arith.addf %91, %41 : vector<48x48xf32>
    %cst_43 = arith.constant dense<0xFF800000> : vector<48xf32>
    %93 = vector.multi_reduction <maximumf>, %92, %cst_43 [1] : vector<48x48xf32> to vector<48xf32>
    %94 = vector.shape_cast %93 : vector<48xf32> to vector<48x1xf32>
    %95 = vector.broadcast %94 : vector<48x1xf32> to vector<48x48xf32>
    %96 = arith.subf %92, %95 : vector<48x48xf32>
    %97 = math.exp %96 : vector<48x48xf32>
    %cst_44 = arith.constant dense<0.000000e+00> : vector<48xf32>
    %98 = vector.multi_reduction <add>, %97, %cst_44 [1] : vector<48x48xf32> to vector<48xf32>
    %99 = vector.shape_cast %98 : vector<48xf32> to vector<48x1xf32>
    %100 = vector.broadcast %99 : vector<48x1xf32> to vector<48x48xf32>
    %101 = arith.divf %97, %100 : vector<48x48xf32>
    %cst_45 = arith.constant dense<0.000000e+00> : vector<48x8xf32>
    %102 = tpu.matmul %101, %88, %cst_45 {dimension_numbers = #tpu.dot_dimension_numbers<[1], [0], [0], [1], [0, 0, 1, 1], [], []>} : vector<48x48xf32>, vector<48x8xf32>, vector<48x8xf32> -> vector<48x8xf32>
    %c344 = arith.constant 344 : index
    %c0_46 = arith.constant 0 : index
    %103 = vector.load %arg2[%c344, %c0_46] : memref<784x128xf32, #tpu.memory_space<vmem>>, vector<8x32xf32>
    %cst_47 = arith.constant dense<0.000000e+00> : vector<48x32xf32>
    %104 = tpu.matmul %102, %103, %cst_47 {dimension_numbers = #tpu.dot_dimension_numbers<[1], [0], [0], [1], [0, 0, 1, 1], [], []>} : vector<48x8xf32>, vector<8x32xf32>, vector<48x32xf32> -> vector<48x32xf32>
    %105 = arith.addf %85, %104 : vector<48x32xf32>
    %106 = vector.extract_strided_slice %56 {offsets = [0, 16], sizes = [48, 8], strides = [1, 1]} : vector<48x32xf32> to vector<48x8xf32>
    %107 = vector.extract_strided_slice %60 {offsets = [16, 0], sizes = [8, 48], strides = [1, 1]} : vector<32x48xf32> to vector<8x48xf32>
    %108 = vector.extract_strided_slice %64 {offsets = [0, 16], sizes = [48, 8], strides = [1, 1]} : vector<48x32xf32> to vector<48x8xf32>
    %cst_48 = arith.constant dense<0.000000e+00> : vector<48x48xf32>
    %109 = tpu.matmul %106, %107, %cst_48 {dimension_numbers = #tpu.dot_dimension_numbers<[1], [0], [0], [1], [0, 0, 1, 1], [], []>} : vector<48x8xf32>, vector<8x48xf32>, vector<48x48xf32> -> vector<48x48xf32>
    %cst_49 = arith.constant 0.353553385 : f32
    %110 = vector.broadcast %cst_49 : f32 to vector<48x48xf32>
    %111 = arith.mulf %109, %110 : vector<48x48xf32>
    %112 = arith.addf %111, %41 : vector<48x48xf32>
    %cst_50 = arith.constant dense<0xFF800000> : vector<48xf32>
    %113 = vector.multi_reduction <maximumf>, %112, %cst_50 [1] : vector<48x48xf32> to vector<48xf32>
    %114 = vector.shape_cast %113 : vector<48xf32> to vector<48x1xf32>
    %115 = vector.broadcast %114 : vector<48x1xf32> to vector<48x48xf32>
    %116 = arith.subf %112, %115 : vector<48x48xf32>
    %117 = math.exp %116 : vector<48x48xf32>
    %cst_51 = arith.constant dense<0.000000e+00> : vector<48xf32>
    %118 = vector.multi_reduction <add>, %117, %cst_51 [1] : vector<48x48xf32> to vector<48xf32>
    %119 = vector.shape_cast %118 : vector<48xf32> to vector<48x1xf32>
    %120 = vector.broadcast %119 : vector<48x1xf32> to vector<48x48xf32>
    %121 = arith.divf %117, %120 : vector<48x48xf32>
    %cst_52 = arith.constant dense<0.000000e+00> : vector<48x8xf32>
    %122 = tpu.matmul %121, %108, %cst_52 {dimension_numbers = #tpu.dot_dimension_numbers<[1], [0], [0], [1], [0, 0, 1, 1], [], []>} : vector<48x48xf32>, vector<48x8xf32>, vector<48x8xf32> -> vector<48x8xf32>
    %c352 = arith.constant 352 : index
    %c0_53 = arith.constant 0 : index
    %123 = vector.load %arg2[%c352, %c0_53] : memref<784x128xf32, #tpu.memory_space<vmem>>, vector<8x32xf32>
    %cst_54 = arith.constant dense<0.000000e+00> : vector<48x32xf32>
    %124 = tpu.matmul %122, %123, %cst_54 {dimension_numbers = #tpu.dot_dimension_numbers<[1], [0], [0], [1], [0, 0, 1, 1], [], []>} : vector<48x8xf32>, vector<8x32xf32>, vector<48x32xf32> -> vector<48x32xf32>
    %125 = arith.addf %105, %124 : vector<48x32xf32>
    %126 = vector.extract_strided_slice %56 {offsets = [0, 24], sizes = [48, 8], strides = [1, 1]} : vector<48x32xf32> to vector<48x8xf32>
    %127 = vector.extract_strided_slice %60 {offsets = [24, 0], sizes = [8, 48], strides = [1, 1]} : vector<32x48xf32> to vector<8x48xf32>
    %128 = vector.extract_strided_slice %64 {offsets = [0, 24], sizes = [48, 8], strides = [1, 1]} : vector<48x32xf32> to vector<48x8xf32>
    %cst_55 = arith.constant dense<0.000000e+00> : vector<48x48xf32>
    %129 = tpu.matmul %126, %127, %cst_55 {dimension_numbers = #tpu.dot_dimension_numbers<[1], [0], [0], [1], [0, 0, 1, 1], [], []>} : vector<48x8xf32>, vector<8x48xf32>, vector<48x48xf32> -> vector<48x48xf32>
    %cst_56 = arith.constant 0.353553385 : f32
    %130 = vector.broadcast %cst_56 : f32 to vector<48x48xf32>
    %131 = arith.mulf %129, %130 : vector<48x48xf32>
    %132 = arith.addf %131, %41 : vector<48x48xf32>
    %cst_57 = arith.constant dense<0xFF800000> : vector<48xf32>
    %133 = vector.multi_reduction <maximumf>, %132, %cst_57 [1] : vector<48x48xf32> to vector<48xf32>
    %134 = vector.shape_cast %133 : vector<48xf32> to vector<48x1xf32>
    %135 = vector.broadcast %134 : vector<48x1xf32> to vector<48x48xf32>
    %136 = arith.subf %132, %135 : vector<48x48xf32>
    %137 = math.exp %136 : vector<48x48xf32>
    %cst_58 = arith.constant dense<0.000000e+00> : vector<48xf32>
    %138 = vector.multi_reduction <add>, %137, %cst_58 [1] : vector<48x48xf32> to vector<48xf32>
    %139 = vector.shape_cast %138 : vector<48xf32> to vector<48x1xf32>
    %140 = vector.broadcast %139 : vector<48x1xf32> to vector<48x48xf32>
    %141 = arith.divf %137, %140 : vector<48x48xf32>
    %cst_59 = arith.constant dense<0.000000e+00> : vector<48x8xf32>
    %142 = tpu.matmul %141, %128, %cst_59 {dimension_numbers = #tpu.dot_dimension_numbers<[1], [0], [0], [1], [0, 0, 1, 1], [], []>} : vector<48x48xf32>, vector<48x8xf32>, vector<48x8xf32> -> vector<48x8xf32>
    %c360 = arith.constant 360 : index
    %c0_60 = arith.constant 0 : index
    %143 = vector.load %arg2[%c360, %c0_60] : memref<784x128xf32, #tpu.memory_space<vmem>>, vector<8x32xf32>
    %cst_61 = arith.constant dense<0.000000e+00> : vector<48x32xf32>
    %144 = tpu.matmul %142, %143, %cst_61 {dimension_numbers = #tpu.dot_dimension_numbers<[1], [0], [0], [1], [0, 0, 1, 1], [], []>} : vector<48x8xf32>, vector<8x32xf32>, vector<48x32xf32> -> vector<48x32xf32>
    %145 = arith.addf %125, %144 : vector<48x32xf32>
    %146 = vector.broadcast %45 : vector<1x32xf32> to vector<48x32xf32>
    %147 = arith.addf %145, %146 : vector<48x32xf32>
    %148 = arith.addf %147, %40 : vector<48x32xf32>
    %cst_62 = arith.constant dense<0.000000e+00> : vector<48xf32>
    %149 = vector.multi_reduction <add>, %148, %cst_62 [1] : vector<48x32xf32> to vector<48xf32>
    %150 = vector.shape_cast %149 : vector<48xf32> to vector<48x1xf32>
    %cst_63 = arith.constant 3.200000e+01 : f32
    %151 = vector.broadcast %cst_63 : f32 to vector<48x1xf32>
    %152 = arith.divf %150, %151 : vector<48x1xf32>
    %153 = vector.broadcast %152 : vector<48x1xf32> to vector<48x32xf32>
    %154 = arith.subf %148, %153 : vector<48x32xf32>
    %155 = arith.mulf %154, %154 : vector<48x32xf32>
    %cst_64 = arith.constant dense<0.000000e+00> : vector<48xf32>
    %156 = vector.multi_reduction <add>, %155, %cst_64 [1] : vector<48x32xf32> to vector<48xf32>
    %157 = vector.shape_cast %156 : vector<48xf32> to vector<48x1xf32>
    %cst_65 = arith.constant 3.200000e+01 : f32
    %158 = vector.broadcast %cst_65 : f32 to vector<48x1xf32>
    %159 = arith.divf %157, %158 : vector<48x1xf32>
    %cst_66 = arith.constant 9.99999996E-13 : f32
    %160 = vector.broadcast %cst_66 : f32 to vector<48x1xf32>
    %161 = arith.addf %159, %160 : vector<48x1xf32>
    %162 = math.rsqrt %161 : vector<48x1xf32>
    %163 = vector.broadcast %162 : vector<48x1xf32> to vector<48x32xf32>
    %164 = arith.mulf %154, %163 : vector<48x32xf32>
    %165 = vector.broadcast %46 : vector<1x32xf32> to vector<48x32xf32>
    %166 = arith.mulf %164, %165 : vector<48x32xf32>
    %167 = vector.broadcast %47 : vector<1x32xf32> to vector<48x32xf32>
    %168 = arith.addf %166, %167 : vector<48x32xf32>
    %c368 = arith.constant 368 : index
    %c0_67 = arith.constant 0 : index
    %169 = vector.load %arg2[%c368, %c0_67] : memref<784x128xf32, #tpu.memory_space<vmem>>, vector<32x64xf32>
    %cst_68 = arith.constant dense<0.000000e+00> : vector<48x64xf32>
    %170 = tpu.matmul %168, %169, %cst_68 {dimension_numbers = #tpu.dot_dimension_numbers<[1], [0], [0], [1], [0, 0, 1, 1], [], []>} : vector<48x32xf32>, vector<32x64xf32>, vector<48x64xf32> -> vector<48x64xf32>
    %171 = vector.broadcast %50 : vector<1x64xf32> to vector<48x64xf32>
    %172 = arith.addf %170, %171 : vector<48x64xf32>
    %cst_69 = arith.constant 5.000000e-01 : f32
    %173 = vector.broadcast %cst_69 : f32 to vector<48x64xf32>
    %174 = arith.mulf %173, %172 : vector<48x64xf32>
    %cst_70 = arith.constant 4.471500e-02 : f32
    %175 = vector.broadcast %cst_70 : f32 to vector<48x64xf32>
    %176 = arith.mulf %175, %172 : vector<48x64xf32>
    %177 = arith.mulf %176, %172 : vector<48x64xf32>
    %178 = arith.mulf %177, %172 : vector<48x64xf32>
    %179 = arith.addf %172, %178 : vector<48x64xf32>
    %cst_71 = arith.constant 0.797884583 : f32
    %180 = vector.broadcast %cst_71 : f32 to vector<48x64xf32>
    %181 = arith.mulf %180, %179 : vector<48x64xf32>
    %182 = math.tanh %181 : vector<48x64xf32>
    %cst_72 = arith.constant 1.000000e+00 : f32
    %183 = vector.broadcast %cst_72 : f32 to vector<48x64xf32>
    %184 = arith.addf %183, %182 : vector<48x64xf32>
    %185 = arith.mulf %174, %184 : vector<48x64xf32>
    %c400 = arith.constant 400 : index
    %c0_73 = arith.constant 0 : index
    %186 = vector.load %arg2[%c400, %c0_73] : memref<784x128xf32, #tpu.memory_space<vmem>>, vector<64x32xf32>
    %cst_74 = arith.constant dense<0.000000e+00> : vector<48x32xf32>
    %187 = tpu.matmul %185, %186, %cst_74 {dimension_numbers = #tpu.dot_dimension_numbers<[1], [0], [0], [1], [0, 0, 1, 1], [], []>} : vector<48x64xf32>, vector<64x32xf32>, vector<48x32xf32> -> vector<48x32xf32>
    %188 = vector.broadcast %51 : vector<1x32xf32> to vector<48x32xf32>
    %189 = arith.addf %187, %188 : vector<48x32xf32>
    %190 = arith.addf %189, %168 : vector<48x32xf32>
    %cst_75 = arith.constant dense<0.000000e+00> : vector<48xf32>
    %191 = vector.multi_reduction <add>, %190, %cst_75 [1] : vector<48x32xf32> to vector<48xf32>
    %192 = vector.shape_cast %191 : vector<48xf32> to vector<48x1xf32>
    %cst_76 = arith.constant 3.200000e+01 : f32
    %193 = vector.broadcast %cst_76 : f32 to vector<48x1xf32>
    %194 = arith.divf %192, %193 : vector<48x1xf32>
    %195 = vector.broadcast %194 : vector<48x1xf32> to vector<48x32xf32>
    %196 = arith.subf %190, %195 : vector<48x32xf32>
    %197 = arith.mulf %196, %196 : vector<48x32xf32>
    %cst_77 = arith.constant dense<0.000000e+00> : vector<48xf32>
    %198 = vector.multi_reduction <add>, %197, %cst_77 [1] : vector<48x32xf32> to vector<48xf32>
    %199 = vector.shape_cast %198 : vector<48xf32> to vector<48x1xf32>
    %cst_78 = arith.constant 3.200000e+01 : f32
    %200 = vector.broadcast %cst_78 : f32 to vector<48x1xf32>
    %201 = arith.divf %199, %200 : vector<48x1xf32>
    %cst_79 = arith.constant 9.99999996E-13 : f32
    %202 = vector.broadcast %cst_79 : f32 to vector<48x1xf32>
    %203 = arith.addf %201, %202 : vector<48x1xf32>
    %204 = math.rsqrt %203 : vector<48x1xf32>
    %205 = vector.broadcast %204 : vector<48x1xf32> to vector<48x32xf32>
    %206 = arith.mulf %196, %205 : vector<48x32xf32>
    %207 = vector.broadcast %48 : vector<1x32xf32> to vector<48x32xf32>
    %208 = arith.mulf %206, %207 : vector<48x32xf32>
    %209 = vector.broadcast %49 : vector<1x32xf32> to vector<48x32xf32>
    %210 = arith.addf %208, %209 : vector<48x32xf32>
    %c184 = arith.constant 184 : index
    %c0_80 = arith.constant 0 : index
    %211 = vector.load %arg2[%c184, %c0_80] : memref<784x128xf32, #tpu.memory_space<vmem>>, vector<8x48xf32>
    %cst_81 = arith.constant dense<0.000000e+00> : vector<8x32xf32>
    %212 = tpu.matmul %211, %210, %cst_81 {dimension_numbers = #tpu.dot_dimension_numbers<[1], [0], [0], [1], [0, 0, 1, 1], [], []>} : vector<8x48xf32>, vector<48x32xf32>, vector<8x32xf32> -> vector<8x32xf32>
    %c768 = arith.constant 768 : index
    %c0_82 = arith.constant 0 : index
    %213 = vector.load %arg2[%c768, %c0_82] : memref<784x128xf32, #tpu.memory_space<vmem>>, vector<1x32xf32>
    %c769 = arith.constant 769 : index
    %c0_83 = arith.constant 0 : index
    %214 = vector.load %arg2[%c769, %c0_83] : memref<784x128xf32, #tpu.memory_space<vmem>>, vector<1x32xf32>
    %c770 = arith.constant 770 : index
    %c0_84 = arith.constant 0 : index
    %215 = vector.load %arg2[%c770, %c0_84] : memref<784x128xf32, #tpu.memory_space<vmem>>, vector<1x32xf32>
    %c771 = arith.constant 771 : index
    %c0_85 = arith.constant 0 : index
    %216 = vector.load %arg2[%c771, %c0_85] : memref<784x128xf32, #tpu.memory_space<vmem>>, vector<1x32xf32>
    %c772 = arith.constant 772 : index
    %c0_86 = arith.constant 0 : index
    %217 = vector.load %arg2[%c772, %c0_86] : memref<784x128xf32, #tpu.memory_space<vmem>>, vector<1x32xf32>
    %c773 = arith.constant 773 : index
    %c0_87 = arith.constant 0 : index
    %218 = vector.load %arg2[%c773, %c0_87] : memref<784x128xf32, #tpu.memory_space<vmem>>, vector<1x32xf32>
    %c774 = arith.constant 774 : index
    %c0_88 = arith.constant 0 : index
    %219 = vector.load %arg2[%c774, %c0_88] : memref<784x128xf32, #tpu.memory_space<vmem>>, vector<1x32xf32>
    %c775 = arith.constant 775 : index
    %c0_89 = arith.constant 0 : index
    %220 = vector.load %arg2[%c775, %c0_89] : memref<784x128xf32, #tpu.memory_space<vmem>>, vector<1x64xf32>
    %c776 = arith.constant 776 : index
    %c0_90 = arith.constant 0 : index
    %221 = vector.load %arg2[%c776, %c0_90] : memref<784x128xf32, #tpu.memory_space<vmem>>, vector<1x32xf32>
    %c736 = arith.constant 736 : index
    %c0_91 = arith.constant 0 : index
    %222 = vector.load %arg2[%c736, %c0_91] : memref<784x128xf32, #tpu.memory_space<vmem>>, vector<32x1xf32>
    %c512 = arith.constant 512 : index
    %c0_92 = arith.constant 0 : index
    %223 = vector.load %arg2[%c512, %c0_92] : memref<784x128xf32, #tpu.memory_space<vmem>>, vector<32x32xf32>
    %cst_93 = arith.constant dense<0.000000e+00> : vector<8x32xf32>
    %224 = tpu.matmul %212, %223, %cst_93 {dimension_numbers = #tpu.dot_dimension_numbers<[1], [0], [0], [1], [0, 0, 1, 1], [], []>} : vector<8x32xf32>, vector<32x32xf32>, vector<8x32xf32> -> vector<8x32xf32>
    %225 = vector.broadcast %213 : vector<1x32xf32> to vector<8x32xf32>
    %226 = arith.addf %224, %225 : vector<8x32xf32>
    %c544 = arith.constant 544 : index
    %c0_94 = arith.constant 0 : index
    %227 = vector.load %arg2[%c544, %c0_94] : memref<784x128xf32, #tpu.memory_space<vmem>>, vector<32x32xf32>
    %cst_95 = arith.constant dense<0.000000e+00> : vector<32x48xf32>
    %228 = tpu.matmul %227, %210, %cst_95 {dimension_numbers = #tpu.dot_dimension_numbers<[1], [1], [0], [0], [0, 0, 1, 0], [], []>} : vector<32x32xf32>, vector<48x32xf32>, vector<32x48xf32> -> vector<32x48xf32>
    %229 = vector.broadcast %222 : vector<32x1xf32> to vector<32x48xf32>
    %230 = arith.addf %228, %229 : vector<32x48xf32>
    %c576 = arith.constant 576 : index
    %c0_96 = arith.constant 0 : index
    %231 = vector.load %arg2[%c576, %c0_96] : memref<784x128xf32, #tpu.memory_space<vmem>>, vector<32x32xf32>
    %cst_97 = arith.constant dense<0.000000e+00> : vector<48x32xf32>
    %232 = tpu.matmul %210, %231, %cst_97 {dimension_numbers = #tpu.dot_dimension_numbers<[1], [0], [0], [1], [0, 0, 1, 1], [], []>} : vector<48x32xf32>, vector<32x32xf32>, vector<48x32xf32> -> vector<48x32xf32>
    %233 = vector.broadcast %214 : vector<1x32xf32> to vector<48x32xf32>
    %234 = arith.addf %232, %233 : vector<48x32xf32>
    %cst_98 = arith.constant 0.000000e+00 : f32
    %235 = vector.broadcast %cst_98 : f32 to vector<8x32xf32>
    %236 = vector.extract_strided_slice %226 {offsets = [0, 0], sizes = [8, 8], strides = [1, 1]} : vector<8x32xf32> to vector<8x8xf32>
    %237 = vector.extract_strided_slice %230 {offsets = [0, 0], sizes = [8, 48], strides = [1, 1]} : vector<32x48xf32> to vector<8x48xf32>
    %238 = vector.extract_strided_slice %234 {offsets = [0, 0], sizes = [48, 8], strides = [1, 1]} : vector<48x32xf32> to vector<48x8xf32>
    %cst_99 = arith.constant dense<0.000000e+00> : vector<8x48xf32>
    %239 = tpu.matmul %236, %237, %cst_99 {dimension_numbers = #tpu.dot_dimension_numbers<[1], [0], [0], [1], [0, 0, 1, 1], [], []>} : vector<8x8xf32>, vector<8x48xf32>, vector<8x48xf32> -> vector<8x48xf32>
    %cst_100 = arith.constant 0.353553385 : f32
    %240 = vector.broadcast %cst_100 : f32 to vector<8x48xf32>
    %241 = arith.mulf %239, %240 : vector<8x48xf32>
    %242 = arith.addf %241, %42 : vector<8x48xf32>
    %cst_101 = arith.constant dense<0xFF800000> : vector<8xf32>
    %243 = vector.multi_reduction <maximumf>, %242, %cst_101 [1] : vector<8x48xf32> to vector<8xf32>
    %244 = vector.shape_cast %243 : vector<8xf32> to vector<8x1xf32>
    %245 = vector.broadcast %244 : vector<8x1xf32> to vector<8x48xf32>
    %246 = arith.subf %242, %245 : vector<8x48xf32>
    %247 = math.exp %246 : vector<8x48xf32>
    %cst_102 = arith.constant dense<0.000000e+00> : vector<8xf32>
    %248 = vector.multi_reduction <add>, %247, %cst_102 [1] : vector<8x48xf32> to vector<8xf32>
    %249 = vector.shape_cast %248 : vector<8xf32> to vector<8x1xf32>
    %250 = vector.broadcast %249 : vector<8x1xf32> to vector<8x48xf32>
    %251 = arith.divf %247, %250 : vector<8x48xf32>
    %cst_103 = arith.constant dense<0.000000e+00> : vector<8x8xf32>
    %252 = tpu.matmul %251, %238, %cst_103 {dimension_numbers = #tpu.dot_dimension_numbers<[1], [0], [0], [1], [0, 0, 1, 1], [], []>} : vector<8x48xf32>, vector<48x8xf32>, vector<8x8xf32> -> vector<8x8xf32>
    %c608 = arith.constant 608 : index
    %c0_104 = arith.constant 0 : index
    %253 = vector.load %arg2[%c608, %c0_104] : memref<784x128xf32, #tpu.memory_space<vmem>>, vector<8x32xf32>
    %cst_105 = arith.constant dense<0.000000e+00> : vector<8x32xf32>
    %254 = tpu.matmul %252, %253, %cst_105 {dimension_numbers = #tpu.dot_dimension_numbers<[1], [0], [0], [1], [0, 0, 1, 1], [], []>} : vector<8x8xf32>, vector<8x32xf32>, vector<8x32xf32> -> vector<8x32xf32>
    %255 = arith.addf %235, %254 : vector<8x32xf32>
    %256 = vector.extract_strided_slice %226 {offsets = [0, 8], sizes = [8, 8], strides = [1, 1]} : vector<8x32xf32> to vector<8x8xf32>
    %257 = vector.extract_strided_slice %230 {offsets = [8, 0], sizes = [8, 48], strides = [1, 1]} : vector<32x48xf32> to vector<8x48xf32>
    %258 = vector.extract_strided_slice %234 {offsets = [0, 8], sizes = [48, 8], strides = [1, 1]} : vector<48x32xf32> to vector<48x8xf32>
    %cst_106 = arith.constant dense<0.000000e+00> : vector<8x48xf32>
    %259 = tpu.matmul %256, %257, %cst_106 {dimension_numbers = #tpu.dot_dimension_numbers<[1], [0], [0], [1], [0, 0, 1, 1], [], []>} : vector<8x8xf32>, vector<8x48xf32>, vector<8x48xf32> -> vector<8x48xf32>
    %cst_107 = arith.constant 0.353553385 : f32
    %260 = vector.broadcast %cst_107 : f32 to vector<8x48xf32>
    %261 = arith.mulf %259, %260 : vector<8x48xf32>
    %262 = arith.addf %261, %42 : vector<8x48xf32>
    %cst_108 = arith.constant dense<0xFF800000> : vector<8xf32>
    %263 = vector.multi_reduction <maximumf>, %262, %cst_108 [1] : vector<8x48xf32> to vector<8xf32>
    %264 = vector.shape_cast %263 : vector<8xf32> to vector<8x1xf32>
    %265 = vector.broadcast %264 : vector<8x1xf32> to vector<8x48xf32>
    %266 = arith.subf %262, %265 : vector<8x48xf32>
    %267 = math.exp %266 : vector<8x48xf32>
    %cst_109 = arith.constant dense<0.000000e+00> : vector<8xf32>
    %268 = vector.multi_reduction <add>, %267, %cst_109 [1] : vector<8x48xf32> to vector<8xf32>
    %269 = vector.shape_cast %268 : vector<8xf32> to vector<8x1xf32>
    %270 = vector.broadcast %269 : vector<8x1xf32> to vector<8x48xf32>
    %271 = arith.divf %267, %270 : vector<8x48xf32>
    %cst_110 = arith.constant dense<0.000000e+00> : vector<8x8xf32>
    %272 = tpu.matmul %271, %258, %cst_110 {dimension_numbers = #tpu.dot_dimension_numbers<[1], [0], [0], [1], [0, 0, 1, 1], [], []>} : vector<8x48xf32>, vector<48x8xf32>, vector<8x8xf32> -> vector<8x8xf32>
    %c616 = arith.constant 616 : index
    %c0_111 = arith.constant 0 : index
    %273 = vector.load %arg2[%c616, %c0_111] : memref<784x128xf32, #tpu.memory_space<vmem>>, vector<8x32xf32>
    %cst_112 = arith.constant dense<0.000000e+00> : vector<8x32xf32>
    %274 = tpu.matmul %272, %273, %cst_112 {dimension_numbers = #tpu.dot_dimension_numbers<[1], [0], [0], [1], [0, 0, 1, 1], [], []>} : vector<8x8xf32>, vector<8x32xf32>, vector<8x32xf32> -> vector<8x32xf32>
    %275 = arith.addf %255, %274 : vector<8x32xf32>
    %276 = vector.extract_strided_slice %226 {offsets = [0, 16], sizes = [8, 8], strides = [1, 1]} : vector<8x32xf32> to vector<8x8xf32>
    %277 = vector.extract_strided_slice %230 {offsets = [16, 0], sizes = [8, 48], strides = [1, 1]} : vector<32x48xf32> to vector<8x48xf32>
    %278 = vector.extract_strided_slice %234 {offsets = [0, 16], sizes = [48, 8], strides = [1, 1]} : vector<48x32xf32> to vector<48x8xf32>
    %cst_113 = arith.constant dense<0.000000e+00> : vector<8x48xf32>
    %279 = tpu.matmul %276, %277, %cst_113 {dimension_numbers = #tpu.dot_dimension_numbers<[1], [0], [0], [1], [0, 0, 1, 1], [], []>} : vector<8x8xf32>, vector<8x48xf32>, vector<8x48xf32> -> vector<8x48xf32>
    %cst_114 = arith.constant 0.353553385 : f32
    %280 = vector.broadcast %cst_114 : f32 to vector<8x48xf32>
    %281 = arith.mulf %279, %280 : vector<8x48xf32>
    %282 = arith.addf %281, %42 : vector<8x48xf32>
    %cst_115 = arith.constant dense<0xFF800000> : vector<8xf32>
    %283 = vector.multi_reduction <maximumf>, %282, %cst_115 [1] : vector<8x48xf32> to vector<8xf32>
    %284 = vector.shape_cast %283 : vector<8xf32> to vector<8x1xf32>
    %285 = vector.broadcast %284 : vector<8x1xf32> to vector<8x48xf32>
    %286 = arith.subf %282, %285 : vector<8x48xf32>
    %287 = math.exp %286 : vector<8x48xf32>
    %cst_116 = arith.constant dense<0.000000e+00> : vector<8xf32>
    %288 = vector.multi_reduction <add>, %287, %cst_116 [1] : vector<8x48xf32> to vector<8xf32>
    %289 = vector.shape_cast %288 : vector<8xf32> to vector<8x1xf32>
    %290 = vector.broadcast %289 : vector<8x1xf32> to vector<8x48xf32>
    %291 = arith.divf %287, %290 : vector<8x48xf32>
    %cst_117 = arith.constant dense<0.000000e+00> : vector<8x8xf32>
    %292 = tpu.matmul %291, %278, %cst_117 {dimension_numbers = #tpu.dot_dimension_numbers<[1], [0], [0], [1], [0, 0, 1, 1], [], []>} : vector<8x48xf32>, vector<48x8xf32>, vector<8x8xf32> -> vector<8x8xf32>
    %c624 = arith.constant 624 : index
    %c0_118 = arith.constant 0 : index
    %293 = vector.load %arg2[%c624, %c0_118] : memref<784x128xf32, #tpu.memory_space<vmem>>, vector<8x32xf32>
    %cst_119 = arith.constant dense<0.000000e+00> : vector<8x32xf32>
    %294 = tpu.matmul %292, %293, %cst_119 {dimension_numbers = #tpu.dot_dimension_numbers<[1], [0], [0], [1], [0, 0, 1, 1], [], []>} : vector<8x8xf32>, vector<8x32xf32>, vector<8x32xf32> -> vector<8x32xf32>
    %295 = arith.addf %275, %294 : vector<8x32xf32>
    %296 = vector.extract_strided_slice %226 {offsets = [0, 24], sizes = [8, 8], strides = [1, 1]} : vector<8x32xf32> to vector<8x8xf32>
    %297 = vector.extract_strided_slice %230 {offsets = [24, 0], sizes = [8, 48], strides = [1, 1]} : vector<32x48xf32> to vector<8x48xf32>
    %298 = vector.extract_strided_slice %234 {offsets = [0, 24], sizes = [48, 8], strides = [1, 1]} : vector<48x32xf32> to vector<48x8xf32>
    %cst_120 = arith.constant dense<0.000000e+00> : vector<8x48xf32>
    %299 = tpu.matmul %296, %297, %cst_120 {dimension_numbers = #tpu.dot_dimension_numbers<[1], [0], [0], [1], [0, 0, 1, 1], [], []>} : vector<8x8xf32>, vector<8x48xf32>, vector<8x48xf32> -> vector<8x48xf32>
    %cst_121 = arith.constant 0.353553385 : f32
    %300 = vector.broadcast %cst_121 : f32 to vector<8x48xf32>
    %301 = arith.mulf %299, %300 : vector<8x48xf32>
    %302 = arith.addf %301, %42 : vector<8x48xf32>
    %cst_122 = arith.constant dense<0xFF800000> : vector<8xf32>
    %303 = vector.multi_reduction <maximumf>, %302, %cst_122 [1] : vector<8x48xf32> to vector<8xf32>
    %304 = vector.shape_cast %303 : vector<8xf32> to vector<8x1xf32>
    %305 = vector.broadcast %304 : vector<8x1xf32> to vector<8x48xf32>
    %306 = arith.subf %302, %305 : vector<8x48xf32>
    %307 = math.exp %306 : vector<8x48xf32>
    %cst_123 = arith.constant dense<0.000000e+00> : vector<8xf32>
    %308 = vector.multi_reduction <add>, %307, %cst_123 [1] : vector<8x48xf32> to vector<8xf32>
    %309 = vector.shape_cast %308 : vector<8xf32> to vector<8x1xf32>
    %310 = vector.broadcast %309 : vector<8x1xf32> to vector<8x48xf32>
    %311 = arith.divf %307, %310 : vector<8x48xf32>
    %cst_124 = arith.constant dense<0.000000e+00> : vector<8x8xf32>
    %312 = tpu.matmul %311, %298, %cst_124 {dimension_numbers = #tpu.dot_dimension_numbers<[1], [0], [0], [1], [0, 0, 1, 1], [], []>} : vector<8x48xf32>, vector<48x8xf32>, vector<8x8xf32> -> vector<8x8xf32>
    %c632 = arith.constant 632 : index
    %c0_125 = arith.constant 0 : index
    %313 = vector.load %arg2[%c632, %c0_125] : memref<784x128xf32, #tpu.memory_space<vmem>>, vector<8x32xf32>
    %cst_126 = arith.constant dense<0.000000e+00> : vector<8x32xf32>
    %314 = tpu.matmul %312, %313, %cst_126 {dimension_numbers = #tpu.dot_dimension_numbers<[1], [0], [0], [1], [0, 0, 1, 1], [], []>} : vector<8x8xf32>, vector<8x32xf32>, vector<8x32xf32> -> vector<8x32xf32>
    %315 = arith.addf %295, %314 : vector<8x32xf32>
    %316 = vector.broadcast %215 : vector<1x32xf32> to vector<8x32xf32>
    %317 = arith.addf %315, %316 : vector<8x32xf32>
    %318 = arith.addf %317, %212 : vector<8x32xf32>
    %cst_127 = arith.constant dense<0.000000e+00> : vector<8xf32>
    %319 = vector.multi_reduction <add>, %318, %cst_127 [1] : vector<8x32xf32> to vector<8xf32>
    %320 = vector.shape_cast %319 : vector<8xf32> to vector<8x1xf32>
    %cst_128 = arith.constant 3.200000e+01 : f32
    %321 = vector.broadcast %cst_128 : f32 to vector<8x1xf32>
    %322 = arith.divf %320, %321 : vector<8x1xf32>
    %323 = vector.broadcast %322 : vector<8x1xf32> to vector<8x32xf32>
    %324 = arith.subf %318, %323 : vector<8x32xf32>
    %325 = arith.mulf %324, %324 : vector<8x32xf32>
    %cst_129 = arith.constant dense<0.000000e+00> : vector<8xf32>
    %326 = vector.multi_reduction <add>, %325, %cst_129 [1] : vector<8x32xf32> to vector<8xf32>
    %327 = vector.shape_cast %326 : vector<8xf32> to vector<8x1xf32>
    %cst_130 = arith.constant 3.200000e+01 : f32
    %328 = vector.broadcast %cst_130 : f32 to vector<8x1xf32>
    %329 = arith.divf %327, %328 : vector<8x1xf32>
    %cst_131 = arith.constant 9.99999996E-13 : f32
    %330 = vector.broadcast %cst_131 : f32 to vector<8x1xf32>
    %331 = arith.addf %329, %330 : vector<8x1xf32>
    %332 = math.rsqrt %331 : vector<8x1xf32>
    %333 = vector.broadcast %332 : vector<8x1xf32> to vector<8x32xf32>
    %334 = arith.mulf %324, %333 : vector<8x32xf32>
    %335 = vector.broadcast %216 : vector<1x32xf32> to vector<8x32xf32>
    %336 = arith.mulf %334, %335 : vector<8x32xf32>
    %337 = vector.broadcast %217 : vector<1x32xf32> to vector<8x32xf32>
    %338 = arith.addf %336, %337 : vector<8x32xf32>
    %c640 = arith.constant 640 : index
    %c0_132 = arith.constant 0 : index
    %339 = vector.load %arg2[%c640, %c0_132] : memref<784x128xf32, #tpu.memory_space<vmem>>, vector<32x64xf32>
    %cst_133 = arith.constant dense<0.000000e+00> : vector<8x64xf32>
    %340 = tpu.matmul %338, %339, %cst_133 {dimension_numbers = #tpu.dot_dimension_numbers<[1], [0], [0], [1], [0, 0, 1, 1], [], []>} : vector<8x32xf32>, vector<32x64xf32>, vector<8x64xf32> -> vector<8x64xf32>
    %341 = vector.broadcast %220 : vector<1x64xf32> to vector<8x64xf32>
    %342 = arith.addf %340, %341 : vector<8x64xf32>
    %cst_134 = arith.constant 5.000000e-01 : f32
    %343 = vector.broadcast %cst_134 : f32 to vector<8x64xf32>
    %344 = arith.mulf %343, %342 : vector<8x64xf32>
    %cst_135 = arith.constant 4.471500e-02 : f32
    %345 = vector.broadcast %cst_135 : f32 to vector<8x64xf32>
    %346 = arith.mulf %345, %342 : vector<8x64xf32>
    %347 = arith.mulf %346, %342 : vector<8x64xf32>
    %348 = arith.mulf %347, %342 : vector<8x64xf32>
    %349 = arith.addf %342, %348 : vector<8x64xf32>
    %cst_136 = arith.constant 0.797884583 : f32
    %350 = vector.broadcast %cst_136 : f32 to vector<8x64xf32>
    %351 = arith.mulf %350, %349 : vector<8x64xf32>
    %352 = math.tanh %351 : vector<8x64xf32>
    %cst_137 = arith.constant 1.000000e+00 : f32
    %353 = vector.broadcast %cst_137 : f32 to vector<8x64xf32>
    %354 = arith.addf %353, %352 : vector<8x64xf32>
    %355 = arith.mulf %344, %354 : vector<8x64xf32>
    %c672 = arith.constant 672 : index
    %c0_138 = arith.constant 0 : index
    %356 = vector.load %arg2[%c672, %c0_138] : memref<784x128xf32, #tpu.memory_space<vmem>>, vector<64x32xf32>
    %cst_139 = arith.constant dense<0.000000e+00> : vector<8x32xf32>
    %357 = tpu.matmul %355, %356, %cst_139 {dimension_numbers = #tpu.dot_dimension_numbers<[1], [0], [0], [1], [0, 0, 1, 1], [], []>} : vector<8x64xf32>, vector<64x32xf32>, vector<8x32xf32> -> vector<8x32xf32>
    %358 = vector.broadcast %221 : vector<1x32xf32> to vector<8x32xf32>
    %359 = arith.addf %357, %358 : vector<8x32xf32>
    %360 = arith.addf %359, %338 : vector<8x32xf32>
    %cst_140 = arith.constant dense<0.000000e+00> : vector<8xf32>
    %361 = vector.multi_reduction <add>, %360, %cst_140 [1] : vector<8x32xf32> to vector<8xf32>
    %362 = vector.shape_cast %361 : vector<8xf32> to vector<8x1xf32>
    %cst_141 = arith.constant 3.200000e+01 : f32
    %363 = vector.broadcast %cst_141 : f32 to vector<8x1xf32>
    %364 = arith.divf %362, %363 : vector<8x1xf32>
    %365 = vector.broadcast %364 : vector<8x1xf32> to vector<8x32xf32>
    %366 = arith.subf %360, %365 : vector<8x32xf32>
    %367 = arith.mulf %366, %366 : vector<8x32xf32>
    %cst_142 = arith.constant dense<0.000000e+00> : vector<8xf32>
    %368 = vector.multi_reduction <add>, %367, %cst_142 [1] : vector<8x32xf32> to vector<8xf32>
    %369 = vector.shape_cast %368 : vector<8xf32> to vector<8x1xf32>
    %cst_143 = arith.constant 3.200000e+01 : f32
    %370 = vector.broadcast %cst_143 : f32 to vector<8x1xf32>
    %371 = arith.divf %369, %370 : vector<8x1xf32>
    %cst_144 = arith.constant 9.99999996E-13 : f32
    %372 = vector.broadcast %cst_144 : f32 to vector<8x1xf32>
    %373 = arith.addf %371, %372 : vector<8x1xf32>
    %374 = math.rsqrt %373 : vector<8x1xf32>
    %375 = vector.broadcast %374 : vector<8x1xf32> to vector<8x32xf32>
    %376 = arith.mulf %366, %375 : vector<8x32xf32>
    %377 = vector.broadcast %218 : vector<1x32xf32> to vector<8x32xf32>
    %378 = arith.mulf %376, %377 : vector<8x32xf32>
    %379 = vector.broadcast %219 : vector<1x32xf32> to vector<8x32xf32>
    %380 = arith.addf %378, %379 : vector<8x32xf32>
    %c200 = arith.constant 200 : index
    %c0_145 = arith.constant 0 : index
    %381 = vector.load %arg2[%c200, %c0_145] : memref<784x128xf32, #tpu.memory_space<vmem>>, vector<32x128xf32>
    %cst_146 = arith.constant dense<0.000000e+00> : vector<8x128xf32>
    %382 = tpu.matmul %380, %381, %cst_146 {dimension_numbers = #tpu.dot_dimension_numbers<[1], [0], [0], [1], [0, 0, 1, 1], [], []>} : vector<8x32xf32>, vector<32x128xf32>, vector<8x128xf32> -> vector<8x128xf32>
    %c232 = arith.constant 232 : index
    %c0_147 = arith.constant 0 : index
    %383 = vector.load %arg2[%c232, %c0_147] : memref<784x128xf32, #tpu.memory_space<vmem>>, vector<1x128xf32>
    %384 = vector.broadcast %383 : vector<1x128xf32> to vector<8x128xf32>
    %385 = arith.addf %382, %384 : vector<8x128xf32>
    %386 = math.tanh %385 : vector<8x128xf32>
    %c0_148 = arith.constant 0 : index
    %c0_149 = arith.constant 0 : index
    %387 = vector.load %arg3[%c0_148, %c0_149] : memref<8x128xf32, #tpu.memory_space<vmem>>, vector<8x128xf32>
    tpu.vector_store %arg3[%c0_148, %c0_149], %386 {strides = array<i32>} : memref<8x128xf32, #tpu.memory_space<vmem>>, vector<8x128xf32>,
    return
  }
}

</mosaic_0001>

<llo_original>
// kernel: tpu_custom_call.1
$region0: #{tpu_custom_call.1}
  #allocation0 [shape = 'u32[]', space=smem, size = 0x4, offset = 0x4, fixed_abs, tag = 'smem constant byte address 0x4 - core index']
  #allocation1 [shape = 'u32[72,128]{1,0:T(1,128)}', space=vmem, size = 0x9000, scoped, tag = 'internal scratch']
  %s0 = inlined_call_operand.vmem [shape: s32[48,2], index: 0, kind: input, shape index: {}]
  %s1 = inlined_call_operand.vmem [shape: f32[56,48], index: 1, kind: input, shape index: {}]
  %s2 = inlined_call_operand.hbm [shape: f32[784,128], index: 2, kind: input, shape index: {}]
  %s3 = inlined_call_operand.hbm [shape: f32[8,128], index: 3, kind: output, shape index: {}]
  %s4 = sld [smem:[#allocation0]]
  $region26: #{tpu_custom_call.1} parent=0
    _
  %s6 = ssub.s32 1, %s4
  %s7 = scalar_select 0, %s6, %s4
  $region1: #{tpu_custom_call.1} parent=0
    #allocation2 [shape = 'u8[401408]{0}', space=vmem, size = 0x62000, scoped, tag = 'input window, operand 2, single buffered']
    #allocation3 [shape = 's32[1]{0}', space=sflag, size = 0x4, scoped, tag = 'scoped memory for tpu_custom_call.1']
    #allocation4 [shape = 's32[1]{0}', space=sflag, size = 0x4, scoped, tag = 'scoped memory for tpu_custom_call.1']
    #allocation5 [shape = 'u8[4096]{0}', space=vmem, size = 0x1000, scoped, tag = 'output window, operand 0, single buffered']
    %8 = vsyncpa [#allocation3], 0
    %9 = vsyncpa [#allocation4], 0
    // Predicated region
    $region2: #{tpu_custom_call.1} parent=1 // pred_check
      _
    $region3: #{tpu_custom_call.1} parent=1 // pred_check_branch
      %11 = sbr.rel (0) target = $region5
    $region4: #{tpu_custom_call.1} parent=1 // pred_region
      _
    $region5: #{tpu_custom_call.1} parent=1 // pred_fallthru
      _
    // Predicated region
    $region6: #{tpu_custom_call.1} parent=1 // pred_check
      _
    $region7: #{tpu_custom_call.1} parent=1 // pred_check_branch
      %13 = sbr.rel (0) target = $region9
    $region8: #{tpu_custom_call.1} parent=1 // pred_region
      _
    $region9: #{tpu_custom_call.1} parent=1 // pred_fallthru
      _
    // Predicated region
    $region10: #{tpu_custom_call.1} parent=1 // pred_check
      _
    $region11: #{tpu_custom_call.1} parent=1 // pred_check_branch
      %15 = sbr.rel (0) target = $region13
    $region12: #{tpu_custom_call.1} parent=1 // pred_region
      %17 = vsyncadd [#allocation3], 0
      %s18 = sshll.u32 %s2, 4
      %s19 = int_to_ptr.hbm [resolvable:$true] %s18
      %s20 = sshll.u32 [#allocation2], 4
      %s21 = int_to_ptr.vmem [resolvable:$true] %s20
      %26 = dma.hbm_to_vmem [thread:$0]  %s19, 12544, %s21, [#allocation3], 128, 128, 8
    $region13: #{tpu_custom_call.1} parent=1 // pred_fallthru
      _
    // Predicated region
    $region14: #{tpu_custom_call.1} parent=1 // pred_check
      _
    $region15: #{tpu_custom_call.1} parent=1 // pred_check_branch
      %28 = sbr.rel (0) target = $region17
    $region16: #{tpu_custom_call.1} parent=1 // pred_region
      %30 = dma.done [#allocation3], 12544
    $region17: #{tpu_custom_call.1} parent=1 // pred_fallthru
      _
    %v31 = vld [vmem:[%s0] sm:$0xff]
    %v32 = vld [vmem:[%s0 + $0x8] sm:$0xff]
    %v33 = vld [vmem:[%s0 + $0x10] sm:$0xff]
    %v34 = vld [vmem:[%s0 + $0x18] sm:$0xff]
    %v35 = vld [vmem:[%s0 + $0x20] sm:$0xff]
    %v36 = vld [vmem:[%s0 + $0x28] sm:$0xff]
    %v37 = vlaneseq
    %v38 = vand.u32 %v37, 127
    %39 = vset.pattern.permute.xlu0 0
    %40 = vperm.xlu0 %39, %v31
    %v41 = vpop.permute.xlu0 %40
    %42 = vset.pattern.permute.xlu0 0
    %43 = vperm.xlu0 %42, %v32
    %v44 = vpop.permute.xlu0 %43
    %45 = vset.pattern.permute.xlu0 0
    %46 = vperm.xlu0 %45, %v33
    %v47 = vpop.permute.xlu0 %46
    %48 = vset.pattern.permute.xlu0 0
    %49 = vperm.xlu0 %48, %v34
    %v50 = vpop.permute.xlu0 %49
    %51 = vset.pattern.permute.xlu0 0
    %52 = vperm.xlu0 %51, %v35
    %v53 = vpop.permute.xlu0 %52
    %54 = vset.pattern.permute.xlu0 0
    %55 = vperm.xlu0 %54, %v36
    %v56 = vpop.permute.xlu0 %55
    %vm57 = vcmp.eq.s32.totalorder %v41, %v38
    %vm58 = vcmp.eq.s32.totalorder %v44, %v38
    %vm59 = vcmp.eq.s32.totalorder %v47, %v38
    %vm60 = vcmp.eq.s32.totalorder %v50, %v38
    %vm61 = vcmp.eq.s32.totalorder %v53, %v38
    %vm62 = vcmp.eq.s32.totalorder %v56, %v38
    %v63 = vsel %vm57, 1, 0
    %v64 = vsel %vm58, 1, 0
    %v65 = vsel %vm59, 1, 0
    %v66 = vsel %vm60, 1, 0
    %v67 = vsel %vm61, 1, 0
    %v68 = vsel %vm62, 1, 0
    %v69 = vcvt.s32.f32 %v63
    %v70 = vcvt.s32.f32 %v64
    %v71 = vcvt.s32.f32 %v65
    %v72 = vcvt.s32.f32 %v66
    %v73 = vcvt.s32.f32 %v67
    %v74 = vcvt.s32.f32 %v68
    %v75 = vld [vmem:[#allocation2] sm:$0xff]
    %v76 = vld [vmem:[#allocation2 + $0x8] sm:$0xff]
    %v77 = vld [vmem:[#allocation2 + $0x10] sm:$0xff]
    %v78 = vld [vmem:[#allocation2 + $0x18] sm:$0xff]
    %v79 = vld [vmem:[#allocation2 + $0x20] sm:$0xff]
    %v80 = vld [vmem:[#allocation2 + $0x28] sm:$0xff]
    %v81 = vld [vmem:[#allocation2 + $0x30] sm:$0xff]
    %v82 = vld [vmem:[#allocation2 + $0x38] sm:$0xff]
    %v83 = vld [vmem:[#allocation2 + $0x40] sm:$0xff]
    %v84 = vld [vmem:[#allocation2 + $0x48] sm:$0xff]
    %v85 = vld [vmem:[#allocation2 + $0x50] sm:$0xff]
    %v86 = vld [vmem:[#allocation2 + $0x58] sm:$0xff]
    %v87 = vld [vmem:[#allocation2 + $0x60] sm:$0xff]
    %v88 = vld [vmem:[#allocation2 + $0x68] sm:$0xff]
    %v89 = vld [vmem:[#allocation2 + $0x70] sm:$0xff]
    %v90 = vld [vmem:[#allocation2 + $0x78] sm:$0xff]
    %91 = vset.pattern.permute.xlu0 1
    %92 = vperm.xlu0 %91, %v31
    %v93 = vpop.permute.xlu0 %92
    %94 = vset.pattern.permute.xlu0 1
    %95 = vperm.xlu0 %94, %v32
    %v96 = vpop.permute.xlu0 %95
    %97 = vset.pattern.permute.xlu0 1
    %98 = vperm.xlu0 %97, %v33
    %v99 = vpop.permute.xlu0 %98
    %100 = vset.pattern.permute.xlu0 1
    %101 = vperm.xlu0 %100, %v34
    %v102 = vpop.permute.xlu0 %101
    %103 = vset.pattern.permute.xlu0 1
    %104 = vperm.xlu0 %103, %v35
    %v105 = vpop.permute.xlu0 %104
    %106 = vset.pattern.permute.xlu0 1
    %107 = vperm.xlu0 %106, %v36
    %v108 = vpop.permute.xlu0 %107
    %vm109 = vcmp.eq.s32.totalorder %v93, %v38
    %vm110 = vcmp.eq.s32.totalorder %v96, %v38
    %vm111 = vcmp.eq.s32.totalorder %v99, %v38
    %vm112 = vcmp.eq.s32.totalorder %v102, %v38
    %vm113 = vcmp.eq.s32.totalorder %v105, %v38
    %vm114 = vcmp.eq.s32.totalorder %v108, %v38
    %v115 = vsel %vm109, 1, 0
    %v116 = vsel %vm110, 1, 0
    %v117 = vsel %vm111, 1, 0
    %v118 = vsel %vm112, 1, 0
    %v119 = vsel %vm113, 1, 0
    %v120 = vsel %vm114, 1, 0
    %v121 = vcvt.s32.f32 %v115
    %v122 = vcvt.s32.f32 %v116
    %v123 = vcvt.s32.f32 %v117
    %v124 = vcvt.s32.f32 %v118
    %v125 = vcvt.s32.f32 %v119
    %v126 = vcvt.s32.f32 %v120
    %v127 = vld [vmem:[#allocation2 + $0xb0] sm:$0xff]
    %vm128 = vcmask 64512
    %v130 = vsel %vm128, %v121, 0
    %v133 = vsel %vm128, %v122, 0
    %v136 = vsel %vm128, %v123, 0
    %v139 = vsel %vm128, %v124, 0
    %v142 = vsel %vm128, %v125, 0
    %v145 = vsel %vm128, %v126, 0
    %147 = vmatpush.msra.mxu0 0.0
    %148 = vmatpush.msra.mxu0 0.0
    %149 = vmatpush.msra.mxu0 0.0
    %150 = vmatpush.msra.mxu0 0.0
    %151 = vmatpush.msra.mxu0 0.0
    %152 = vmatpush.msra.mxu0 0.0
    %153 = vmatpush.msra.mxu0 0.0
    %154 = vmatpush.msra.mxu0 0.0
    %155 = vmatpush.msra.mxu0 0.0
    %156 = vmatpush.msra.mxu0 0.0
    %157 = vmatpush.msra.mxu0 0.0
    %158 = vmatpush.msra.mxu0 0.0
    %159 = vmatpush.msra.mxu0 0.0
    %160 = vmatpush.msra.mxu0 0.0
    %161 = vmatpush.msra.mxu0 0.0
    %162 = vmatpush.msra.mxu0 %v127
    %163 = vmatmul.f32.gmra.mxu0 %v130
    %v164 = vpop.f32.mrf.mxu0
    %v165 = vadd.f32 0.0, %v164
    %166 = vmatmul.f32.gmra.mxu0 %v133
    %v167 = vpop.f32.mrf.mxu0
    %v168 = vadd.f32 0.0, %v167
    %169 = vmatmul.f32.gmra.mxu0 %v136
    %v170 = vpop.f32.mrf.mxu0
    %v171 = vadd.f32 0.0, %v170
    %172 = vmatmul.f32.gmra.mxu0 %v139
    %v173 = vpop.f32.mrf.mxu0
    %v174 = vadd.f32 0.0, %v173
    %175 = vmatmul.f32.gmra.mxu0 %v142
    %v176 = vpop.f32.mrf.mxu0
    %v177 = vadd.f32 0.0, %v176
    %178 = vmatmul.f32.gmra.mxu0 %v145
    %v179 = vpop.f32.mrf.mxu0
    %v180 = vadd.f32 0.0, %v179
    %181 = vdwg.mxu0
    %v182 = vld [vmem:[#allocation2 + $0x80] sm:$0xff]
    %v183 = vld [vmem:[#allocation2 + $0x88] sm:$0xff]
    %v184 = vld [vmem:[#allocation2 + $0x90] sm:$0xff]
    %v185 = vld [vmem:[#allocation2 + $0x98] sm:$0xff]
    %v186 = vld [vmem:[#allocation2 + $0xa0] sm:$0xff]
    %v187 = vld [vmem:[#allocation2 + $0xa8] sm:$0xff]
    %188 = vmatpush.msra.mxu0 %v90
    %189 = vmatpush.msra.mxu0 %v89
    %190 = vmatpush.msra.mxu0 %v88
    %191 = vmatpush.msra.mxu0 %v87
    %192 = vmatpush.msra.mxu0 %v86
    %193 = vmatpush.msra.mxu0 %v85
    %194 = vmatpush.msra.mxu0 %v84
    %195 = vmatpush.msra.mxu0 %v83
    %196 = vmatpush.msra.mxu0 %v82
    %197 = vmatpush.msra.mxu0 %v81
    %198 = vmatpush.msra.mxu0 %v80
    %199 = vmatpush.msra.mxu0 %v79
    %200 = vmatpush.msra.mxu0 %v78
    %201 = vmatpush.msra.mxu0 %v77
    %202 = vmatpush.msra.mxu0 %v76
    %203 = vmatpush.msra.mxu0 %v75
    %204 = vmatmul.f32.gmra.mxu0 %v69
    %v205 = vpop.f32.mrf.mxu0
    %v206 = vadd.f32 %v182, %v205
    %207 = vmatmul.f32.gmra.mxu0 %v70
    %v208 = vpop.f32.mrf.mxu0
    %v209 = vadd.f32 %v183, %v208
    %210 = vmatmul.f32.gmra.mxu0 %v71
    %v211 = vpop.f32.mrf.mxu0
    %v212 = vadd.f32 %v184, %v211
    %213 = vmatmul.f32.gmra.mxu0 %v72
    %v214 = vpop.f32.mrf.mxu0
    %v215 = vadd.f32 %v185, %v214
    %216 = vmatmul.f32.gmra.mxu0 %v73
    %v217 = vpop.f32.mrf.mxu0
    %v218 = vadd.f32 %v186, %v217
    %219 = vmatmul.f32.gmra.mxu0 %v74
    %v220 = vpop.f32.mrf.mxu0
    %v221 = vadd.f32 %v187, %v220
    %222 = vdwg.mxu0
    %v223 = vadd.f32 %v206, %v165
    %v224 = vadd.f32 %v209, %v168
    %v225 = vadd.f32 %v212, %v171
    %v226 = vadd.f32 %v215, %v174
    %v227 = vadd.f32 %v218, %v177
    %v228 = vadd.f32 %v221, %v180
    %v229 = vld [vmem:[#allocation2 + $0xc0] sm:$0x1]
    %v230 = vld [vmem:[#allocation2 + $0xc1] sm:$0x1]
    %vm231 = vcmask 261120
    %v232 = vsel %vm231, %v223, 0.0
    %233 = vadd.xlane.f32.xlu0 %v232
    %v234 = vpop.xlane.xlu0 %233
    %v235 = vsel %vm231, %v224, 0.0
    %236 = vadd.xlane.f32.xlu0 %v235
    %v237 = vpop.xlane.xlu0 %236
    %v238 = vsel %vm231, %v225, 0.0
    %239 = vadd.xlane.f32.xlu0 %v238
    %v240 = vpop.xlane.xlu0 %239
    %v241 = vsel %vm231, %v226, 0.0
    %242 = vadd.xlane.f32.xlu0 %v241
    %v243 = vpop.xlane.xlu0 %242
    %v244 = vsel %vm231, %v227, 0.0
    %245 = vadd.xlane.f32.xlu0 %v244
    %v246 = vpop.xlane.xlu0 %245
    %v247 = vsel %vm231, %v228, 0.0
    %248 = vadd.xlane.f32.xlu0 %v247
    %v249 = vpop.xlane.xlu0 %248
    %v250 = vrcp.pop 32.0
    %v251 = vmul.f32 32.0, %v250
    %v252 = vsub.f32 1.0, %v251
    %v253 = vmul.f32 %v250, %v252
    %v254 = vadd.f32 %v250, %v253
    %vm255 = vweird.f32 %v250
    %v256 = vsel %vm255, %v250, %v254
    %v257 = vmul.f32 %v234, %v256
    %v258 = vmul.f32 %v237, %v256
    %v259 = vmul.f32 %v240, %v256
    %v260 = vmul.f32 %v243, %v256
    %v261 = vmul.f32 %v246, %v256
    %v262 = vmul.f32 %v249, %v256
    %v263 = vsub.f32 %v223, %v257
    %v264 = vsub.f32 %v224, %v258
    %v265 = vsub.f32 %v225, %v259
    %v266 = vsub.f32 %v226, %v260
    %v267 = vsub.f32 %v227, %v261
    %v268 = vsub.f32 %v228, %v262
    %v269 = vmul.f32 %v263, %v263
    %v270 = vmul.f32 %v264, %v264
    %v271 = vmul.f32 %v265, %v265
    %v272 = vmul.f32 %v266, %v266
    %v273 = vmul.f32 %v267, %v267
    %v274 = vmul.f32 %v268, %v268
    %v275 = vsel %vm231, %v269, 0.0
    %276 = vadd.xlane.f32.xlu0 %v275
    %v277 = vpop.xlane.xlu0 %276
    %v278 = vsel %vm231, %v270, 0.0
    %279 = vadd.xlane.f32.xlu0 %v278
    %v280 = vpop.xlane.xlu0 %279
    %v281 = vsel %vm231, %v271, 0.0
    %282 = vadd.xlane.f32.xlu0 %v281
    %v283 = vpop.xlane.xlu0 %282
    %v284 = vsel %vm231, %v272, 0.0
    %285 = vadd.xlane.f32.xlu0 %v284
    %v286 = vpop.xlane.xlu0 %285
    %v287 = vsel %vm231, %v273, 0.0
    %288 = vadd.xlane.f32.xlu0 %v287
    %v289 = vpop.xlane.xlu0 %288
    %v290 = vsel %vm231, %v274, 0.0
    %291 = vadd.xlane.f32.xlu0 %v290
    %v292 = vpop.xlane.xlu0 %291
    %v293 = vmul.f32 %v277, %v256
    %v294 = vmul.f32 %v280, %v256
    %v295 = vmul.f32 %v283, %v256
    %v296 = vmul.f32 %v286, %v256
    %v297 = vmul.f32 %v289, %v256
    %v298 = vmul.f32 %v292, %v256
    %v299 = vadd.f32 %v293, 1e-12
    %v300 = vadd.f32 %v294, 1e-12
    %v301 = vadd.f32 %v295, 1e-12
    %v302 = vadd.f32 %v296, 1e-12
    %v303 = vadd.f32 %v297, 1e-12
    %v304 = vadd.f32 %v298, 1e-12
    %v305 = vrsqrt.pop %v299
    %v306 = vmul.f32 %v305, %v299
    %v307 = vmul.f32 %v306, %v305
    %v308 = vmul.f32 0.5, %v307
    %v309 = vsub.f32 1.5, %v308
    %v310 = vmul.f32 %v305, %v309
    %vm311 = vweird.f32 %v299
    %vm312 = vweird.f32 %v305
    %vm313 = vmor %vm311, %vm312
    %v314 = vsel %vm313, %v305, %v310
    %v315 = vrsqrt.pop %v300
    %v316 = vmul.f32 %v315, %v300
    %v317 = vmul.f32 %v316, %v315
    %v318 = vmul.f32 0.5, %v317
    %v319 = vsub.f32 1.5, %v318
    %v320 = vmul.f32 %v315, %v319
    %vm321 = vweird.f32 %v300
    %vm322 = vweird.f32 %v315
    %vm323 = vmor %vm321, %vm322
    %v324 = vsel %vm323, %v315, %v320
    %v325 = vrsqrt.pop %v301
    %v326 = vmul.f32 %v325, %v301
    %v327 = vmul.f32 %v326, %v325
    %v328 = vmul.f32 0.5, %v327
    %v329 = vsub.f32 1.5, %v328
    %v330 = vmul.f32 %v325, %v329
    %vm331 = vweird.f32 %v301
    %vm332 = vweird.f32 %v325
    %vm333 = vmor %vm331, %vm332
    %v334 = vsel %vm333, %v325, %v330
    %v335 = vrsqrt.pop %v302
    %v336 = vmul.f32 %v335, %v302
    %v337 = vmul.f32 %v336, %v335
    %v338 = vmul.f32 0.5, %v337
    %v339 = vsub.f32 1.5, %v338
    %v340 = vmul.f32 %v335, %v339
    %vm341 = vweird.f32 %v302
    %vm342 = vweird.f32 %v335
    %vm343 = vmor %vm341, %vm342
    %v344 = vsel %vm343, %v335, %v340
    %v345 = vrsqrt.pop %v303
    %v346 = vmul.f32 %v345, %v303
    %v347 = vmul.f32 %v346, %v345
    %v348 = vmul.f32 0.5, %v347
    %v349 = vsub.f32 1.5, %v348
    %v350 = vmul.f32 %v345, %v349
    %vm351 = vweird.f32 %v303
    %vm352 = vweird.f32 %v345
    %vm353 = vmor %vm351, %vm352
    %v354 = vsel %vm353, %v345, %v350
    %v355 = vrsqrt.pop %v304
    %v356 = vmul.f32 %v355, %v304
    %v357 = vmul.f32 %v356, %v355
    %v358 = vmul.f32 0.5, %v357
    %v359 = vsub.f32 1.5, %v358
    %v360 = vmul.f32 %v355, %v359
    %vm361 = vweird.f32 %v304
    %vm362 = vweird.f32 %v355
    %vm363 = vmor %vm361, %vm362
    %v364 = vsel %vm363, %v355, %v360
    %v365 = vmul.f32 %v263, %v314
    %v366 = vmul.f32 %v264, %v324
    %v367 = vmul.f32 %v265, %v334
    %v368 = vmul.f32 %v266, %v344
    %v369 = vmul.f32 %v267, %v354
    %v370 = vmul.f32 %v268, %v364
    %v371 = vperm.slane %v229, 0
    %v372 = vmul.f32 %v365, %v371
    %v373 = vmul.f32 %v366, %v371
    %v374 = vmul.f32 %v367, %v371
    %v375 = vmul.f32 %v368, %v371
    %v376 = vmul.f32 %v369, %v371
    %v377 = vmul.f32 %v370, %v371
    %v378 = vperm.slane %v230, 0
    %v379 = vadd.f32 %v372, %v378
    %v380 = vadd.f32 %v373, %v378
    %v381 = vadd.f32 %v374, %v378
    %v382 = vadd.f32 %v375, %v378
    %v383 = vadd.f32 %v376, %v378
    %v384 = vadd.f32 %v377, %v378
    %v385 = vld [vmem:[%s1] sm:$0xff]
    %v386 = vld [vmem:[%s1 + $0x8] sm:$0xff]
    %v387 = vld [vmem:[%s1 + $0x10] sm:$0xff]
    %v388 = vld [vmem:[%s1 + $0x18] sm:$0xff]
    %v389 = vld [vmem:[%s1 + $0x20] sm:$0xff]
    %v390 = vld [vmem:[%s1 + $0x28] sm:$0xff]
    %v391 = vld [vmem:[%s1 + $0x30] sm:$0xff]
    %v392 = vld [vmem:[#allocation2 + $0x1f0] sm:$0x1]
    %v393 = vld [vmem:[#allocation2 + $0x1f1] sm:$0x1]
    %v394 = vld [vmem:[#allocation2 + $0x1f2] sm:$0x1]
    %v395 = vld [vmem:[#allocation2 + $0x1f3] sm:$0x1]
    %v396 = vld [vmem:[#allocation2 + $0x1f4] sm:$0x1]
    %v397 = vld [vmem:[#allocation2 + $0x1f5] sm:$0x1]
    %v398 = vld [vmem:[#allocation2 + $0x1f6] sm:$0x1]
    %v399 = vld [vmem:[#allocation2 + $0x1f7] sm:$0x1]
    %v400 = vld [vmem:[#allocation2 + $0x1f8] sm:$0x1]
    %v401 = vld [vmem:[#allocation2 + $0x1d0] sm:$0xff]
    %v402 = vld [vmem:[#allocation2 + $0x1d8] sm:$0xff]
    %v403 = vld [vmem:[#allocation2 + $0x1e0] sm:$0xff]
    %v404 = vld [vmem:[#allocation2 + $0x1e8] sm:$0xff]
    %v405 = vld [vmem:[#allocation2 + $0xf0] sm:$0xff]
    %v406 = vld [vmem:[#allocation2 + $0xf8] sm:$0xff]
    %v407 = vld [vmem:[#allocation2 + $0x100] sm:$0xff]
    %v408 = vld [vmem:[#allocation2 + $0x108] sm:$0xff]
    %v409 = vperm.slane %v392, 0
    %v411 = vsel %vm231, %v379, 0
    %v414 = vsel %vm231, %v380, 0
    %v417 = vsel %vm231, %v381, 0
    %v420 = vsel %vm231, %v382, 0
    %v423 = vsel %vm231, %v383, 0
    %v426 = vsel %vm231, %v384, 0
    %428 = vmatpush.msra.mxu0 0.0
    %429 = vmatpush.msra.mxu0 0.0
    %430 = vmatpush.msra.mxu0 0.0
    %431 = vmatpush.msra.mxu0 0.0
    %432 = vmatpush.msra.mxu0 0.0
    %433 = vmatpush.msra.mxu0 0.0
    %434 = vmatpush.msra.mxu0 0.0
    %435 = vmatpush.msra.mxu0 0.0
    %436 = vmatpush.msra.mxu0 0.0
    %437 = vmatpush.msra.mxu0 0.0
    %438 = vmatpush.msra.mxu0 0.0
    %439 = vmatpush.msra.mxu0 0.0
    %440 = vmatpush.msra.mxu0 %v408
    %441 = vmatpush.msra.mxu0 %v407
    %442 = vmatpush.msra.mxu0 %v406
    %443 = vmatpush.msra.mxu0 %v405
    %444 = vmatmul.f32.gmra.mxu0 %v411
    %v445 = vpop.f32.mrf.mxu0
    %v446 = vadd.f32 %v409, %v445
    %447 = vmatmul.f32.gmra.mxu0 %v414
    %v448 = vpop.f32.mrf.mxu0
    %v449 = vadd.f32 %v409, %v448
    %450 = vmatmul.f32.gmra.mxu0 %v417
    %v451 = vpop.f32.mrf.mxu0
    %v452 = vadd.f32 %v409, %v451
    %453 = vmatmul.f32.gmra.mxu0 %v420
    %v454 = vpop.f32.mrf.mxu0
    %v455 = vadd.f32 %v409, %v454
    %456 = vmatmul.f32.gmra.mxu0 %v423
    %v457 = vpop.f32.mrf.mxu0
    %v458 = vadd.f32 %v409, %v457
    %459 = vmatmul.f32.gmra.mxu0 %v426
    %v460 = vpop.f32.mrf.mxu0
    %v461 = vadd.f32 %v409, %v460
    %462 = vdwg.mxu0
    %v463 = vld [vmem:[#allocation2 + $0x110] sm:$0xff]
    %v464 = vld [vmem:[#allocation2 + $0x118] sm:$0xff]
    %v465 = vld [vmem:[#allocation2 + $0x120] sm:$0xff]
    %v466 = vld [vmem:[#allocation2 + $0x128] sm:$0xff]
    %468 = vset.pattern.permute.xlu0 0
    %469 = vperm.xlu0 %468, %v401
    %v470 = vpop.permute.xlu0 %469
    %473 = vset.pattern.permute.xlu0 0
    %474 = vperm.xlu0 %473, %v402
    %v475 = vpop.permute.xlu0 %474
    %478 = vset.pattern.permute.xlu0 0
    %479 = vperm.xlu0 %478, %v403
    %v480 = vpop.permute.xlu0 %479
    %483 = vset.pattern.permute.xlu0 0
    %484 = vperm.xlu0 %483, %v404
    %v485 = vpop.permute.xlu0 %484
    %v488 = vsel %vm231, %v463, 0
    %v491 = vsel %vm231, %v464, 0
    %v494 = vsel %vm231, %v465, 0
    %v497 = vsel %vm231, %v466, 0
    %499 = vmatpush.xpose.msra.mxu0 0.0
    %500 = vmatpush.xpose.msra.mxu0 0.0
    %501 = vmatpush.xpose.msra.mxu0 0.0
    %502 = vmatpush.xpose.msra.mxu0 0.0
    %503 = vmatpush.xpose.msra.mxu0 0.0
    %504 = vmatpush.xpose.msra.mxu0 0.0
    %505 = vmatpush.xpose.msra.mxu0 0.0
    %506 = vmatpush.xpose.msra.mxu0 0.0
    %507 = vmatpush.xpose.msra.mxu0 0.0
    %508 = vmatpush.xpose.msra.mxu0 0.0
    %509 = vmatpush.xpose.msra.mxu0 %v426
    %510 = vmatpush.xpose.msra.mxu0 %v423
    %511 = vmatpush.xpose.msra.mxu0 %v420
    %512 = vmatpush.xpose.msra.mxu0 %v417
    %513 = vmatpush.xpose.msra.mxu0 %v414
    %514 = vmatpush.xpose.msra.mxu0 %v411
    %515 = vmatmul.f32.gmra.mxu0 %v488
    %v516 = vpop.f32.mrf.mxu0
    %v517 = vadd.f32 %v470, %v516
    %518 = vmatmul.f32.gmra.mxu0 %v491
    %v519 = vpop.f32.mrf.mxu0
    %v520 = vadd.f32 %v475, %v519
    %521 = vmatmul.f32.gmra.mxu0 %v494
    %v522 = vpop.f32.mrf.mxu0
    %v523 = vadd.f32 %v480, %v522
    %524 = vmatmul.f32.gmra.mxu0 %v497
    %v525 = vpop.f32.mrf.mxu0
    %v526 = vadd.f32 %v485, %v525
    %527 = vdwg.mxu0
    %v528 = vld [vmem:[#allocation2 + $0x130] sm:$0xff]
    %v529 = vld [vmem:[#allocation2 + $0x138] sm:$0xff]
    %v530 = vld [vmem:[#allocation2 + $0x140] sm:$0xff]
    %v531 = vld [vmem:[#allocation2 + $0x148] sm:$0xff]
    %v532 = vperm.slane %v393, 0
    %533 = vmatpush.msra.mxu0 0.0
    %534 = vmatpush.msra.mxu0 0.0
    %535 = vmatpush.msra.mxu0 0.0
    %536 = vmatpush.msra.mxu0 0.0
    %537 = vmatpush.msra.mxu0 0.0
    %538 = vmatpush.msra.mxu0 0.0
    %539 = vmatpush.msra.mxu0 0.0
    %540 = vmatpush.msra.mxu0 0.0
    %541 = vmatpush.msra.mxu0 0.0
    %542 = vmatpush.msra.mxu0 0.0
    %543 = vmatpush.msra.mxu0 0.0
    %544 = vmatpush.msra.mxu0 0.0
    %545 = vmatpush.msra.mxu0 %v531
    %546 = vmatpush.msra.mxu0 %v530
    %547 = vmatpush.msra.mxu0 %v529
    %548 = vmatpush.msra.mxu0 %v528
    %549 = vmatmul.f32.gmra.mxu0 %v411
    %v550 = vpop.f32.mrf.mxu0
    %v551 = vadd.f32 %v532, %v550
    %552 = vmatmul.f32.gmra.mxu0 %v414
    %v553 = vpop.f32.mrf.mxu0
    %v554 = vadd.f32 %v532, %v553
    %555 = vmatmul.f32.gmra.mxu0 %v417
    %v556 = vpop.f32.mrf.mxu0
    %v557 = vadd.f32 %v532, %v556
    %558 = vmatmul.f32.gmra.mxu0 %v420
    %v559 = vpop.f32.mrf.mxu0
    %v560 = vadd.f32 %v532, %v559
    %561 = vmatmul.f32.gmra.mxu0 %v423
    %v562 = vpop.f32.mrf.mxu0
    %v563 = vadd.f32 %v532, %v562
    %564 = vmatmul.f32.gmra.mxu0 %v426
    %v565 = vpop.f32.mrf.mxu0
    %v566 = vadd.f32 %v532, %v565
    %567 = vdwg.mxu0
    %v569 = vsel %vm128, %v446, 0
    %v572 = vsel %vm128, %v449, 0
    %v575 = vsel %vm128, %v452, 0
    %v578 = vsel %vm128, %v455, 0
    %v581 = vsel %vm128, %v458, 0
    %v584 = vsel %vm128, %v461, 0
    %586 = vmatpush.msra.mxu0 0.0
    %587 = vmatpush.msra.mxu0 0.0
    %588 = vmatpush.msra.mxu0 0.0
    %589 = vmatpush.msra.mxu0 0.0
    %590 = vmatpush.msra.mxu0 0.0
    %591 = vmatpush.msra.mxu0 0.0
    %592 = vmatpush.msra.mxu0 0.0
    %593 = vmatpush.msra.mxu0 0.0
    %594 = vmatpush.msra.mxu0 0.0
    %595 = vmatpush.msra.mxu0 0.0
    %596 = vmatpush.msra.mxu0 0.0
    %597 = vmatpush.msra.mxu0 0.0
    %598 = vmatpush.msra.mxu0 0.0
    %599 = vmatpush.msra.mxu0 0.0
    %600 = vmatpush.msra.mxu0 0.0
    %601 = vmatpush.msra.mxu0 %v517
    %602 = vmatmul.f32.gmra.mxu0 %v569
    %v603 = vpop.f32.mrf.mxu0
    %v604 = vadd.f32 0.0, %v603
    %605 = vmatmul.f32.gmra.mxu0 %v572
    %v606 = vpop.f32.mrf.mxu0
    %v607 = vadd.f32 0.0, %v606
    %608 = vmatmul.f32.gmra.mxu0 %v575
    %v609 = vpop.f32.mrf.mxu0
    %v610 = vadd.f32 0.0, %v609
    %611 = vmatmul.f32.gmra.mxu0 %v578
    %v612 = vpop.f32.mrf.mxu0
    %v613 = vadd.f32 0.0, %v612
    %614 = vmatmul.f32.gmra.mxu0 %v581
    %v615 = vpop.f32.mrf.mxu0
    %v616 = vadd.f32 0.0, %v615
    %617 = vmatmul.f32.gmra.mxu0 %v584
    %v618 = vpop.f32.mrf.mxu0
    %v619 = vadd.f32 0.0, %v618
    %620 = vdwg.mxu0
    %v621 = vmul.f32 %v604, 0.35355338
    %v622 = vmul.f32 %v607, 0.35355338
    %v623 = vmul.f32 %v610, 0.35355338
    %v624 = vmul.f32 %v613, 0.35355338
    %v625 = vmul.f32 %v616, 0.35355338
    %v626 = vmul.f32 %v619, 0.35355338
    %v627 = vadd.f32 %v621, %v385
    %v628 = vadd.f32 %v622, %v386
    %v629 = vadd.f32 %v623, %v387
    %v630 = vadd.f32 %v624, %v388
    %v631 = vadd.f32 %v625, %v389
    %v632 = vadd.f32 %v626, %v390
    %vm633 = vcmask 392192
    %v634 = vsel %vm633, %v627, -inf
    %635 = vmax.xlane.f32.xlu0 %v634
    %v636 = vpop.xlane.xlu0 %635
    %v637 = vsel %vm633, %v628, -inf
    %638 = vmax.xlane.f32.xlu0 %v637
    %v639 = vpop.xlane.xlu0 %638
    %v640 = vsel %vm633, %v629, -inf
    %641 = vmax.xlane.f32.xlu0 %v640
    %v642 = vpop.xlane.xlu0 %641
    %v643 = vsel %vm633, %v630, -inf
    %644 = vmax.xlane.f32.xlu0 %v643
    %v645 = vpop.xlane.xlu0 %644
    %v646 = vsel %vm633, %v631, -inf
    %647 = vmax.xlane.f32.xlu0 %v646
    %v648 = vpop.xlane.xlu0 %647
    %v649 = vsel %vm633, %v632, -inf
    %650 = vmax.xlane.f32.xlu0 %v649
    %v651 = vpop.xlane.xlu0 %650
    %v652 = vsub.f32 %v627, %v636
    %v653 = vsub.f32 %v628, %v639
    %v654 = vsub.f32 %v629, %v642
    %v655 = vsub.f32 %v630, %v645
    %v656 = vsub.f32 %v631, %v648
    %v657 = vsub.f32 %v632, %v651
    %v658 = vmul.f32 %v652, 1.442695
    %v659 = vpow.pop %v658
    %v660 = vmul.f32 %v653, 1.442695
    %v661 = vpow.pop %v660
    %v662 = vmul.f32 %v654, 1.442695
    %v663 = vpow.pop %v662
    %v664 = vmul.f32 %v655, 1.442695
    %v665 = vpow.pop %v664
    %v666 = vmul.f32 %v656, 1.442695
    %v667 = vpow.pop %v666
    %v668 = vmul.f32 %v657, 1.442695
    %v669 = vpow.pop %v668
    %v670 = vsel %vm633, %v659, 0.0
    %671 = vadd.xlane.f32.xlu0 %v670
    %v672 = vpop.xlane.xlu0 %671
    %v673 = vsel %vm633, %v661, 0.0
    %674 = vadd.xlane.f32.xlu0 %v673
    %v675 = vpop.xlane.xlu0 %674
    %v676 = vsel %vm633, %v663, 0.0
    %677 = vadd.xlane.f32.xlu0 %v676
    %v678 = vpop.xlane.xlu0 %677
    %v679 = vsel %vm633, %v665, 0.0
    %680 = vadd.xlane.f32.xlu0 %v679
    %v681 = vpop.xlane.xlu0 %680
    %v682 = vsel %vm633, %v667, 0.0
    %683 = vadd.xlane.f32.xlu0 %v682
    %v684 = vpop.xlane.xlu0 %683
    %v685 = vsel %vm633, %v669, 0.0
    %686 = vadd.xlane.f32.xlu0 %v685
    %v687 = vpop.xlane.xlu0 %686
    %v688 = vrcp.pop %v672
    %v689 = vmul.f32 %v672, %v688
    %v690 = vsub.f32 1.0, %v689
    %v691 = vmul.f32 %v688, %v690
    %v692 = vadd.f32 %v688, %v691
    %vm693 = vweird.f32 %v672
    %vm694 = vweird.f32 %v688
    %vm695 = vmor %vm693, %vm694
    %v696 = vsel %vm695, %v688, %v692
    %v697 = vand.u32 2147483647, %v672
    %vm698 = vcmp.eq.f32.partialorder %v697, 8.507059e+37
    %v699 = vand.u32 %v672, 2147483648
    %v700 = vor.u32 1.1754944e-38, %v699
    %v701 = vsel %vm698, %v700, %v696
    %v702 = vmul.f32 %v659, %v701
    %v703 = vrcp.pop %v675
    %v704 = vmul.f32 %v675, %v703
    %v705 = vsub.f32 1.0, %v704
    %v706 = vmul.f32 %v703, %v705
    %v707 = vadd.f32 %v703, %v706
    %vm708 = vweird.f32 %v675
    %vm709 = vweird.f32 %v703
    %vm710 = vmor %vm708, %vm709
    %v711 = vsel %vm710, %v703, %v707
    %v712 = vand.u32 2147483647, %v675
    %vm713 = vcmp.eq.f32.partialorder %v712, 8.507059e+37
    %v714 = vand.u32 %v675, 2147483648
    %v715 = vor.u32 1.1754944e-38, %v714
    %v716 = vsel %vm713, %v715, %v711
    %v717 = vmul.f32 %v661, %v716
    %v718 = vrcp.pop %v678
    %v719 = vmul.f32 %v678, %v718
    %v720 = vsub.f32 1.0, %v719
    %v721 = vmul.f32 %v718, %v720
    %v722 = vadd.f32 %v718, %v721
    %vm723 = vweird.f32 %v678
    %vm724 = vweird.f32 %v718
    %vm725 = vmor %vm723, %vm724
    %v726 = vsel %vm725, %v718, %v722
    %v727 = vand.u32 2147483647, %v678
    %vm728 = vcmp.eq.f32.partialorder %v727, 8.507059e+37
    %v729 = vand.u32 %v678, 2147483648
    %v730 = vor.u32 1.1754944e-38, %v729
    %v731 = vsel %vm728, %v730, %v726
    %v732 = vmul.f32 %v663, %v731
    %v733 = vrcp.pop %v681
    %v734 = vmul.f32 %v681, %v733
    %v735 = vsub.f32 1.0, %v734
    %v736 = vmul.f32 %v733, %v735
    %v737 = vadd.f32 %v733, %v736
    %vm738 = vweird.f32 %v681
    %vm739 = vweird.f32 %v733
    %vm740 = vmor %vm738, %vm739
    %v741 = vsel %vm740, %v733, %v737
    %v742 = vand.u32 2147483647, %v681
    %vm743 = vcmp.eq.f32.partialorder %v742, 8.507059e+37
    %v744 = vand.u32 %v681, 2147483648
    %v745 = vor.u32 1.1754944e-38, %v744
    %v746 = vsel %vm743, %v745, %v741
    %v747 = vmul.f32 %v665, %v746
    %v748 = vrcp.pop %v684
    %v749 = vmul.f32 %v684, %v748
    %v750 = vsub.f32 1.0, %v749
    %v751 = vmul.f32 %v748, %v750
    %v752 = vadd.f32 %v748, %v751
    %vm753 = vweird.f32 %v684
    %vm754 = vweird.f32 %v748
    %vm755 = vmor %vm753, %vm754
    %v756 = vsel %vm755, %v748, %v752
    %v757 = vand.u32 2147483647, %v684
    %vm758 = vcmp.eq.f32.partialorder %v757, 8.507059e+37
    %v759 = vand.u32 %v684, 2147483648
    %v760 = vor.u32 1.1754944e-38, %v759
    %v761 = vsel %vm758, %v760, %v756
    %v762 = vmul.f32 %v667, %v761
    %v763 = vrcp.pop %v687
    %v764 = vmul.f32 %v687, %v763
    %v765 = vsub.f32 1.0, %v764
    %v766 = vmul.f32 %v763, %v765
    %v767 = vadd.f32 %v763, %v766
    %vm768 = vweird.f32 %v687
    %vm769 = vweird.f32 %v763
    %vm770 = vmor %vm768, %vm769
    %v771 = vsel %vm770, %v763, %v767
    %v772 = vand.u32 2147483647, %v687
    %vm773 = vcmp.eq.f32.partialorder %v772, 8.507059e+37
    %v774 = vand.u32 %v687, 2147483648
    %v775 = vor.u32 1.1754944e-38, %v774
    %v776 = vsel %vm773, %v775, %v771
    %v777 = vmul.f32 %v669, %v776
    %v779 = vsel %vm633, %v702, 0
    %v782 = vsel %vm633, %v717, 0
    %v785 = vsel %vm633, %v732, 0
    %v788 = vsel %vm633, %v747, 0
    %v791 = vsel %vm633, %v762, 0
    %v794 = vsel %vm633, %v777, 0
    %796 = vmatpush.msra.mxu0 0.0
    %797 = vmatpush.msra.mxu0 0.0
    %798 = vmatpush.msra.mxu0 0.0
    %799 = vmatpush.msra.mxu0 0.0
    %800 = vmatpush.msra.mxu0 0.0
    %801 = vmatpush.msra.mxu0 0.0
    %802 = vmatpush.msra.mxu0 0.0
    %803 = vmatpush.msra.mxu0 0.0
    %804 = vmatpush.msra.mxu0 0.0
    %805 = vmatpush.msra.mxu0 0.0
    %806 = vmatpush.msra.mxu0 %v566
    %807 = vmatpush.msra.mxu0 %v563
    %808 = vmatpush.msra.mxu0 %v560
    %809 = vmatpush.msra.mxu0 %v557
    %810 = vmatpush.msra.mxu0 %v554
    %811 = vmatpush.msra.mxu0 %v551
    %812 = vmatmul.f32.gmra.mxu0 %v779
    %v813 = vpop.f32.mrf.mxu0
    %v814 = vadd.f32 0.0, %v813
    %815 = vmatmul.f32.gmra.mxu0 %v782
    %v816 = vpop.f32.mrf.mxu0
    %v817 = vadd.f32 0.0, %v816
    %818 = vmatmul.f32.gmra.mxu0 %v785
    %v819 = vpop.f32.mrf.mxu0
    %v820 = vadd.f32 0.0, %v819
    %821 = vmatmul.f32.gmra.mxu0 %v788
    %v822 = vpop.f32.mrf.mxu0
    %v823 = vadd.f32 0.0, %v822
    %824 = vmatmul.f32.gmra.mxu0 %v791
    %v825 = vpop.f32.mrf.mxu0
    %v826 = vadd.f32 0.0, %v825
    %827 = vmatmul.f32.gmra.mxu0 %v794
    %v828 = vpop.f32.mrf.mxu0
    %v829 = vadd.f32 0.0, %v828
    %830 = vdwg.mxu0
    %v831 = vld [vmem:[#allocation2 + $0x150] sm:$0xff]
    %832 = vrot.lane.b32.xlu0 %v446, 120
    %v833 = vpop.permute.xlu0 %832
    %834 = vrot.lane.b32.xlu0 %v449, 120
    %v835 = vpop.permute.xlu0 %834
    %836 = vrot.lane.b32.xlu0 %v452, 120
    %v837 = vpop.permute.xlu0 %836
    %838 = vrot.lane.b32.xlu0 %v455, 120
    %v839 = vpop.permute.xlu0 %838
    %840 = vrot.lane.b32.xlu0 %v458, 120
    %v841 = vpop.permute.xlu0 %840
    %842 = vrot.lane.b32.xlu0 %v461, 120
    %v843 = vpop.permute.xlu0 %842
    %v844 = vsel %vm128, %v833, 0
    %v846 = vsel %vm128, %v835, 0
    %v848 = vsel %vm128, %v837, 0
    %v850 = vsel %vm128, %v839, 0
    %v852 = vsel %vm128, %v841, 0
    %v854 = vsel %vm128, %v843, 0
    %856 = vmatpush.msra.mxu0 0.0
    %857 = vmatpush.msra.mxu0 0.0
    %858 = vmatpush.msra.mxu0 0.0
    %859 = vmatpush.msra.mxu0 0.0
    %860 = vmatpush.msra.mxu0 0.0
    %861 = vmatpush.msra.mxu0 0.0
    %862 = vmatpush.msra.mxu0 0.0
    %863 = vmatpush.msra.mxu0 0.0
    %864 = vmatpush.msra.mxu0 0.0
    %865 = vmatpush.msra.mxu0 0.0
    %866 = vmatpush.msra.mxu0 0.0
    %867 = vmatpush.msra.mxu0 0.0
    %868 = vmatpush.msra.mxu0 0.0
    %869 = vmatpush.msra.mxu0 0.0
    %870 = vmatpush.msra.mxu0 0.0
    %871 = vmatpush.msra.mxu0 %v520
    %872 = vmatmul.f32.gmra.mxu0 %v844
    %v873 = vpop.f32.mrf.mxu0
    %v874 = vadd.f32 0.0, %v873
    %875 = vmatmul.f32.gmra.mxu0 %v846
    %v876 = vpop.f32.mrf.mxu0
    %v877 = vadd.f32 0.0, %v876
    %878 = vmatmul.f32.gmra.mxu0 %v848
    %v879 = vpop.f32.mrf.mxu0
    %v880 = vadd.f32 0.0, %v879
    %881 = vmatmul.f32.gmra.mxu0 %v850
    %v882 = vpop.f32.mrf.mxu0
    %v883 = vadd.f32 0.0, %v882
    %884 = vmatmul.f32.gmra.mxu0 %v852
    %v885 = vpop.f32.mrf.mxu0
    %v886 = vadd.f32 0.0, %v885
    %887 = vmatmul.f32.gmra.mxu0 %v854
    %v888 = vpop.f32.mrf.mxu0
    %v889 = vadd.f32 0.0, %v888
    %890 = vdwg.mxu0
    %v891 = vmul.f32 %v874, 0.35355338
    %v892 = vmul.f32 %v877, 0.35355338
    %v893 = vmul.f32 %v880, 0.35355338
    %v894 = vmul.f32 %v883, 0.35355338
    %v895 = vmul.f32 %v886, 0.35355338
    %v896 = vmul.f32 %v889, 0.35355338
    %v897 = vadd.f32 %v891, %v385
    %v898 = vadd.f32 %v892, %v386
    %v899 = vadd.f32 %v893, %v387
    %v900 = vadd.f32 %v894, %v388
    %v901 = vadd.f32 %v895, %v389
    %v902 = vadd.f32 %v896, %v390
    %v903 = vsel %vm633, %v897, -inf
    %904 = vmax.xlane.f32.xlu0 %v903
    %v905 = vpop.xlane.xlu0 %904
    %v906 = vsel %vm633, %v898, -inf
    %907 = vmax.xlane.f32.xlu0 %v906
    %v908 = vpop.xlane.xlu0 %907
    %v909 = vsel %vm633, %v899, -inf
    %910 = vmax.xlane.f32.xlu0 %v909
    %v911 = vpop.xlane.xlu0 %910
    %v912 = vsel %vm633, %v900, -inf
    %913 = vmax.xlane.f32.xlu0 %v912
    %v914 = vpop.xlane.xlu0 %913
    %v915 = vsel %vm633, %v901, -inf
    %916 = vmax.xlane.f32.xlu0 %v915
    %v917 = vpop.xlane.xlu0 %916
    %v918 = vsel %vm633, %v902, -inf
    %919 = vmax.xlane.f32.xlu0 %v918
    %v920 = vpop.xlane.xlu0 %919
    %v921 = vsub.f32 %v897, %v905
    %v922 = vsub.f32 %v898, %v908
    %v923 = vsub.f32 %v899, %v911
    %v924 = vsub.f32 %v900, %v914
    %v925 = vsub.f32 %v901, %v917
    %v926 = vsub.f32 %v902, %v920
    %v927 = vmul.f32 %v921, 1.442695
    %v928 = vpow.pop %v927
    %v929 = vmul.f32 %v922, 1.442695
    %v930 = vpow.pop %v929
    %v931 = vmul.f32 %v923, 1.442695
    %v932 = vpow.pop %v931
    %v933 = vmul.f32 %v924, 1.442695
    %v934 = vpow.pop %v933
    %v935 = vmul.f32 %v925, 1.442695
    %v936 = vpow.pop %v935
    %v937 = vmul.f32 %v926, 1.442695
    %v938 = vpow.pop %v937
    %v939 = vsel %vm633, %v928, 0.0
    %940 = vadd.xlane.f32.xlu0 %v939
    %v941 = vpop.xlane.xlu0 %940
    %v942 = vsel %vm633, %v930, 0.0
    %943 = vadd.xlane.f32.xlu0 %v942
    %v944 = vpop.xlane.xlu0 %943
    %v945 = vsel %vm633, %v932, 0.0
    %946 = vadd.xlane.f32.xlu0 %v945
    %v947 = vpop.xlane.xlu0 %946
    %v948 = vsel %vm633, %v934, 0.0
    %949 = vadd.xlane.f32.xlu0 %v948
    %v950 = vpop.xlane.xlu0 %949
    %v951 = vsel %vm633, %v936, 0.0
    %952 = vadd.xlane.f32.xlu0 %v951
    %v953 = vpop.xlane.xlu0 %952
    %v954 = vsel %vm633, %v938, 0.0
    %955 = vadd.xlane.f32.xlu0 %v954
    %v956 = vpop.xlane.xlu0 %955
    %v957 = vrcp.pop %v941
    %v958 = vmul.f32 %v941, %v957
    %v959 = vsub.f32 1.0, %v958
    %v960 = vmul.f32 %v957, %v959
    %v961 = vadd.f32 %v957, %v960
    %vm962 = vweird.f32 %v941
    %vm963 = vweird.f32 %v957
    %vm964 = vmor %vm962, %vm963
    %v965 = vsel %vm964, %v957, %v961
    %v966 = vand.u32 2147483647, %v941
    %vm967 = vcmp.eq.f32.partialorder %v966, 8.507059e+37
    %v968 = vand.u32 %v941, 2147483648
    %v969 = vor.u32 1.1754944e-38, %v968
    %v970 = vsel %vm967, %v969, %v965
    %v971 = vmul.f32 %v928, %v970
    %v972 = vrcp.pop %v944
    %v973 = vmul.f32 %v944, %v972
    %v974 = vsub.f32 1.0, %v973
    %v975 = vmul.f32 %v972, %v974
    %v976 = vadd.f32 %v972, %v975
    %vm977 = vweird.f32 %v944
    %vm978 = vweird.f32 %v972
    %vm979 = vmor %vm977, %vm978
    %v980 = vsel %vm979, %v972, %v976
    %v981 = vand.u32 2147483647, %v944
    %vm982 = vcmp.eq.f32.partialorder %v981, 8.507059e+37
    %v983 = vand.u32 %v944, 2147483648
    %v984 = vor.u32 1.1754944e-38, %v983
    %v985 = vsel %vm982, %v984, %v980
    %v986 = vmul.f32 %v930, %v985
    %v987 = vrcp.pop %v947
    %v988 = vmul.f32 %v947, %v987
    %v989 = vsub.f32 1.0, %v988
    %v990 = vmul.f32 %v987, %v989
    %v991 = vadd.f32 %v987, %v990
    %vm992 = vweird.f32 %v947
    %vm993 = vweird.f32 %v987
    %vm994 = vmor %vm992, %vm993
    %v995 = vsel %vm994, %v987, %v991
    %v996 = vand.u32 2147483647, %v947
    %vm997 = vcmp.eq.f32.partialorder %v996, 8.507059e+37
    %v998 = vand.u32 %v947, 2147483648
    %v999 = vor.u32 1.1754944e-38, %v998
    %v1000 = vsel %vm997, %v999, %v995
    %v1001 = vmul.f32 %v932, %v1000
    %v1002 = vrcp.pop %v950
    %v1003 = vmul.f32 %v950, %v1002
    %v1004 = vsub.f32 1.0, %v1003
    %v1005 = vmul.f32 %v1002, %v1004
    %v1006 = vadd.f32 %v1002, %v1005
    %vm1007 = vweird.f32 %v950
    %vm1008 = vweird.f32 %v1002
    %vm1009 = vmor %vm1007, %vm1008
    %v1010 = vsel %vm1009, %v1002, %v1006
    %v1011 = vand.u32 2147483647, %v950
    %vm1012 = vcmp.eq.f32.partialorder %v1011, 8.507059e+37
    %v1013 = vand.u32 %v950, 2147483648
    %v1014 = vor.u32 1.1754944e-38, %v1013
    %v1015 = vsel %vm1012, %v1014, %v1010
    %v1016 = vmul.f32 %v934, %v1015
    %v1017 = vrcp.pop %v953
    %v1018 = vmul.f32 %v953, %v1017
    %v1019 = vsub.f32 1.0, %v1018
    %v1020 = vmul.f32 %v1017, %v1019
    %v1021 = vadd.f32 %v1017, %v1020
    %vm1022 = vweird.f32 %v953
    %vm1023 = vweird.f32 %v1017
    %vm1024 = vmor %vm1022, %vm1023
    %v1025 = vsel %vm1024, %v1017, %v1021
    %v1026 = vand.u32 2147483647, %v953
    %vm1027 = vcmp.eq.f32.partialorder %v1026, 8.507059e+37
    %v1028 = vand.u32 %v953, 2147483648
    %v1029 = vor.u32 1.1754944e-38, %v1028
    %v1030 = vsel %vm1027, %v1029, %v1025
    %v1031 = vmul.f32 %v936, %v1030
    %v1032 = vrcp.pop %v956
    %v1033 = vmul.f32 %v956, %v1032
    %v1034 = vsub.f32 1.0, %v1033
    %v1035 = vmul.f32 %v1032, %v1034
    %v1036 = vadd.f32 %v1032, %v1035
    %vm1037 = vweird.f32 %v956
    %vm1038 = vweird.f32 %v1032
    %vm1039 = vmor %vm1037, %vm1038
    %v1040 = vsel %vm1039, %v1032, %v1036
    %v1041 = vand.u32 2147483647, %v956
    %vm1042 = vcmp.eq.f32.partialorder %v1041, 8.507059e+37
    %v1043 = vand.u32 %v956, 2147483648
    %v1044 = vor.u32 1.1754944e-38, %v1043
    %v1045 = vsel %vm1042, %v1044, %v1040
    %v1046 = vmul.f32 %v938, %v1045
    %1053 = vrot.lane.b32.xlu0 %v551, 120
    %v1054 = vpop.permute.xlu0 %1053
    %1055 = vrot.lane.b32.xlu0 %v554, 120
    %v1056 = vpop.permute.xlu0 %1055
    %1057 = vrot.lane.b32.xlu0 %v557, 120
    %v1058 = vpop.permute.xlu0 %1057
    %1059 = vrot.lane.b32.xlu0 %v560, 120
    %v1060 = vpop.permute.xlu0 %1059
    %1061 = vrot.lane.b32.xlu0 %v563, 120
    %v1062 = vpop.permute.xlu0 %1061
    %1063 = vrot.lane.b32.xlu0 %v566, 120
    %v1064 = vpop.permute.xlu0 %1063
    %v1072 = vsel %vm633, %v971, 0
    %v1075 = vsel %vm633, %v986, 0
    %v1078 = vsel %vm633, %v1001, 0
    %v1081 = vsel %vm633, %v1016, 0
    %v1084 = vsel %vm633, %v1031, 0
    %v1087 = vsel %vm633, %v1046, 0
    %1089 = vmatpush.msra.mxu0 0.0
    %1090 = vmatpush.msra.mxu0 0.0
    %1091 = vmatpush.msra.mxu0 0.0
    %1092 = vmatpush.msra.mxu0 0.0
    %1093 = vmatpush.msra.mxu0 0.0
    %1094 = vmatpush.msra.mxu0 0.0
    %1095 = vmatpush.msra.mxu0 0.0
    %1096 = vmatpush.msra.mxu0 0.0
    %1097 = vmatpush.msra.mxu0 0.0
    %1098 = vmatpush.msra.mxu0 0.0
    %1099 = vmatpush.msra.mxu0 %v1064
    %1100 = vmatpush.msra.mxu0 %v1062
    %1101 = vmatpush.msra.mxu0 %v1060
    %1102 = vmatpush.msra.mxu0 %v1058
    %1103 = vmatpush.msra.mxu0 %v1056
    %1104 = vmatpush.msra.mxu0 %v1054
    %1105 = vmatmul.f32.gmra.mxu0 %v1072
    %v1106 = vpop.f32.mrf.mxu0
    %v1107 = vadd.f32 0.0, %v1106
    %1108 = vmatmul.f32.gmra.mxu0 %v1075
    %v1109 = vpop.f32.mrf.mxu0
    %v1110 = vadd.f32 0.0, %v1109
    %1111 = vmatmul.f32.gmra.mxu0 %v1078
    %v1112 = vpop.f32.mrf.mxu0
    %v1113 = vadd.f32 0.0, %v1112
    %1114 = vmatmul.f32.gmra.mxu0 %v1081
    %v1115 = vpop.f32.mrf.mxu0
    %v1116 = vadd.f32 0.0, %v1115
    %1117 = vmatmul.f32.gmra.mxu0 %v1084
    %v1118 = vpop.f32.mrf.mxu0
    %v1119 = vadd.f32 0.0, %v1118
    %1120 = vmatmul.f32.gmra.mxu0 %v1087
    %v1121 = vpop.f32.mrf.mxu0
    %v1122 = vadd.f32 0.0, %v1121
    %1123 = vdwg.mxu0
    %v1124 = vld [vmem:[#allocation2 + $0x158] sm:$0xff]
    %v1126 = vsel %vm128, %v1107, 0
    %v1129 = vsel %vm128, %v1110, 0
    %v1132 = vsel %vm128, %v1113, 0
    %v1135 = vsel %vm128, %v1116, 0
    %v1138 = vsel %vm128, %v1119, 0
    %v1141 = vsel %vm128, %v1122, 0
    %1143 = vmatpush.msra.mxu0 0.0
    %1144 = vmatpush.msra.mxu0 0.0
    %1145 = vmatpush.msra.mxu0 0.0
    %1146 = vmatpush.msra.mxu0 0.0
    %1147 = vmatpush.msra.mxu0 0.0
    %1148 = vmatpush.msra.mxu0 0.0
    %1149 = vmatpush.msra.mxu0 0.0
    %1150 = vmatpush.msra.mxu0 0.0
    %1151 = vmatpush.msra.mxu0 0.0
    %1152 = vmatpush.msra.mxu0 0.0
    %1153 = vmatpush.msra.mxu0 0.0
    %1154 = vmatpush.msra.mxu0 0.0
    %1155 = vmatpush.msra.mxu0 0.0
    %1156 = vmatpush.msra.mxu0 0.0
    %1157 = vmatpush.msra.mxu0 0.0
    %1158 = vmatpush.msra.mxu0 %v1124
    %1159 = vmatmul.f32.gmra.mxu0 %v1126
    %v1160 = vpop.f32.mrf.mxu0
    %v1161 = vadd.f32 0.0, %v1160
    %1162 = vmatmul.f32.gmra.mxu0 %v1129
    %v1163 = vpop.f32.mrf.mxu0
    %v1164 = vadd.f32 0.0, %v1163
    %1165 = vmatmul.f32.gmra.mxu0 %v1132
    %v1166 = vpop.f32.mrf.mxu0
    %v1167 = vadd.f32 0.0, %v1166
    %1168 = vmatmul.f32.gmra.mxu0 %v1135
    %v1169 = vpop.f32.mrf.mxu0
    %v1170 = vadd.f32 0.0, %v1169
    %1171 = vmatmul.f32.gmra.mxu0 %v1138
    %v1172 = vpop.f32.mrf.mxu0
    %v1173 = vadd.f32 0.0, %v1172
    %1174 = vmatmul.f32.gmra.mxu0 %v1141
    %v1175 = vpop.f32.mrf.mxu0
    %v1176 = vadd.f32 0.0, %v1175
    %1177 = vdwg.mxu0
    %v1179 = vsel %vm128, %v814, 0
    %v1182 = vsel %vm128, %v817, 0
    %v1185 = vsel %vm128, %v820, 0
    %v1188 = vsel %vm128, %v823, 0
    %v1191 = vsel %vm128, %v826, 0
    %v1194 = vsel %vm128, %v829, 0
    %1196 = vmatpush.msra.mxu0 0.0
    %1197 = vmatpush.msra.mxu0 0.0
    %1198 = vmatpush.msra.mxu0 0.0
    %1199 = vmatpush.msra.mxu0 0.0
    %1200 = vmatpush.msra.mxu0 0.0
    %1201 = vmatpush.msra.mxu0 0.0
    %1202 = vmatpush.msra.mxu0 0.0
    %1203 = vmatpush.msra.mxu0 0.0
    %1204 = vmatpush.msra.mxu0 0.0
    %1205 = vmatpush.msra.mxu0 0.0
    %1206 = vmatpush.msra.mxu0 0.0
    %1207 = vmatpush.msra.mxu0 0.0
    %1208 = vmatpush.msra.mxu0 0.0
    %1209 = vmatpush.msra.mxu0 0.0
    %1210 = vmatpush.msra.mxu0 0.0
    %1211 = vmatpush.msra.mxu0 %v831
    %1212 = vmatmul.f32.gmra.mxu0 %v1179
    %v1213 = vpop.f32.mrf.mxu0
    %v1214 = vadd.f32 %v1161, %v1213
    %1215 = vmatmul.f32.gmra.mxu0 %v1182
    %v1216 = vpop.f32.mrf.mxu0
    %v1217 = vadd.f32 %v1164, %v1216
    %1218 = vmatmul.f32.gmra.mxu0 %v1185
    %v1219 = vpop.f32.mrf.mxu0
    %v1220 = vadd.f32 %v1167, %v1219
    %1221 = vmatmul.f32.gmra.mxu0 %v1188
    %v1222 = vpop.f32.mrf.mxu0
    %v1223 = vadd.f32 %v1170, %v1222
    %1224 = vmatmul.f32.gmra.mxu0 %v1191
    %v1225 = vpop.f32.mrf.mxu0
    %v1226 = vadd.f32 %v1173, %v1225
    %1227 = vmatmul.f32.gmra.mxu0 %v1194
    %v1228 = vpop.f32.mrf.mxu0
    %v1229 = vadd.f32 %v1176, %v1228
    %1230 = vdwg.mxu0
    %1231 = vrot.lane.b32.xlu0 %v446, 112
    %v1232 = vpop.permute.xlu0 %1231
    %1233 = vrot.lane.b32.xlu0 %v449, 112
    %v1234 = vpop.permute.xlu0 %1233
    %1235 = vrot.lane.b32.xlu0 %v452, 112
    %v1236 = vpop.permute.xlu0 %1235
    %1237 = vrot.lane.b32.xlu0 %v455, 112
    %v1238 = vpop.permute.xlu0 %1237
    %1239 = vrot.lane.b32.xlu0 %v458, 112
    %v1240 = vpop.permute.xlu0 %1239
    %1241 = vrot.lane.b32.xlu0 %v461, 112
    %v1242 = vpop.permute.xlu0 %1241
    %v1243 = vsel %vm128, %v1232, 0
    %v1245 = vsel %vm128, %v1234, 0
    %v1247 = vsel %vm128, %v1236, 0
    %v1249 = vsel %vm128, %v1238, 0
    %v1251 = vsel %vm128, %v1240, 0
    %v1253 = vsel %vm128, %v1242, 0
    %1255 = vmatpush.msra.mxu0 0.0
    %1256 = vmatpush.msra.mxu0 0.0
    %1257 = vmatpush.msra.mxu0 0.0
    %1258 = vmatpush.msra.mxu0 0.0
    %1259 = vmatpush.msra.mxu0 0.0
    %1260 = vmatpush.msra.mxu0 0.0
    %1261 = vmatpush.msra.mxu0 0.0
    %1262 = vmatpush.msra.mxu0 0.0
    %1263 = vmatpush.msra.mxu0 0.0
    %1264 = vmatpush.msra.mxu0 0.0
    %1265 = vmatpush.msra.mxu0 0.0
    %1266 = vmatpush.msra.mxu0 0.0
    %1267 = vmatpush.msra.mxu0 0.0
    %1268 = vmatpush.msra.mxu0 0.0
    %1269 = vmatpush.msra.mxu0 0.0
    %1270 = vmatpush.msra.mxu0 %v523
    %1271 = vmatmul.f32.gmra.mxu0 %v1243
    %v1272 = vpop.f32.mrf.mxu0
    %v1273 = vadd.f32 0.0, %v1272
    %1274 = vmatmul.f32.gmra.mxu0 %v1245
    %v1275 = vpop.f32.mrf.mxu0
    %v1276 = vadd.f32 0.0, %v1275
    %1277 = vmatmul.f32.gmra.mxu0 %v1247
    %v1278 = vpop.f32.mrf.mxu0
    %v1279 = vadd.f32 0.0, %v1278
    %1280 = vmatmul.f32.gmra.mxu0 %v1249
    %v1281 = vpop.f32.mrf.mxu0
    %v1282 = vadd.f32 0.0, %v1281
    %1283 = vmatmul.f32.gmra.mxu0 %v1251
    %v1284 = vpop.f32.mrf.mxu0
    %v1285 = vadd.f32 0.0, %v1284
    %1286 = vmatmul.f32.gmra.mxu0 %v1253
    %v1287 = vpop.f32.mrf.mxu0
    %v1288 = vadd.f32 0.0, %v1287
    %1289 = vdwg.mxu0
    %v1290 = vmul.f32 %v1273, 0.35355338
    %v1291 = vmul.f32 %v1276, 0.35355338
    %v1292 = vmul.f32 %v1279, 0.35355338
    %v1293 = vmul.f32 %v1282, 0.35355338
    %v1294 = vmul.f32 %v1285, 0.35355338
    %v1295 = vmul.f32 %v1288, 0.35355338
    %v1296 = vadd.f32 %v1290, %v385
    %v1297 = vadd.f32 %v1291, %v386
    %v1298 = vadd.f32 %v1292, %v387
    %v1299 = vadd.f32 %v1293, %v388
    %v1300 = vadd.f32 %v1294, %v389
    %v1301 = vadd.f32 %v1295, %v390
    %v1302 = vsel %vm633, %v1296, -inf
    %1303 = vmax.xlane.f32.xlu0 %v1302
    %v1304 = vpop.xlane.xlu0 %1303
    %v1305 = vsel %vm633, %v1297, -inf
    %1306 = vmax.xlane.f32.xlu0 %v1305
    %v1307 = vpop.xlane.xlu0 %1306
    %v1308 = vsel %vm633, %v1298, -inf
    %1309 = vmax.xlane.f32.xlu0 %v1308
    %v1310 = vpop.xlane.xlu0 %1309
    %v1311 = vsel %vm633, %v1299, -inf
    %1312 = vmax.xlane.f32.xlu0 %v1311
    %v1313 = vpop.xlane.xlu0 %1312
    %v1314 = vsel %vm633, %v1300, -inf
    %1315 = vmax.xlane.f32.xlu0 %v1314
    %v1316 = vpop.xlane.xlu0 %1315
    %v1317 = vsel %vm633, %v1301, -inf
    %1318 = vmax.xlane.f32.xlu0 %v1317
    %v1319 = vpop.xlane.xlu0 %1318
    %v1320 = vsub.f32 %v1296, %v1304
    %v1321 = vsub.f32 %v1297, %v1307
    %v1322 = vsub.f32 %v1298, %v1310
    %v1323 = vsub.f32 %v1299, %v1313
    %v1324 = vsub.f32 %v1300, %v1316
    %v1325 = vsub.f32 %v1301, %v1319
    %v1326 = vmul.f32 %v1320, 1.442695
    %v1327 = vpow.pop %v1326
    %v1328 = vmul.f32 %v1321, 1.442695
    %v1329 = vpow.pop %v1328
    %v1330 = vmul.f32 %v1322, 1.442695
    %v1331 = vpow.pop %v1330
    %v1332 = vmul.f32 %v1323, 1.442695
    %v1333 = vpow.pop %v1332
    %v1334 = vmul.f32 %v1324, 1.442695
    %v1335 = vpow.pop %v1334
    %v1336 = vmul.f32 %v1325, 1.442695
    %v1337 = vpow.pop %v1336
    %v1338 = vsel %vm633, %v1327, 0.0
    %1339 = vadd.xlane.f32.xlu0 %v1338
    %v1340 = vpop.xlane.xlu0 %1339
    %v1341 = vsel %vm633, %v1329, 0.0
    %1342 = vadd.xlane.f32.xlu0 %v1341
    %v1343 = vpop.xlane.xlu0 %1342
    %v1344 = vsel %vm633, %v1331, 0.0
    %1345 = vadd.xlane.f32.xlu0 %v1344
    %v1346 = vpop.xlane.xlu0 %1345
    %v1347 = vsel %vm633, %v1333, 0.0
    %1348 = vadd.xlane.f32.xlu0 %v1347
    %v1349 = vpop.xlane.xlu0 %1348
    %v1350 = vsel %vm633, %v1335, 0.0
    %1351 = vadd.xlane.f32.xlu0 %v1350
    %v1352 = vpop.xlane.xlu0 %1351
    %v1353 = vsel %vm633, %v1337, 0.0
    %1354 = vadd.xlane.f32.xlu0 %v1353
    %v1355 = vpop.xlane.xlu0 %1354
    %v1356 = vrcp.pop %v1340
    %v1357 = vmul.f32 %v1340, %v1356
    %v1358 = vsub.f32 1.0, %v1357
    %v1359 = vmul.f32 %v1356, %v1358
    %v1360 = vadd.f32 %v1356, %v1359
    %vm1361 = vweird.f32 %v1340
    %vm1362 = vweird.f32 %v1356
    %vm1363 = vmor %vm1361, %vm1362
    %v1364 = vsel %vm1363, %v1356, %v1360
    %v1365 = vand.u32 2147483647, %v1340
    %vm1366 = vcmp.eq.f32.partialorder %v1365, 8.507059e+37
    %v1367 = vand.u32 %v1340, 2147483648
    %v1368 = vor.u32 1.1754944e-38, %v1367
    %v1369 = vsel %vm1366, %v1368, %v1364
    %v1370 = vmul.f32 %v1327, %v1369
    %v1371 = vrcp.pop %v1343
    %v1372 = vmul.f32 %v1343, %v1371
    %v1373 = vsub.f32 1.0, %v1372
    %v1374 = vmul.f32 %v1371, %v1373
    %v1375 = vadd.f32 %v1371, %v1374
    %vm1376 = vweird.f32 %v1343
    %vm1377 = vweird.f32 %v1371
    %vm1378 = vmor %vm1376, %vm1377
    %v1379 = vsel %vm1378, %v1371, %v1375
    %v1380 = vand.u32 2147483647, %v1343
    %vm1381 = vcmp.eq.f32.partialorder %v1380, 8.507059e+37
    %v1382 = vand.u32 %v1343, 2147483648
    %v1383 = vor.u32 1.1754944e-38, %v1382
    %v1384 = vsel %vm1381, %v1383, %v1379
    %v1385 = vmul.f32 %v1329, %v1384
    %v1386 = vrcp.pop %v1346
    %v1387 = vmul.f32 %v1346, %v1386
    %v1388 = vsub.f32 1.0, %v1387
    %v1389 = vmul.f32 %v1386, %v1388
    %v1390 = vadd.f32 %v1386, %v1389
    %vm1391 = vweird.f32 %v1346
    %vm1392 = vweird.f32 %v1386
    %vm1393 = vmor %vm1391, %vm1392
    %v1394 = vsel %vm1393, %v1386, %v1390
    %v1395 = vand.u32 2147483647, %v1346
    %vm1396 = vcmp.eq.f32.partialorder %v1395, 8.507059e+37
    %v1397 = vand.u32 %v1346, 2147483648
    %v1398 = vor.u32 1.1754944e-38, %v1397
    %v1399 = vsel %vm1396, %v1398, %v1394
    %v1400 = vmul.f32 %v1331, %v1399
    %v1401 = vrcp.pop %v1349
    %v1402 = vmul.f32 %v1349, %v1401
    %v1403 = vsub.f32 1.0, %v1402
    %v1404 = vmul.f32 %v1401, %v1403
    %v1405 = vadd.f32 %v1401, %v1404
    %vm1406 = vweird.f32 %v1349
    %vm1407 = vweird.f32 %v1401
    %vm1408 = vmor %vm1406, %vm1407
    %v1409 = vsel %vm1408, %v1401, %v1405
    %v1410 = vand.u32 2147483647, %v1349
    %vm1411 = vcmp.eq.f32.partialorder %v1410, 8.507059e+37
    %v1412 = vand.u32 %v1349, 2147483648
    %v1413 = vor.u32 1.1754944e-38, %v1412
    %v1414 = vsel %vm1411, %v1413, %v1409
    %v1415 = vmul.f32 %v1333, %v1414
    %v1416 = vrcp.pop %v1352
    %v1417 = vmul.f32 %v1352, %v1416
    %v1418 = vsub.f32 1.0, %v1417
    %v1419 = vmul.f32 %v1416, %v1418
    %v1420 = vadd.f32 %v1416, %v1419
    %vm1421 = vweird.f32 %v1352
    %vm1422 = vweird.f32 %v1416
    %vm1423 = vmor %vm1421, %vm1422
    %v1424 = vsel %vm1423, %v1416, %v1420
    %v1425 = vand.u32 2147483647, %v1352
    %vm1426 = vcmp.eq.f32.partialorder %v1425, 8.507059e+37
    %v1427 = vand.u32 %v1352, 2147483648
    %v1428 = vor.u32 1.1754944e-38, %v1427
    %v1429 = vsel %vm1426, %v1428, %v1424
    %v1430 = vmul.f32 %v1335, %v1429
    %v1431 = vrcp.pop %v1355
    %v1432 = vmul.f32 %v1355, %v1431
    %v1433 = vsub.f32 1.0, %v1432
    %v1434 = vmul.f32 %v1431, %v1433
    %v1435 = vadd.f32 %v1431, %v1434
    %vm1436 = vweird.f32 %v1355
    %vm1437 = vweird.f32 %v1431
    %vm1438 = vmor %vm1436, %vm1437
    %v1439 = vsel %vm1438, %v1431, %v1435
    %v1440 = vand.u32 2147483647, %v1355
    %vm1441 = vcmp.eq.f32.partialorder %v1440, 8.507059e+37
    %v1442 = vand.u32 %v1355, 2147483648
    %v1443 = vor.u32 1.1754944e-38, %v1442
    %v1444 = vsel %vm1441, %v1443, %v1439
    %v1445 = vmul.f32 %v1337, %v1444
    %1446 = vrot.lane.b32.xlu0 %v551, 112
    %v1447 = vpop.permute.xlu0 %1446
    %1448 = vrot.lane.b32.xlu0 %v554, 112
    %v1449 = vpop.permute.xlu0 %1448
    %1450 = vrot.lane.b32.xlu0 %v557, 112
    %v1451 = vpop.permute.xlu0 %1450
    %1452 = vrot.lane.b32.xlu0 %v560, 112
    %v1453 = vpop.permute.xlu0 %1452
    %1454 = vrot.lane.b32.xlu0 %v563, 112
    %v1455 = vpop.permute.xlu0 %1454
    %1456 = vrot.lane.b32.xlu0 %v566, 112
    %v1457 = vpop.permute.xlu0 %1456
    %v1465 = vsel %vm633, %v1370, 0
    %v1468 = vsel %vm633, %v1385, 0
    %v1471 = vsel %vm633, %v1400, 0
    %v1474 = vsel %vm633, %v1415, 0
    %v1477 = vsel %vm633, %v1430, 0
    %v1480 = vsel %vm633, %v1445, 0
    %1482 = vmatpush.msra.mxu0 0.0
    %1483 = vmatpush.msra.mxu0 0.0
    %1484 = vmatpush.msra.mxu0 0.0
    %1485 = vmatpush.msra.mxu0 0.0
    %1486 = vmatpush.msra.mxu0 0.0
    %1487 = vmatpush.msra.mxu0 0.0
    %1488 = vmatpush.msra.mxu0 0.0
    %1489 = vmatpush.msra.mxu0 0.0
    %1490 = vmatpush.msra.mxu0 0.0
    %1491 = vmatpush.msra.mxu0 0.0
    %1492 = vmatpush.msra.mxu0 %v1457
    %1493 = vmatpush.msra.mxu0 %v1455
    %1494 = vmatpush.msra.mxu0 %v1453
    %1495 = vmatpush.msra.mxu0 %v1451
    %1496 = vmatpush.msra.mxu0 %v1449
    %1497 = vmatpush.msra.mxu0 %v1447
    %1498 = vmatmul.f32.gmra.mxu0 %v1465
    %v1499 = vpop.f32.mrf.mxu0
    %v1500 = vadd.f32 0.0, %v1499
    %1501 = vmatmul.f32.gmra.mxu0 %v1468
    %v1502 = vpop.f32.mrf.mxu0
    %v1503 = vadd.f32 0.0, %v1502
    %1504 = vmatmul.f32.gmra.mxu0 %v1471
    %v1505 = vpop.f32.mrf.mxu0
    %v1506 = vadd.f32 0.0, %v1505
    %1507 = vmatmul.f32.gmra.mxu0 %v1474
    %v1508 = vpop.f32.mrf.mxu0
    %v1509 = vadd.f32 0.0, %v1508
    %1510 = vmatmul.f32.gmra.mxu0 %v1477
    %v1511 = vpop.f32.mrf.mxu0
    %v1512 = vadd.f32 0.0, %v1511
    %1513 = vmatmul.f32.gmra.mxu0 %v1480
    %v1514 = vpop.f32.mrf.mxu0
    %v1515 = vadd.f32 0.0, %v1514
    %1516 = vdwg.mxu0
    %v1517 = vld [vmem:[#allocation2 + $0x160] sm:$0xff]
    %v1519 = vsel %vm128, %v1500, 0
    %v1522 = vsel %vm128, %v1503, 0
    %v1525 = vsel %vm128, %v1506, 0
    %v1528 = vsel %vm128, %v1509, 0
    %v1531 = vsel %vm128, %v1512, 0
    %v1534 = vsel %vm128, %v1515, 0
    %1536 = vmatpush.msra.mxu0 0.0
    %1537 = vmatpush.msra.mxu0 0.0
    %1538 = vmatpush.msra.mxu0 0.0
    %1539 = vmatpush.msra.mxu0 0.0
    %1540 = vmatpush.msra.mxu0 0.0
    %1541 = vmatpush.msra.mxu0 0.0
    %1542 = vmatpush.msra.mxu0 0.0
    %1543 = vmatpush.msra.mxu0 0.0
    %1544 = vmatpush.msra.mxu0 0.0
    %1545 = vmatpush.msra.mxu0 0.0
    %1546 = vmatpush.msra.mxu0 0.0
    %1547 = vmatpush.msra.mxu0 0.0
    %1548 = vmatpush.msra.mxu0 0.0
    %1549 = vmatpush.msra.mxu0 0.0
    %1550 = vmatpush.msra.mxu0 0.0
    %1551 = vmatpush.msra.mxu0 %v1517
    %1552 = vmatmul.f32.gmra.mxu0 %v1519
    %v1553 = vpop.f32.mrf.mxu0
    %v1554 = vadd.f32 0.0, %v1553
    %1555 = vmatmul.f32.gmra.mxu0 %v1522
    %v1556 = vpop.f32.mrf.mxu0
    %v1557 = vadd.f32 0.0, %v1556
    %1558 = vmatmul.f32.gmra.mxu0 %v1525
    %v1559 = vpop.f32.mrf.mxu0
    %v1560 = vadd.f32 0.0, %v1559
    %1561 = vmatmul.f32.gmra.mxu0 %v1528
    %v1562 = vpop.f32.mrf.mxu0
    %v1563 = vadd.f32 0.0, %v1562
    %1564 = vmatmul.f32.gmra.mxu0 %v1531
    %v1565 = vpop.f32.mrf.mxu0
    %v1566 = vadd.f32 0.0, %v1565
    %1567 = vmatmul.f32.gmra.mxu0 %v1534
    %v1568 = vpop.f32.mrf.mxu0
    %v1569 = vadd.f32 0.0, %v1568
    %1570 = vdwg.mxu0
    %v1571 = vadd.f32 %v1214, %v1554
    %v1572 = vadd.f32 %v1217, %v1557
    %v1573 = vadd.f32 %v1220, %v1560
    %v1574 = vadd.f32 %v1223, %v1563
    %v1575 = vadd.f32 %v1226, %v1566
    %v1576 = vadd.f32 %v1229, %v1569
    %1577 = vrot.lane.b32.xlu0 %v446, 104
    %v1578 = vpop.permute.xlu0 %1577
    %1579 = vrot.lane.b32.xlu0 %v449, 104
    %v1580 = vpop.permute.xlu0 %1579
    %1581 = vrot.lane.b32.xlu0 %v452, 104
    %v1582 = vpop.permute.xlu0 %1581
    %1583 = vrot.lane.b32.xlu0 %v455, 104
    %v1584 = vpop.permute.xlu0 %1583
    %1585 = vrot.lane.b32.xlu0 %v458, 104
    %v1586 = vpop.permute.xlu0 %1585
    %1587 = vrot.lane.b32.xlu0 %v461, 104
    %v1588 = vpop.permute.xlu0 %1587
    %v1589 = vsel %vm128, %v1578, 0
    %v1591 = vsel %vm128, %v1580, 0
    %v1593 = vsel %vm128, %v1582, 0
    %v1595 = vsel %vm128, %v1584, 0
    %v1597 = vsel %vm128, %v1586, 0
    %v1599 = vsel %vm128, %v1588, 0
    %1601 = vmatpush.msra.mxu0 0.0
    %1602 = vmatpush.msra.mxu0 0.0
    %1603 = vmatpush.msra.mxu0 0.0
    %1604 = vmatpush.msra.mxu0 0.0
    %1605 = vmatpush.msra.mxu0 0.0
    %1606 = vmatpush.msra.mxu0 0.0
    %1607 = vmatpush.msra.mxu0 0.0
    %1608 = vmatpush.msra.mxu0 0.0
    %1609 = vmatpush.msra.mxu0 0.0
    %1610 = vmatpush.msra.mxu0 0.0
    %1611 = vmatpush.msra.mxu0 0.0
    %1612 = vmatpush.msra.mxu0 0.0
    %1613 = vmatpush.msra.mxu0 0.0
    %1614 = vmatpush.msra.mxu0 0.0
    %1615 = vmatpush.msra.mxu0 0.0
    %1616 = vmatpush.msra.mxu0 %v526
    %1617 = vmatmul.f32.gmra.mxu0 %v1589
    %v1618 = vpop.f32.mrf.mxu0
    %v1619 = vadd.f32 0.0, %v1618
    %1620 = vmatmul.f32.gmra.mxu0 %v1591
    %v1621 = vpop.f32.mrf.mxu0
    %v1622 = vadd.f32 0.0, %v1621
    %1623 = vmatmul.f32.gmra.mxu0 %v1593
    %v1624 = vpop.f32.mrf.mxu0
    %v1625 = vadd.f32 0.0, %v1624
    %1626 = vmatmul.f32.gmra.mxu0 %v1595
    %v1627 = vpop.f32.mrf.mxu0
    %v1628 = vadd.f32 0.0, %v1627
    %1629 = vmatmul.f32.gmra.mxu0 %v1597
    %v1630 = vpop.f32.mrf.mxu0
    %v1631 = vadd.f32 0.0, %v1630
    %1632 = vmatmul.f32.gmra.mxu0 %v1599
    %v1633 = vpop.f32.mrf.mxu0
    %v1634 = vadd.f32 0.0, %v1633
    %1635 = vdwg.mxu0
    %v1636 = vmul.f32 %v1619, 0.35355338
    %v1637 = vmul.f32 %v1622, 0.35355338
    %v1638 = vmul.f32 %v1625, 0.35355338
    %v1639 = vmul.f32 %v1628, 0.35355338
    %v1640 = vmul.f32 %v1631, 0.35355338
    %v1641 = vmul.f32 %v1634, 0.35355338
    %v1642 = vadd.f32 %v1636, %v385
    %v1643 = vadd.f32 %v1637, %v386
    %v1644 = vadd.f32 %v1638, %v387
    %v1645 = vadd.f32 %v1639, %v388
    %v1646 = vadd.f32 %v1640, %v389
    %v1647 = vadd.f32 %v1641, %v390
    %v1648 = vsel %vm633, %v1642, -inf
    %1649 = vmax.xlane.f32.xlu0 %v1648
    %v1650 = vpop.xlane.xlu0 %1649
    %v1651 = vsel %vm633, %v1643, -inf
    %1652 = vmax.xlane.f32.xlu0 %v1651
    %v1653 = vpop.xlane.xlu0 %1652
    %v1654 = vsel %vm633, %v1644, -inf
    %1655 = vmax.xlane.f32.xlu0 %v1654
    %v1656 = vpop.xlane.xlu0 %1655
    %v1657 = vsel %vm633, %v1645, -inf
    %1658 = vmax.xlane.f32.xlu0 %v1657
    %v1659 = vpop.xlane.xlu0 %1658
    %v1660 = vsel %vm633, %v1646, -inf
    %1661 = vmax.xlane.f32.xlu0 %v1660
    %v1662 = vpop.xlane.xlu0 %1661
    %v1663 = vsel %vm633, %v1647, -inf
    %1664 = vmax.xlane.f32.xlu0 %v1663
    %v1665 = vpop.xlane.xlu0 %1664
    %v1666 = vsub.f32 %v1642, %v1650
    %v1667 = vsub.f32 %v1643, %v1653
    %v1668 = vsub.f32 %v1644, %v1656
    %v1669 = vsub.f32 %v1645, %v1659
    %v1670 = vsub.f32 %v1646, %v1662
    %v1671 = vsub.f32 %v1647, %v1665
    %v1672 = vmul.f32 %v1666, 1.442695
    %v1673 = vpow.pop %v1672
    %v1674 = vmul.f32 %v1667, 1.442695
    %v1675 = vpow.pop %v1674
    %v1676 = vmul.f32 %v1668, 1.442695
    %v1677 = vpow.pop %v1676
    %v1678 = vmul.f32 %v1669, 1.442695
    %v1679 = vpow.pop %v1678
    %v1680 = vmul.f32 %v1670, 1.442695
    %v1681 = vpow.pop %v1680
    %v1682 = vmul.f32 %v1671, 1.442695
    %v1683 = vpow.pop %v1682
    %v1684 = vsel %vm633, %v1673, 0.0
    %1685 = vadd.xlane.f32.xlu0 %v1684
    %v1686 = vpop.xlane.xlu0 %1685
    %v1687 = vsel %vm633, %v1675, 0.0
    %1688 = vadd.xlane.f32.xlu0 %v1687
    %v1689 = vpop.xlane.xlu0 %1688
    %v1690 = vsel %vm633, %v1677, 0.0
    %1691 = vadd.xlane.f32.xlu0 %v1690
    %v1692 = vpop.xlane.xlu0 %1691
    %v1693 = vsel %vm633, %v1679, 0.0
    %1694 = vadd.xlane.f32.xlu0 %v1693
    %v1695 = vpop.xlane.xlu0 %1694
    %v1696 = vsel %vm633, %v1681, 0.0
    %1697 = vadd.xlane.f32.xlu0 %v1696
    %v1698 = vpop.xlane.xlu0 %1697
    %v1699 = vsel %vm633, %v1683, 0.0
    %1700 = vadd.xlane.f32.xlu0 %v1699
    %v1701 = vpop.xlane.xlu0 %1700
    %v1702 = vrcp.pop %v1686
    %v1703 = vmul.f32 %v1686, %v1702
    %v1704 = vsub.f32 1.0, %v1703
    %v1705 = vmul.f32 %v1702, %v1704
    %v1706 = vadd.f32 %v1702, %v1705
    %vm1707 = vweird.f32 %v1686
    %vm1708 = vweird.f32 %v1702
    %vm1709 = vmor %vm1707, %vm1708
    %v1710 = vsel %vm1709, %v1702, %v1706
    %v1711 = vand.u32 2147483647, %v1686
    %vm1712 = vcmp.eq.f32.partialorder %v1711, 8.507059e+37
    %v1713 = vand.u32 %v1686, 2147483648
    %v1714 = vor.u32 1.1754944e-38, %v1713
    %v1715 = vsel %vm1712, %v1714, %v1710
    %v1716 = vmul.f32 %v1673, %v1715
    %v1717 = vrcp.pop %v1689
    %v1718 = vmul.f32 %v1689, %v1717
    %v1719 = vsub.f32 1.0, %v1718
    %v1720 = vmul.f32 %v1717, %v1719
    %v1721 = vadd.f32 %v1717, %v1720
    %vm1722 = vweird.f32 %v1689
    %vm1723 = vweird.f32 %v1717
    %vm1724 = vmor %vm1722, %vm1723
    %v1725 = vsel %vm1724, %v1717, %v1721
    %v1726 = vand.u32 2147483647, %v1689
    %vm1727 = vcmp.eq.f32.partialorder %v1726, 8.507059e+37
    %v1728 = vand.u32 %v1689, 2147483648
    %v1729 = vor.u32 1.1754944e-38, %v1728
    %v1730 = vsel %vm1727, %v1729, %v1725
    %v1731 = vmul.f32 %v1675, %v1730
    %v1732 = vrcp.pop %v1692
    %v1733 = vmul.f32 %v1692, %v1732
    %v1734 = vsub.f32 1.0, %v1733
    %v1735 = vmul.f32 %v1732, %v1734
    %v1736 = vadd.f32 %v1732, %v1735
    %vm1737 = vweird.f32 %v1692
    %vm1738 = vweird.f32 %v1732
    %vm1739 = vmor %vm1737, %vm1738
    %v1740 = vsel %vm1739, %v1732, %v1736
    %v1741 = vand.u32 2147483647, %v1692
    %vm1742 = vcmp.eq.f32.partialorder %v1741, 8.507059e+37
    %v1743 = vand.u32 %v1692, 2147483648
    %v1744 = vor.u32 1.1754944e-38, %v1743
    %v1745 = vsel %vm1742, %v1744, %v1740
    %v1746 = vmul.f32 %v1677, %v1745
    %v1747 = vrcp.pop %v1695
    %v1748 = vmul.f32 %v1695, %v1747
    %v1749 = vsub.f32 1.0, %v1748
    %v1750 = vmul.f32 %v1747, %v1749
    %v1751 = vadd.f32 %v1747, %v1750
    %vm1752 = vweird.f32 %v1695
    %vm1753 = vweird.f32 %v1747
    %vm1754 = vmor %vm1752, %vm1753
    %v1755 = vsel %vm1754, %v1747, %v1751
    %v1756 = vand.u32 2147483647, %v1695
    %vm1757 = vcmp.eq.f32.partialorder %v1756, 8.507059e+37
    %v1758 = vand.u32 %v1695, 2147483648
    %v1759 = vor.u32 1.1754944e-38, %v1758
    %v1760 = vsel %vm1757, %v1759, %v1755
    %v1761 = vmul.f32 %v1679, %v1760
    %v1762 = vrcp.pop %v1698
    %v1763 = vmul.f32 %v1698, %v1762
    %v1764 = vsub.f32 1.0, %v1763
    %v1765 = vmul.f32 %v1762, %v1764
    %v1766 = vadd.f32 %v1762, %v1765
    %vm1767 = vweird.f32 %v1698
    %vm1768 = vweird.f32 %v1762
    %vm1769 = vmor %vm1767, %vm1768
    %v1770 = vsel %vm1769, %v1762, %v1766
    %v1771 = vand.u32 2147483647, %v1698
    %vm1772 = vcmp.eq.f32.partialorder %v1771, 8.507059e+37
    %v1773 = vand.u32 %v1698, 2147483648
    %v1774 = vor.u32 1.1754944e-38, %v1773
    %v1775 = vsel %vm1772, %v1774, %v1770
    %v1776 = vmul.f32 %v1681, %v1775
    %v1777 = vrcp.pop %v1701
    %v1778 = vmul.f32 %v1701, %v1777
    %v1779 = vsub.f32 1.0, %v1778
    %v1780 = vmul.f32 %v1777, %v1779
    %v1781 = vadd.f32 %v1777, %v1780
    %vm1782 = vweird.f32 %v1701
    %vm1783 = vweird.f32 %v1777
    %vm1784 = vmor %vm1782, %vm1783
    %v1785 = vsel %vm1784, %v1777, %v1781
    %v1786 = vand.u32 2147483647, %v1701
    %vm1787 = vcmp.eq.f32.partialorder %v1786, 8.507059e+37
    %v1788 = vand.u32 %v1701, 2147483648
    %v1789 = vor.u32 1.1754944e-38, %v1788
    %v1790 = vsel %vm1787, %v1789, %v1785
    %v1791 = vmul.f32 %v1683, %v1790
    %1792 = vrot.lane.b32.xlu0 %v551, 104
    %v1793 = vpop.permute.xlu0 %1792
    %1794 = vrot.lane.b32.xlu0 %v554, 104
    %v1795 = vpop.permute.xlu0 %1794
    %1796 = vrot.lane.b32.xlu0 %v557, 104
    %v1797 = vpop.permute.xlu0 %1796
    %1798 = vrot.lane.b32.xlu0 %v560, 104
    %v1799 = vpop.permute.xlu0 %1798
    %1800 = vrot.lane.b32.xlu0 %v563, 104
    %v1801 = vpop.permute.xlu0 %1800
    %1802 = vrot.lane.b32.xlu0 %v566, 104
    %v1803 = vpop.permute.xlu0 %1802
    %v1811 = vsel %vm633, %v1716, 0
    %v1814 = vsel %vm633, %v1731, 0
    %v1817 = vsel %vm633, %v1746, 0
    %v1820 = vsel %vm633, %v1761, 0
    %v1823 = vsel %vm633, %v1776, 0
    %v1826 = vsel %vm633, %v1791, 0
    %1828 = vmatpush.msra.mxu0 0.0
    %1829 = vmatpush.msra.mxu0 0.0
    %1830 = vmatpush.msra.mxu0 0.0
    %1831 = vmatpush.msra.mxu0 0.0
    %1832 = vmatpush.msra.mxu0 0.0
    %1833 = vmatpush.msra.mxu0 0.0
    %1834 = vmatpush.msra.mxu0 0.0
    %1835 = vmatpush.msra.mxu0 0.0
    %1836 = vmatpush.msra.mxu0 0.0
    %1837 = vmatpush.msra.mxu0 0.0
    %1838 = vmatpush.msra.mxu0 %v1803
    %1839 = vmatpush.msra.mxu0 %v1801
    %1840 = vmatpush.msra.mxu0 %v1799
    %1841 = vmatpush.msra.mxu0 %v1797
    %1842 = vmatpush.msra.mxu0 %v1795
    %1843 = vmatpush.msra.mxu0 %v1793
    %1844 = vmatmul.f32.gmra.mxu0 %v1811
    %v1845 = vpop.f32.mrf.mxu0
    %v1846 = vadd.f32 0.0, %v1845
    %1847 = vmatmul.f32.gmra.mxu0 %v1814
    %v1848 = vpop.f32.mrf.mxu0
    %v1849 = vadd.f32 0.0, %v1848
    %1850 = vmatmul.f32.gmra.mxu0 %v1817
    %v1851 = vpop.f32.mrf.mxu0
    %v1852 = vadd.f32 0.0, %v1851
    %1853 = vmatmul.f32.gmra.mxu0 %v1820
    %v1854 = vpop.f32.mrf.mxu0
    %v1855 = vadd.f32 0.0, %v1854
    %1856 = vmatmul.f32.gmra.mxu0 %v1823
    %v1857 = vpop.f32.mrf.mxu0
    %v1858 = vadd.f32 0.0, %v1857
    %1859 = vmatmul.f32.gmra.mxu0 %v1826
    %v1860 = vpop.f32.mrf.mxu0
    %v1861 = vadd.f32 0.0, %v1860
    %1862 = vdwg.mxu0
    %v1863 = vld [vmem:[#allocation2 + $0x168] sm:$0xff]
    %v1865 = vsel %vm128, %v1846, 0
    %v1868 = vsel %vm128, %v1849, 0
    %v1871 = vsel %vm128, %v1852, 0
    %v1874 = vsel %vm128, %v1855, 0
    %v1877 = vsel %vm128, %v1858, 0
    %v1880 = vsel %vm128, %v1861, 0
    %1882 = vmatpush.msra.mxu0 0.0
    %1883 = vmatpush.msra.mxu0 0.0
    %1884 = vmatpush.msra.mxu0 0.0
    %1885 = vmatpush.msra.mxu0 0.0
    %1886 = vmatpush.msra.mxu0 0.0
    %1887 = vmatpush.msra.mxu0 0.0
    %1888 = vmatpush.msra.mxu0 0.0
    %1889 = vmatpush.msra.mxu0 0.0
    %1890 = vmatpush.msra.mxu0 0.0
    %1891 = vmatpush.msra.mxu0 0.0
    %1892 = vmatpush.msra.mxu0 0.0
    %1893 = vmatpush.msra.mxu0 0.0
    %1894 = vmatpush.msra.mxu0 0.0
    %1895 = vmatpush.msra.mxu0 0.0
    %1896 = vmatpush.msra.mxu0 0.0
    %1897 = vmatpush.msra.mxu0 %v1863
    %1898 = vmatmul.f32.gmra.mxu0 %v1865
    %v1899 = vpop.f32.mrf.mxu0
    %v1900 = vadd.f32 0.0, %v1899
    %1901 = vmatmul.f32.gmra.mxu0 %v1868
    %v1902 = vpop.f32.mrf.mxu0
    %v1903 = vadd.f32 0.0, %v1902
    %1904 = vmatmul.f32.gmra.mxu0 %v1871
    %v1905 = vpop.f32.mrf.mxu0
    %v1906 = vadd.f32 0.0, %v1905
    %1907 = vmatmul.f32.gmra.mxu0 %v1874
    %v1908 = vpop.f32.mrf.mxu0
    %v1909 = vadd.f32 0.0, %v1908
    %1910 = vmatmul.f32.gmra.mxu0 %v1877
    %v1911 = vpop.f32.mrf.mxu0
    %v1912 = vadd.f32 0.0, %v1911
    %1913 = vmatmul.f32.gmra.mxu0 %v1880
    %v1914 = vpop.f32.mrf.mxu0
    %v1915 = vadd.f32 0.0, %v1914
    %1916 = vdwg.mxu0
    %v1917 = vadd.f32 %v1571, %v1900
    %v1918 = vadd.f32 %v1572, %v1903
    %v1919 = vadd.f32 %v1573, %v1906
    %v1920 = vadd.f32 %v1574, %v1909
    %v1921 = vadd.f32 %v1575, %v1912
    %v1922 = vadd.f32 %v1576, %v1915
    %v1923 = vperm.slane %v394, 0
    %v1924 = vadd.f32 %v1917, %v1923
    %v1925 = vadd.f32 %v1918, %v1923
    %v1926 = vadd.f32 %v1919, %v1923
    %v1927 = vadd.f32 %v1920, %v1923
    %v1928 = vadd.f32 %v1921, %v1923
    %v1929 = vadd.f32 %v1922, %v1923
    %v1930 = vadd.f32 %v1924, %v379
    %v1931 = vadd.f32 %v1925, %v380
    %v1932 = vadd.f32 %v1926, %v381
    %v1933 = vadd.f32 %v1927, %v382
    %v1934 = vadd.f32 %v1928, %v383
    %v1935 = vadd.f32 %v1929, %v384
    %v1936 = vsel %vm231, %v1930, 0.0
    %1937 = vadd.xlane.f32.xlu0 %v1936
    %v1938 = vpop.xlane.xlu0 %1937
    %v1939 = vsel %vm231, %v1931, 0.0
    %1940 = vadd.xlane.f32.xlu0 %v1939
    %v1941 = vpop.xlane.xlu0 %1940
    %v1942 = vsel %vm231, %v1932, 0.0
    %1943 = vadd.xlane.f32.xlu0 %v1942
    %v1944 = vpop.xlane.xlu0 %1943
    %v1945 = vsel %vm231, %v1933, 0.0
    %1946 = vadd.xlane.f32.xlu0 %v1945
    %v1947 = vpop.xlane.xlu0 %1946
    %v1948 = vsel %vm231, %v1934, 0.0
    %1949 = vadd.xlane.f32.xlu0 %v1948
    %v1950 = vpop.xlane.xlu0 %1949
    %v1951 = vsel %vm231, %v1935, 0.0
    %1952 = vadd.xlane.f32.xlu0 %v1951
    %v1953 = vpop.xlane.xlu0 %1952
    %v1954 = vmul.f32 %v1938, %v256
    %v1955 = vmul.f32 %v1941, %v256
    %v1956 = vmul.f32 %v1944, %v256
    %v1957 = vmul.f32 %v1947, %v256
    %v1958 = vmul.f32 %v1950, %v256
    %v1959 = vmul.f32 %v1953, %v256
    %v1960 = vsub.f32 %v1930, %v1954
    %v1961 = vsub.f32 %v1931, %v1955
    %v1962 = vsub.f32 %v1932, %v1956
    %v1963 = vsub.f32 %v1933, %v1957
    %v1964 = vsub.f32 %v1934, %v1958
    %v1965 = vsub.f32 %v1935, %v1959
    %v1966 = vmul.f32 %v1960, %v1960
    %v1967 = vmul.f32 %v1961, %v1961
    %v1968 = vmul.f32 %v1962, %v1962
    %v1969 = vmul.f32 %v1963, %v1963
    %v1970 = vmul.f32 %v1964, %v1964
    %v1971 = vmul.f32 %v1965, %v1965
    %v1972 = vsel %vm231, %v1966, 0.0
    %1973 = vadd.xlane.f32.xlu0 %v1972
    %v1974 = vpop.xlane.xlu0 %1973
    %v1975 = vsel %vm231, %v1967, 0.0
    %1976 = vadd.xlane.f32.xlu0 %v1975
    %v1977 = vpop.xlane.xlu0 %1976
    %v1978 = vsel %vm231, %v1968, 0.0
    %1979 = vadd.xlane.f32.xlu0 %v1978
    %v1980 = vpop.xlane.xlu0 %1979
    %v1981 = vsel %vm231, %v1969, 0.0
    %1982 = vadd.xlane.f32.xlu0 %v1981
    %v1983 = vpop.xlane.xlu0 %1982
    %v1984 = vsel %vm231, %v1970, 0.0
    %1985 = vadd.xlane.f32.xlu0 %v1984
    %v1986 = vpop.xlane.xlu0 %1985
    %v1987 = vsel %vm231, %v1971, 0.0
    %1988 = vadd.xlane.f32.xlu0 %v1987
    %v1989 = vpop.xlane.xlu0 %1988
    %v1990 = vmul.f32 %v1974, %v256
    %v1991 = vmul.f32 %v1977, %v256
    %v1992 = vmul.f32 %v1980, %v256
    %v1993 = vmul.f32 %v1983, %v256
    %v1994 = vmul.f32 %v1986, %v256
    %v1995 = vmul.f32 %v1989, %v256
    %v1996 = vadd.f32 %v1990, 1e-12
    %v1997 = vadd.f32 %v1991, 1e-12
    %v1998 = vadd.f32 %v1992, 1e-12
    %v1999 = vadd.f32 %v1993, 1e-12
    %v2000 = vadd.f32 %v1994, 1e-12
    %v2001 = vadd.f32 %v1995, 1e-12
    %v2002 = vrsqrt.pop %v1996
    %v2003 = vmul.f32 %v2002, %v1996
    %v2004 = vmul.f32 %v2003, %v2002
    %v2005 = vmul.f32 0.5, %v2004
    %v2006 = vsub.f32 1.5, %v2005
    %v2007 = vmul.f32 %v2002, %v2006
    %vm2008 = vweird.f32 %v1996
    %vm2009 = vweird.f32 %v2002
    %vm2010 = vmor %vm2008, %vm2009
    %v2011 = vsel %vm2010, %v2002, %v2007
    %v2012 = vrsqrt.pop %v1997
    %v2013 = vmul.f32 %v2012, %v1997
    %v2014 = vmul.f32 %v2013, %v2012
    %v2015 = vmul.f32 0.5, %v2014
    %v2016 = vsub.f32 1.5, %v2015
    %v2017 = vmul.f32 %v2012, %v2016
    %vm2018 = vweird.f32 %v1997
    %vm2019 = vweird.f32 %v2012
    %vm2020 = vmor %vm2018, %vm2019
    %v2021 = vsel %vm2020, %v2012, %v2017
    %v2022 = vrsqrt.pop %v1998
    %v2023 = vmul.f32 %v2022, %v1998
    %v2024 = vmul.f32 %v2023, %v2022
    %v2025 = vmul.f32 0.5, %v2024
    %v2026 = vsub.f32 1.5, %v2025
    %v2027 = vmul.f32 %v2022, %v2026
    %vm2028 = vweird.f32 %v1998
    %vm2029 = vweird.f32 %v2022
    %vm2030 = vmor %vm2028, %vm2029
    %v2031 = vsel %vm2030, %v2022, %v2027
    %v2032 = vrsqrt.pop %v1999
    %v2033 = vmul.f32 %v2032, %v1999
    %v2034 = vmul.f32 %v2033, %v2032
    %v2035 = vmul.f32 0.5, %v2034
    %v2036 = vsub.f32 1.5, %v2035
    %v2037 = vmul.f32 %v2032, %v2036
    %vm2038 = vweird.f32 %v1999
    %vm2039 = vweird.f32 %v2032
    %vm2040 = vmor %vm2038, %vm2039
    %v2041 = vsel %vm2040, %v2032, %v2037
    %v2042 = vrsqrt.pop %v2000
    %v2043 = vmul.f32 %v2042, %v2000
    %v2044 = vmul.f32 %v2043, %v2042
    %v2045 = vmul.f32 0.5, %v2044
    %v2046 = vsub.f32 1.5, %v2045
    %v2047 = vmul.f32 %v2042, %v2046
    %vm2048 = vweird.f32 %v2000
    %vm2049 = vweird.f32 %v2042
    %vm2050 = vmor %vm2048, %vm2049
    %v2051 = vsel %vm2050, %v2042, %v2047
    %v2052 = vrsqrt.pop %v2001
    %v2053 = vmul.f32 %v2052, %v2001
    %v2054 = vmul.f32 %v2053, %v2052
    %v2055 = vmul.f32 0.5, %v2054
    %v2056 = vsub.f32 1.5, %v2055
    %v2057 = vmul.f32 %v2052, %v2056
    %vm2058 = vweird.f32 %v2001
    %vm2059 = vweird.f32 %v2052
    %vm2060 = vmor %vm2058, %vm2059
    %v2061 = vsel %vm2060, %v2052, %v2057
    %v2062 = vmul.f32 %v1960, %v2011
    %v2063 = vmul.f32 %v1961, %v2021
    %v2064 = vmul.f32 %v1962, %v2031
    %v2065 = vmul.f32 %v1963, %v2041
    %v2066 = vmul.f32 %v1964, %v2051
    %v2067 = vmul.f32 %v1965, %v2061
    %v2068 = vperm.slane %v395, 0
    %v2069 = vmul.f32 %v2062, %v2068
    %v2070 = vmul.f32 %v2063, %v2068
    %v2071 = vmul.f32 %v2064, %v2068
    %v2072 = vmul.f32 %v2065, %v2068
    %v2073 = vmul.f32 %v2066, %v2068
    %v2074 = vmul.f32 %v2067, %v2068
    %v2075 = vperm.slane %v396, 0
    %v2076 = vadd.f32 %v2069, %v2075
    %v2077 = vadd.f32 %v2070, %v2075
    %v2078 = vadd.f32 %v2071, %v2075
    %v2079 = vadd.f32 %v2072, %v2075
    %v2080 = vadd.f32 %v2073, %v2075
    %v2081 = vadd.f32 %v2074, %v2075
    %v2082 = vld [vmem:[#allocation2 + $0x170] sm:$0xff]
    %v2083 = vld [vmem:[#allocation2 + $0x178] sm:$0xff]
    %v2084 = vld [vmem:[#allocation2 + $0x180] sm:$0xff]
    %v2085 = vld [vmem:[#allocation2 + $0x188] sm:$0xff]
    %v2086 = vperm.slane %v399, 0
    %v2088 = vsel %vm231, %v2076, 0
    %v2091 = vsel %vm231, %v2077, 0
    %v2094 = vsel %vm231, %v2078, 0
    %v2097 = vsel %vm231, %v2079, 0
    %v2100 = vsel %vm231, %v2080, 0
    %v2103 = vsel %vm231, %v2081, 0
    %2105 = vmatpush.msra.mxu0 0.0
    %2106 = vmatpush.msra.mxu0 0.0
    %2107 = vmatpush.msra.mxu0 0.0
    %2108 = vmatpush.msra.mxu0 0.0
    %2109 = vmatpush.msra.mxu0 0.0
    %2110 = vmatpush.msra.mxu0 0.0
    %2111 = vmatpush.msra.mxu0 0.0
    %2112 = vmatpush.msra.mxu0 0.0
    %2113 = vmatpush.msra.mxu0 0.0
    %2114 = vmatpush.msra.mxu0 0.0
    %2115 = vmatpush.msra.mxu0 0.0
    %2116 = vmatpush.msra.mxu0 0.0
    %2117 = vmatpush.msra.mxu0 %v2085
    %2118 = vmatpush.msra.mxu0 %v2084
    %2119 = vmatpush.msra.mxu0 %v2083
    %2120 = vmatpush.msra.mxu0 %v2082
    %2121 = vmatmul.f32.gmra.mxu0 %v2088
    %v2122 = vpop.f32.mrf.mxu0
    %v2123 = vadd.f32 %v2086, %v2122
    %2124 = vmatmul.f32.gmra.mxu0 %v2091
    %v2125 = vpop.f32.mrf.mxu0
    %v2126 = vadd.f32 %v2086, %v2125
    %2127 = vmatmul.f32.gmra.mxu0 %v2094
    %v2128 = vpop.f32.mrf.mxu0
    %v2129 = vadd.f32 %v2086, %v2128
    %2130 = vmatmul.f32.gmra.mxu0 %v2097
    %v2131 = vpop.f32.mrf.mxu0
    %v2132 = vadd.f32 %v2086, %v2131
    %2133 = vmatmul.f32.gmra.mxu0 %v2100
    %v2134 = vpop.f32.mrf.mxu0
    %v2135 = vadd.f32 %v2086, %v2134
    %2136 = vmatmul.f32.gmra.mxu0 %v2103
    %v2137 = vpop.f32.mrf.mxu0
    %v2138 = vadd.f32 %v2086, %v2137
    %2139 = vdwg.mxu0
    %v2140 = vmul.f32 %v2123, 0.5
    %v2141 = vmul.f32 %v2126, 0.5
    %v2142 = vmul.f32 %v2129, 0.5
    %v2143 = vmul.f32 %v2132, 0.5
    %v2144 = vmul.f32 %v2135, 0.5
    %v2145 = vmul.f32 %v2138, 0.5
    %v2146 = vmul.f32 %v2123, 0.044715
    %v2147 = vmul.f32 %v2126, 0.044715
    %v2148 = vmul.f32 %v2129, 0.044715
    %v2149 = vmul.f32 %v2132, 0.044715
    %v2150 = vmul.f32 %v2135, 0.044715
    %v2151 = vmul.f32 %v2138, 0.044715
    %v2152 = vmul.f32 %v2146, %v2123
    %v2153 = vmul.f32 %v2147, %v2126
    %v2154 = vmul.f32 %v2148, %v2129
    %v2155 = vmul.f32 %v2149, %v2132
    %v2156 = vmul.f32 %v2150, %v2135
    %v2157 = vmul.f32 %v2151, %v2138
    %v2158 = vmul.f32 %v2152, %v2123
    %v2159 = vmul.f32 %v2153, %v2126
    %v2160 = vmul.f32 %v2154, %v2129
    %v2161 = vmul.f32 %v2155, %v2132
    %v2162 = vmul.f32 %v2156, %v2135
    %v2163 = vmul.f32 %v2157, %v2138
    %v2164 = vadd.f32 %v2123, %v2158
    %v2165 = vadd.f32 %v2126, %v2159
    %v2166 = vadd.f32 %v2129, %v2160
    %v2167 = vadd.f32 %v2132, %v2161
    %v2168 = vadd.f32 %v2135, %v2162
    %v2169 = vadd.f32 %v2138, %v2163
    %v2170 = vmul.f32 %v2164, 0.7978846
    %v2171 = vmul.f32 %v2165, 0.7978846
    %v2172 = vmul.f32 %v2166, 0.7978846
    %v2173 = vmul.f32 %v2167, 0.7978846
    %v2174 = vmul.f32 %v2168, 0.7978846
    %v2175 = vmul.f32 %v2169, 0.7978846
    %v2176 = vtanh.pop %v2170
    %v2177 = vtanh.pop %v2171
    %v2178 = vtanh.pop %v2172
    %v2179 = vtanh.pop %v2173
    %v2180 = vtanh.pop %v2174
    %v2181 = vtanh.pop %v2175
    %v2182 = vadd.f32 %v2176, 1.0
    %v2183 = vadd.f32 %v2177, 1.0
    %v2184 = vadd.f32 %v2178, 1.0
    %v2185 = vadd.f32 %v2179, 1.0
    %v2186 = vadd.f32 %v2180, 1.0
    %v2187 = vadd.f32 %v2181, 1.0
    %v2188 = vmul.f32 %v2140, %v2182
    %v2189 = vmul.f32 %v2141, %v2183
    %v2190 = vmul.f32 %v2142, %v2184
    %v2191 = vmul.f32 %v2143, %v2185
    %v2192 = vmul.f32 %v2144, %v2186
    %v2193 = vmul.f32 %v2145, %v2187
    %v2194 = vld [vmem:[#allocation2 + $0x190] sm:$0xff]
    %v2195 = vld [vmem:[#allocation2 + $0x198] sm:$0xff]
    %v2196 = vld [vmem:[#allocation2 + $0x1a0] sm:$0xff]
    %v2197 = vld [vmem:[#allocation2 + $0x1a8] sm:$0xff]
    %v2198 = vld [vmem:[#allocation2 + $0x1b0] sm:$0xff]
    %v2199 = vld [vmem:[#allocation2 + $0x1b8] sm:$0xff]
    %v2200 = vld [vmem:[#allocation2 + $0x1c0] sm:$0xff]
    %v2201 = vld [vmem:[#allocation2 + $0x1c8] sm:$0xff]
    %v2202 = vperm.slane %v400, 0
    %vm2203 = vcmask 523264
    %v2205 = vsel %vm2203, %v2188, 0
    %v2208 = vsel %vm2203, %v2189, 0
    %v2211 = vsel %vm2203, %v2190, 0
    %v2214 = vsel %vm2203, %v2191, 0
    %v2217 = vsel %vm2203, %v2192, 0
    %v2220 = vsel %vm2203, %v2193, 0
    %2222 = vmatpush.msra.mxu0 0.0
    %2223 = vmatpush.msra.mxu0 0.0
    %2224 = vmatpush.msra.mxu0 0.0
    %2225 = vmatpush.msra.mxu0 0.0
    %2226 = vmatpush.msra.mxu0 0.0
    %2227 = vmatpush.msra.mxu0 0.0
    %2228 = vmatpush.msra.mxu0 0.0
    %2229 = vmatpush.msra.mxu0 0.0
    %2230 = vmatpush.msra.mxu0 %v2201
    %2231 = vmatpush.msra.mxu0 %v2200
    %2232 = vmatpush.msra.mxu0 %v2199
    %2233 = vmatpush.msra.mxu0 %v2198
    %2234 = vmatpush.msra.mxu0 %v2197
    %2235 = vmatpush.msra.mxu0 %v2196
    %2236 = vmatpush.msra.mxu0 %v2195
    %2237 = vmatpush.msra.mxu0 %v2194
    %2238 = vmatmul.f32.gmra.mxu0 %v2205
    %v2239 = vpop.f32.mrf.mxu0
    %v2240 = vadd.f32 %v2202, %v2239
    %2241 = vmatmul.f32.gmra.mxu0 %v2208
    %v2242 = vpop.f32.mrf.mxu0
    %v2243 = vadd.f32 %v2202, %v2242
    %2244 = vmatmul.f32.gmra.mxu0 %v2211
    %v2245 = vpop.f32.mrf.mxu0
    %v2246 = vadd.f32 %v2202, %v2245
    %2247 = vmatmul.f32.gmra.mxu0 %v2214
    %v2248 = vpop.f32.mrf.mxu0
    %v2249 = vadd.f32 %v2202, %v2248
    %2250 = vmatmul.f32.gmra.mxu0 %v2217
    %v2251 = vpop.f32.mrf.mxu0
    %v2252 = vadd.f32 %v2202, %v2251
    %2253 = vmatmul.f32.gmra.mxu0 %v2220
    %v2254 = vpop.f32.mrf.mxu0
    %v2255 = vadd.f32 %v2202, %v2254
    %2256 = vdwg.mxu0
    %v2257 = vadd.f32 %v2240, %v2076
    %v2258 = vadd.f32 %v2243, %v2077
    %v2259 = vadd.f32 %v2246, %v2078
    %v2260 = vadd.f32 %v2249, %v2079
    %v2261 = vadd.f32 %v2252, %v2080
    %v2262 = vadd.f32 %v2255, %v2081
    %v2263 = vsel %vm231, %v2257, 0.0
    %2264 = vadd.xlane.f32.xlu0 %v2263
    %v2265 = vpop.xlane.xlu0 %2264
    %v2266 = vsel %vm231, %v2258, 0.0
    %2267 = vadd.xlane.f32.xlu0 %v2266
    %v2268 = vpop.xlane.xlu0 %2267
    %v2269 = vsel %vm231, %v2259, 0.0
    %2270 = vadd.xlane.f32.xlu0 %v2269
    %v2271 = vpop.xlane.xlu0 %2270
    %v2272 = vsel %vm231, %v2260, 0.0
    %2273 = vadd.xlane.f32.xlu0 %v2272
    %v2274 = vpop.xlane.xlu0 %2273
    %v2275 = vsel %vm231, %v2261, 0.0
    %2276 = vadd.xlane.f32.xlu0 %v2275
    %v2277 = vpop.xlane.xlu0 %2276
    %v2278 = vsel %vm231, %v2262, 0.0
    %2279 = vadd.xlane.f32.xlu0 %v2278
    %v2280 = vpop.xlane.xlu0 %2279
    %v2281 = vmul.f32 %v2265, %v256
    %v2282 = vmul.f32 %v2268, %v256
    %v2283 = vmul.f32 %v2271, %v256
    %v2284 = vmul.f32 %v2274, %v256
    %v2285 = vmul.f32 %v2277, %v256
    %v2286 = vmul.f32 %v2280, %v256
    %v2287 = vsub.f32 %v2257, %v2281
    %v2288 = vsub.f32 %v2258, %v2282
    %v2289 = vsub.f32 %v2259, %v2283
    %v2290 = vsub.f32 %v2260, %v2284
    %v2291 = vsub.f32 %v2261, %v2285
    %v2292 = vsub.f32 %v2262, %v2286
    %v2293 = vmul.f32 %v2287, %v2287
    %v2294 = vmul.f32 %v2288, %v2288
    %v2295 = vmul.f32 %v2289, %v2289
    %v2296 = vmul.f32 %v2290, %v2290
    %v2297 = vmul.f32 %v2291, %v2291
    %v2298 = vmul.f32 %v2292, %v2292
    %v2299 = vsel %vm231, %v2293, 0.0
    %2300 = vadd.xlane.f32.xlu0 %v2299
    %v2301 = vpop.xlane.xlu0 %2300
    %v2302 = vsel %vm231, %v2294, 0.0
    %2303 = vadd.xlane.f32.xlu0 %v2302
    %v2304 = vpop.xlane.xlu0 %2303
    %v2305 = vsel %vm231, %v2295, 0.0
    %2306 = vadd.xlane.f32.xlu0 %v2305
    %v2307 = vpop.xlane.xlu0 %2306
    %v2308 = vsel %vm231, %v2296, 0.0
    %2309 = vadd.xlane.f32.xlu0 %v2308
    %v2310 = vpop.xlane.xlu0 %2309
    %v2311 = vsel %vm231, %v2297, 0.0
    %2312 = vadd.xlane.f32.xlu0 %v2311
    %v2313 = vpop.xlane.xlu0 %2312
    %v2314 = vsel %vm231, %v2298, 0.0
    %2315 = vadd.xlane.f32.xlu0 %v2314
    %v2316 = vpop.xlane.xlu0 %2315
    %v2317 = vmul.f32 %v2301, %v256
    %v2318 = vmul.f32 %v2304, %v256
    %v2319 = vmul.f32 %v2307, %v256
    %v2320 = vmul.f32 %v2310, %v256
    %v2321 = vmul.f32 %v2313, %v256
    %v2322 = vmul.f32 %v2316, %v256
    %v2323 = vadd.f32 %v2317, 1e-12
    %v2324 = vadd.f32 %v2318, 1e-12
    %v2325 = vadd.f32 %v2319, 1e-12
    %v2326 = vadd.f32 %v2320, 1e-12
    %v2327 = vadd.f32 %v2321, 1e-12
    %v2328 = vadd.f32 %v2322, 1e-12
    %v2329 = vrsqrt.pop %v2323
    %v2330 = vmul.f32 %v2329, %v2323
    %v2331 = vmul.f32 %v2330, %v2329
    %v2332 = vmul.f32 0.5, %v2331
    %v2333 = vsub.f32 1.5, %v2332
    %v2334 = vmul.f32 %v2329, %v2333
    %vm2335 = vweird.f32 %v2323
    %vm2336 = vweird.f32 %v2329
    %vm2337 = vmor %vm2335, %vm2336
    %v2338 = vsel %vm2337, %v2329, %v2334
    %v2339 = vrsqrt.pop %v2324
    %v2340 = vmul.f32 %v2339, %v2324
    %v2341 = vmul.f32 %v2340, %v2339
    %v2342 = vmul.f32 0.5, %v2341
    %v2343 = vsub.f32 1.5, %v2342
    %v2344 = vmul.f32 %v2339, %v2343
    %vm2345 = vweird.f32 %v2324
    %vm2346 = vweird.f32 %v2339
    %vm2347 = vmor %vm2345, %vm2346
    %v2348 = vsel %vm2347, %v2339, %v2344
    %v2349 = vrsqrt.pop %v2325
    %v2350 = vmul.f32 %v2349, %v2325
    %v2351 = vmul.f32 %v2350, %v2349
    %v2352 = vmul.f32 0.5, %v2351
    %v2353 = vsub.f32 1.5, %v2352
    %v2354 = vmul.f32 %v2349, %v2353
    %vm2355 = vweird.f32 %v2325
    %vm2356 = vweird.f32 %v2349
    %vm2357 = vmor %vm2355, %vm2356
    %v2358 = vsel %vm2357, %v2349, %v2354
    %v2359 = vrsqrt.pop %v2326
    %v2360 = vmul.f32 %v2359, %v2326
    %v2361 = vmul.f32 %v2360, %v2359
    %v2362 = vmul.f32 0.5, %v2361
    %v2363 = vsub.f32 1.5, %v2362
    %v2364 = vmul.f32 %v2359, %v2363
    %vm2365 = vweird.f32 %v2326
    %vm2366 = vweird.f32 %v2359
    %vm2367 = vmor %vm2365, %vm2366
    %v2368 = vsel %vm2367, %v2359, %v2364
    %v2369 = vrsqrt.pop %v2327
    %v2370 = vmul.f32 %v2369, %v2327
    %v2371 = vmul.f32 %v2370, %v2369
    %v2372 = vmul.f32 0.5, %v2371
    %v2373 = vsub.f32 1.5, %v2372
    %v2374 = vmul.f32 %v2369, %v2373
    %vm2375 = vweird.f32 %v2327
    %vm2376 = vweird.f32 %v2369
    %vm2377 = vmor %vm2375, %vm2376
    %v2378 = vsel %vm2377, %v2369, %v2374
    %v2379 = vrsqrt.pop %v2328
    %v2380 = vmul.f32 %v2379, %v2328
    %v2381 = vmul.f32 %v2380, %v2379
    %v2382 = vmul.f32 0.5, %v2381
    %v2383 = vsub.f32 1.5, %v2382
    %v2384 = vmul.f32 %v2379, %v2383
    %vm2385 = vweird.f32 %v2328
    %vm2386 = vweird.f32 %v2379
    %vm2387 = vmor %vm2385, %vm2386
    %v2388 = vsel %vm2387, %v2379, %v2384
    %v2389 = vmul.f32 %v2287, %v2338
    %v2390 = vmul.f32 %v2288, %v2348
    %v2391 = vmul.f32 %v2289, %v2358
    %v2392 = vmul.f32 %v2290, %v2368
    %v2393 = vmul.f32 %v2291, %v2378
    %v2394 = vmul.f32 %v2292, %v2388
    %v2395 = vperm.slane %v397, 0
    %v2396 = vmul.f32 %v2389, %v2395
    %v2397 = vmul.f32 %v2390, %v2395
    %v2398 = vmul.f32 %v2391, %v2395
    %v2399 = vmul.f32 %v2392, %v2395
    %v2400 = vmul.f32 %v2393, %v2395
    %v2401 = vmul.f32 %v2394, %v2395
    %v2402 = vperm.slane %v398, 0
    %v2403 = vadd.f32 %v2396, %v2402
    %v2404 = vadd.f32 %v2397, %v2402
    %v2405 = vadd.f32 %v2398, %v2402
    %v2406 = vadd.f32 %v2399, %v2402
    %v2407 = vadd.f32 %v2400, %v2402
    %v2408 = vadd.f32 %v2401, %v2402
    %v2409 = vld [vmem:[#allocation2 + $0xb8] sm:$0xff]
    %v2411 = vsel %vm633, %v2409, 0
    %2413 = vmatpush.msra.mxu0 0.0
    %2414 = vmatpush.msra.mxu0 0.0
    %2415 = vmatpush.msra.mxu0 0.0
    %2416 = vmatpush.msra.mxu0 0.0
    %2417 = vmatpush.msra.mxu0 0.0
    %2418 = vmatpush.msra.mxu0 0.0
    %2419 = vmatpush.msra.mxu0 0.0
    %2420 = vmatpush.msra.mxu0 0.0
    %2421 = vmatpush.msra.mxu0 0.0
    %2422 = vmatpush.msra.mxu0 0.0
    %2423 = vmatpush.msra.mxu0 %v2408
    %2424 = vmatpush.msra.mxu0 %v2407
    %2425 = vmatpush.msra.mxu0 %v2406
    %2426 = vmatpush.msra.mxu0 %v2405
    %2427 = vmatpush.msra.mxu0 %v2404
    %2428 = vmatpush.msra.mxu0 %v2403
    %2429 = vmatmul.f32.gmra.mxu0 %v2411
    %v2430 = vpop.f32.mrf.mxu0
    %v2431 = vadd.f32 0.0, %v2430
    %2432 = vdwg.mxu0
    %v2433 = vld [vmem:[#allocation2 + $0x300] sm:$0x1]
    %v2434 = vld [vmem:[#allocation2 + $0x301] sm:$0x1]
    %v2435 = vld [vmem:[#allocation2 + $0x302] sm:$0x1]
    %v2436 = vld [vmem:[#allocation2 + $0x303] sm:$0x1]
    %v2437 = vld [vmem:[#allocation2 + $0x304] sm:$0x1]
    %v2438 = vld [vmem:[#allocation2 + $0x305] sm:$0x1]
    %v2439 = vld [vmem:[#allocation2 + $0x306] sm:$0x1]
    %v2440 = vld [vmem:[#allocation2 + $0x307] sm:$0x1]
    %v2441 = vld [vmem:[#allocation2 + $0x308] sm:$0x1]
    %v2442 = vld [vmem:[#allocation2 + $0x2e0] sm:$0xff]
    %v2443 = vld [vmem:[#allocation2 + $0x2e8] sm:$0xff]
    %v2444 = vld [vmem:[#allocation2 + $0x2f0] sm:$0xff]
    %v2445 = vld [vmem:[#allocation2 + $0x2f8] sm:$0xff]
    %v2446 = vld [vmem:[#allocation2 + $0x200] sm:$0xff]
    %v2447 = vld [vmem:[#allocation2 + $0x208] sm:$0xff]
    %v2448 = vld [vmem:[#allocation2 + $0x210] sm:$0xff]
    %v2449 = vld [vmem:[#allocation2 + $0x218] sm:$0xff]
    %v2450 = vperm.slane %v2433, 0
    %v2452 = vsel %vm231, %v2431, 0
    %2454 = vmatpush.msra.mxu0 0.0
    %2455 = vmatpush.msra.mxu0 0.0
    %2456 = vmatpush.msra.mxu0 0.0
    %2457 = vmatpush.msra.mxu0 0.0
    %2458 = vmatpush.msra.mxu0 0.0
    %2459 = vmatpush.msra.mxu0 0.0
    %2460 = vmatpush.msra.mxu0 0.0
    %2461 = vmatpush.msra.mxu0 0.0
    %2462 = vmatpush.msra.mxu0 0.0
    %2463 = vmatpush.msra.mxu0 0.0
    %2464 = vmatpush.msra.mxu0 0.0
    %2465 = vmatpush.msra.mxu0 0.0
    %2466 = vmatpush.msra.mxu0 %v2449
    %2467 = vmatpush.msra.mxu0 %v2448
    %2468 = vmatpush.msra.mxu0 %v2447
    %2469 = vmatpush.msra.mxu0 %v2446
    %2470 = vmatmul.f32.gmra.mxu0 %v2452
    %v2471 = vpop.f32.mrf.mxu0
    %v2472 = vadd.f32 %v2450, %v2471
    %2473 = vdwg.mxu0
    %v2474 = vld [vmem:[#allocation2 + $0x220] sm:$0xff]
    %v2475 = vld [vmem:[#allocation2 + $0x228] sm:$0xff]
    %v2476 = vld [vmem:[#allocation2 + $0x230] sm:$0xff]
    %v2477 = vld [vmem:[#allocation2 + $0x238] sm:$0xff]
    %2479 = vset.pattern.permute.xlu0 0
    %2480 = vperm.xlu0 %2479, %v2442
    %v2481 = vpop.permute.xlu0 %2480
    %2484 = vset.pattern.permute.xlu0 0
    %2485 = vperm.xlu0 %2484, %v2443
    %v2486 = vpop.permute.xlu0 %2485
    %2489 = vset.pattern.permute.xlu0 0
    %2490 = vperm.xlu0 %2489, %v2444
    %v2491 = vpop.permute.xlu0 %2490
    %2494 = vset.pattern.permute.xlu0 0
    %2495 = vperm.xlu0 %2494, %v2445
    %v2496 = vpop.permute.xlu0 %2495
    %v2499 = vsel %vm231, %v2474, 0
    %v2502 = vsel %vm231, %v2475, 0
    %v2505 = vsel %vm231, %v2476, 0
    %v2508 = vsel %vm231, %v2477, 0
    %v2511 = vsel %vm231, %v2403, 0
    %v2514 = vsel %vm231, %v2404, 0
    %v2517 = vsel %vm231, %v2405, 0
    %v2520 = vsel %vm231, %v2406, 0
    %v2523 = vsel %vm231, %v2407, 0
    %v2526 = vsel %vm231, %v2408, 0
    %2528 = vmatpush.xpose.msra.mxu0 0.0
    %2529 = vmatpush.xpose.msra.mxu0 0.0
    %2530 = vmatpush.xpose.msra.mxu0 0.0
    %2531 = vmatpush.xpose.msra.mxu0 0.0
    %2532 = vmatpush.xpose.msra.mxu0 0.0
    %2533 = vmatpush.xpose.msra.mxu0 0.0
    %2534 = vmatpush.xpose.msra.mxu0 0.0
    %2535 = vmatpush.xpose.msra.mxu0 0.0
    %2536 = vmatpush.xpose.msra.mxu0 0.0
    %2537 = vmatpush.xpose.msra.mxu0 0.0
    %2538 = vmatpush.xpose.msra.mxu0 %v2526
    %2539 = vmatpush.xpose.msra.mxu0 %v2523
    %2540 = vmatpush.xpose.msra.mxu0 %v2520
    %2541 = vmatpush.xpose.msra.mxu0 %v2517
    %2542 = vmatpush.xpose.msra.mxu0 %v2514
    %2543 = vmatpush.xpose.msra.mxu0 %v2511
    %2544 = vmatmul.f32.gmra.mxu0 %v2499
    %v2545 = vpop.f32.mrf.mxu0
    %v2546 = vadd.f32 %v2481, %v2545
    %2547 = vmatmul.f32.gmra.mxu0 %v2502
    %v2548 = vpop.f32.mrf.mxu0
    %v2549 = vadd.f32 %v2486, %v2548
    %2550 = vmatmul.f32.gmra.mxu0 %v2505
    %v2551 = vpop.f32.mrf.mxu0
    %v2552 = vadd.f32 %v2491, %v2551
    %2553 = vmatmul.f32.gmra.mxu0 %v2508
    %v2554 = vpop.f32.mrf.mxu0
    %v2555 = vadd.f32 %v2496, %v2554
    %2556 = vdwg.mxu0
    %v2557 = vld [vmem:[#allocation2 + $0x240] sm:$0xff]
    %v2558 = vld [vmem:[#allocation2 + $0x248] sm:$0xff]
    %v2559 = vld [vmem:[#allocation2 + $0x250] sm:$0xff]
    %v2560 = vld [vmem:[#allocation2 + $0x258] sm:$0xff]
    %v2561 = vperm.slane %v2434, 0
    %2562 = vmatpush.msra.mxu0 0.0
    %2563 = vmatpush.msra.mxu0 0.0
    %2564 = vmatpush.msra.mxu0 0.0
    %2565 = vmatpush.msra.mxu0 0.0
    %2566 = vmatpush.msra.mxu0 0.0
    %2567 = vmatpush.msra.mxu0 0.0
    %2568 = vmatpush.msra.mxu0 0.0
    %2569 = vmatpush.msra.mxu0 0.0
    %2570 = vmatpush.msra.mxu0 0.0
    %2571 = vmatpush.msra.mxu0 0.0
    %2572 = vmatpush.msra.mxu0 0.0
    %2573 = vmatpush.msra.mxu0 0.0
    %2574 = vmatpush.msra.mxu0 %v2560
    %2575 = vmatpush.msra.mxu0 %v2559
    %2576 = vmatpush.msra.mxu0 %v2558
    %2577 = vmatpush.msra.mxu0 %v2557
    %2578 = vmatmul.f32.gmra.mxu0 %v2511
    %v2579 = vpop.f32.mrf.mxu0
    %v2580 = vadd.f32 %v2561, %v2579
    %2581 = vmatmul.f32.gmra.mxu0 %v2514
    %v2582 = vpop.f32.mrf.mxu0
    %v2583 = vadd.f32 %v2561, %v2582
    %2584 = vmatmul.f32.gmra.mxu0 %v2517
    %v2585 = vpop.f32.mrf.mxu0
    %v2586 = vadd.f32 %v2561, %v2585
    %2587 = vmatmul.f32.gmra.mxu0 %v2520
    %v2588 = vpop.f32.mrf.mxu0
    %v2589 = vadd.f32 %v2561, %v2588
    %2590 = vmatmul.f32.gmra.mxu0 %v2523
    %v2591 = vpop.f32.mrf.mxu0
    %v2592 = vadd.f32 %v2561, %v2591
    %2593 = vmatmul.f32.gmra.mxu0 %v2526
    %v2594 = vpop.f32.mrf.mxu0
    %v2595 = vadd.f32 %v2561, %v2594
    %2596 = vdwg.mxu0
    %v2598 = vsel %vm128, %v2472, 0
    %2600 = vmatpush.msra.mxu0 0.0
    %2601 = vmatpush.msra.mxu0 0.0
    %2602 = vmatpush.msra.mxu0 0.0
    %2603 = vmatpush.msra.mxu0 0.0
    %2604 = vmatpush.msra.mxu0 0.0
    %2605 = vmatpush.msra.mxu0 0.0
    %2606 = vmatpush.msra.mxu0 0.0
    %2607 = vmatpush.msra.mxu0 0.0
    %2608 = vmatpush.msra.mxu0 0.0
    %2609 = vmatpush.msra.mxu0 0.0
    %2610 = vmatpush.msra.mxu0 0.0
    %2611 = vmatpush.msra.mxu0 0.0
    %2612 = vmatpush.msra.mxu0 0.0
    %2613 = vmatpush.msra.mxu0 0.0
    %2614 = vmatpush.msra.mxu0 0.0
    %2615 = vmatpush.msra.mxu0 %v2546
    %2616 = vmatmul.f32.gmra.mxu0 %v2598
    %v2617 = vpop.f32.mrf.mxu0
    %v2618 = vadd.f32 0.0, %v2617
    %2619 = vdwg.mxu0
    %v2620 = vmul.f32 %v2618, 0.35355338
    %v2621 = vadd.f32 %v2620, %v391
    %v2622 = vsel %vm633, %v2621, -inf
    %2623 = vmax.xlane.f32.xlu0 %v2622
    %v2624 = vpop.xlane.xlu0 %2623
    %v2625 = vsub.f32 %v2621, %v2624
    %v2626 = vmul.f32 %v2625, 1.442695
    %v2627 = vpow.pop %v2626
    %v2628 = vsel %vm633, %v2627, 0.0
    %2629 = vadd.xlane.f32.xlu0 %v2628
    %v2630 = vpop.xlane.xlu0 %2629
    %v2631 = vrcp.pop %v2630
    %v2632 = vmul.f32 %v2630, %v2631
    %v2633 = vsub.f32 1.0, %v2632
    %v2634 = vmul.f32 %v2631, %v2633
    %v2635 = vadd.f32 %v2631, %v2634
    %vm2636 = vweird.f32 %v2630
    %vm2637 = vweird.f32 %v2631
    %vm2638 = vmor %vm2636, %vm2637
    %v2639 = vsel %vm2638, %v2631, %v2635
    %v2640 = vand.u32 2147483647, %v2630
    %vm2641 = vcmp.eq.f32.partialorder %v2640, 8.507059e+37
    %v2642 = vand.u32 %v2630, 2147483648
    %v2643 = vor.u32 1.1754944e-38, %v2642
    %v2644 = vsel %vm2641, %v2643, %v2639
    %v2645 = vmul.f32 %v2627, %v2644
    %v2647 = vsel %vm633, %v2645, 0
    %2649 = vmatpush.msra.mxu0 0.0
    %2650 = vmatpush.msra.mxu0 0.0
    %2651 = vmatpush.msra.mxu0 0.0
    %2652 = vmatpush.msra.mxu0 0.0
    %2653 = vmatpush.msra.mxu0 0.0
    %2654 = vmatpush.msra.mxu0 0.0
    %2655 = vmatpush.msra.mxu0 0.0
    %2656 = vmatpush.msra.mxu0 0.0
    %2657 = vmatpush.msra.mxu0 0.0
    %2658 = vmatpush.msra.mxu0 0.0
    %2659 = vmatpush.msra.mxu0 %v2595
    %2660 = vmatpush.msra.mxu0 %v2592
    %2661 = vmatpush.msra.mxu0 %v2589
    %2662 = vmatpush.msra.mxu0 %v2586
    %2663 = vmatpush.msra.mxu0 %v2583
    %2664 = vmatpush.msra.mxu0 %v2580
    %2665 = vmatmul.f32.gmra.mxu0 %v2647
    %v2666 = vpop.f32.mrf.mxu0
    %v2667 = vadd.f32 0.0, %v2666
    %2668 = vdwg.mxu0
    %v2669 = vld [vmem:[#allocation2 + $0x260] sm:$0xff]
    %2670 = vrot.lane.b32.xlu0 %v2472, 120
    %v2671 = vpop.permute.xlu0 %2670
    %v2672 = vsel %vm128, %v2671, 0
    %2674 = vmatpush.msra.mxu0 0.0
    %2675 = vmatpush.msra.mxu0 0.0
    %2676 = vmatpush.msra.mxu0 0.0
    %2677 = vmatpush.msra.mxu0 0.0
    %2678 = vmatpush.msra.mxu0 0.0
    %2679 = vmatpush.msra.mxu0 0.0
    %2680 = vmatpush.msra.mxu0 0.0
    %2681 = vmatpush.msra.mxu0 0.0
    %2682 = vmatpush.msra.mxu0 0.0
    %2683 = vmatpush.msra.mxu0 0.0
    %2684 = vmatpush.msra.mxu0 0.0
    %2685 = vmatpush.msra.mxu0 0.0
    %2686 = vmatpush.msra.mxu0 0.0
    %2687 = vmatpush.msra.mxu0 0.0
    %2688 = vmatpush.msra.mxu0 0.0
    %2689 = vmatpush.msra.mxu0 %v2549
    %2690 = vmatmul.f32.gmra.mxu0 %v2672
    %v2691 = vpop.f32.mrf.mxu0
    %v2692 = vadd.f32 0.0, %v2691
    %2693 = vdwg.mxu0
    %v2694 = vmul.f32 %v2692, 0.35355338
    %v2695 = vadd.f32 %v2694, %v391
    %v2696 = vsel %vm633, %v2695, -inf
    %2697 = vmax.xlane.f32.xlu0 %v2696
    %v2698 = vpop.xlane.xlu0 %2697
    %v2699 = vsub.f32 %v2695, %v2698
    %v2700 = vmul.f32 %v2699, 1.442695
    %v2701 = vpow.pop %v2700
    %v2702 = vsel %vm633, %v2701, 0.0
    %2703 = vadd.xlane.f32.xlu0 %v2702
    %v2704 = vpop.xlane.xlu0 %2703
    %v2705 = vrcp.pop %v2704
    %v2706 = vmul.f32 %v2704, %v2705
    %v2707 = vsub.f32 1.0, %v2706
    %v2708 = vmul.f32 %v2705, %v2707
    %v2709 = vadd.f32 %v2705, %v2708
    %vm2710 = vweird.f32 %v2704
    %vm2711 = vweird.f32 %v2705
    %vm2712 = vmor %vm2710, %vm2711
    %v2713 = vsel %vm2712, %v2705, %v2709
    %v2714 = vand.u32 2147483647, %v2704
    %vm2715 = vcmp.eq.f32.partialorder %v2714, 8.507059e+37
    %v2716 = vand.u32 %v2704, 2147483648
    %v2717 = vor.u32 1.1754944e-38, %v2716
    %v2718 = vsel %vm2715, %v2717, %v2713
    %v2719 = vmul.f32 %v2701, %v2718
    %2726 = vrot.lane.b32.xlu0 %v2580, 120
    %v2727 = vpop.permute.xlu0 %2726
    %2728 = vrot.lane.b32.xlu0 %v2583, 120
    %v2729 = vpop.permute.xlu0 %2728
    %2730 = vrot.lane.b32.xlu0 %v2586, 120
    %v2731 = vpop.permute.xlu0 %2730
    %2732 = vrot.lane.b32.xlu0 %v2589, 120
    %v2733 = vpop.permute.xlu0 %2732
    %2734 = vrot.lane.b32.xlu0 %v2592, 120
    %v2735 = vpop.permute.xlu0 %2734
    %2736 = vrot.lane.b32.xlu0 %v2595, 120
    %v2737 = vpop.permute.xlu0 %2736
    %v2745 = vsel %vm633, %v2719, 0
    %2747 = vmatpush.msra.mxu0 0.0
    %2748 = vmatpush.msra.mxu0 0.0
    %2749 = vmatpush.msra.mxu0 0.0
    %2750 = vmatpush.msra.mxu0 0.0
    %2751 = vmatpush.msra.mxu0 0.0
    %2752 = vmatpush.msra.mxu0 0.0
    %2753 = vmatpush.msra.mxu0 0.0
    %2754 = vmatpush.msra.mxu0 0.0
    %2755 = vmatpush.msra.mxu0 0.0
    %2756 = vmatpush.msra.mxu0 0.0
    %2757 = vmatpush.msra.mxu0 %v2737
    %2758 = vmatpush.msra.mxu0 %v2735
    %2759 = vmatpush.msra.mxu0 %v2733
    %2760 = vmatpush.msra.mxu0 %v2731
    %2761 = vmatpush.msra.mxu0 %v2729
    %2762 = vmatpush.msra.mxu0 %v2727
    %2763 = vmatmul.f32.gmra.mxu0 %v2745
    %v2764 = vpop.f32.mrf.mxu0
    %v2765 = vadd.f32 0.0, %v2764
    %2766 = vdwg.mxu0
    %v2767 = vld [vmem:[#allocation2 + $0x268] sm:$0xff]
    %v2769 = vsel %vm128, %v2765, 0
    %2771 = vmatpush.msra.mxu0 0.0
    %2772 = vmatpush.msra.mxu0 0.0
    %2773 = vmatpush.msra.mxu0 0.0
    %2774 = vmatpush.msra.mxu0 0.0
    %2775 = vmatpush.msra.mxu0 0.0
    %2776 = vmatpush.msra.mxu0 0.0
    %2777 = vmatpush.msra.mxu0 0.0
    %2778 = vmatpush.msra.mxu0 0.0
    %2779 = vmatpush.msra.mxu0 0.0
    %2780 = vmatpush.msra.mxu0 0.0
    %2781 = vmatpush.msra.mxu0 0.0
    %2782 = vmatpush.msra.mxu0 0.0
    %2783 = vmatpush.msra.mxu0 0.0
    %2784 = vmatpush.msra.mxu0 0.0
    %2785 = vmatpush.msra.mxu0 0.0
    %2786 = vmatpush.msra.mxu0 %v2767
    %2787 = vmatmul.f32.gmra.mxu0 %v2769
    %v2788 = vpop.f32.mrf.mxu0
    %v2789 = vadd.f32 0.0, %v2788
    %2790 = vdwg.mxu0
    %v2792 = vsel %vm128, %v2667, 0
    %2794 = vmatpush.msra.mxu0 0.0
    %2795 = vmatpush.msra.mxu0 0.0
    %2796 = vmatpush.msra.mxu0 0.0
    %2797 = vmatpush.msra.mxu0 0.0
    %2798 = vmatpush.msra.mxu0 0.0
    %2799 = vmatpush.msra.mxu0 0.0
    %2800 = vmatpush.msra.mxu0 0.0
    %2801 = vmatpush.msra.mxu0 0.0
    %2802 = vmatpush.msra.mxu0 0.0
    %2803 = vmatpush.msra.mxu0 0.0
    %2804 = vmatpush.msra.mxu0 0.0
    %2805 = vmatpush.msra.mxu0 0.0
    %2806 = vmatpush.msra.mxu0 0.0
    %2807 = vmatpush.msra.mxu0 0.0
    %2808 = vmatpush.msra.mxu0 0.0
    %2809 = vmatpush.msra.mxu0 %v2669
    %2810 = vmatmul.f32.gmra.mxu0 %v2792
    %v2811 = vpop.f32.mrf.mxu0
    %v2812 = vadd.f32 %v2789, %v2811
    %2813 = vdwg.mxu0
    %2814 = vrot.lane.b32.xlu0 %v2472, 112
    %v2815 = vpop.permute.xlu0 %2814
    %v2816 = vsel %vm128, %v2815, 0
    %2818 = vmatpush.msra.mxu0 0.0
    %2819 = vmatpush.msra.mxu0 0.0
    %2820 = vmatpush.msra.mxu0 0.0
    %2821 = vmatpush.msra.mxu0 0.0
    %2822 = vmatpush.msra.mxu0 0.0
    %2823 = vmatpush.msra.mxu0 0.0
    %2824 = vmatpush.msra.mxu0 0.0
    %2825 = vmatpush.msra.mxu0 0.0
    %2826 = vmatpush.msra.mxu0 0.0
    %2827 = vmatpush.msra.mxu0 0.0
    %2828 = vmatpush.msra.mxu0 0.0
    %2829 = vmatpush.msra.mxu0 0.0
    %2830 = vmatpush.msra.mxu0 0.0
    %2831 = vmatpush.msra.mxu0 0.0
    %2832 = vmatpush.msra.mxu0 0.0
    %2833 = vmatpush.msra.mxu0 %v2552
    %2834 = vmatmul.f32.gmra.mxu0 %v2816
    %v2835 = vpop.f32.mrf.mxu0
    %v2836 = vadd.f32 0.0, %v2835
    %2837 = vdwg.mxu0
    %v2838 = vmul.f32 %v2836, 0.35355338
    %v2839 = vadd.f32 %v2838, %v391
    %v2840 = vsel %vm633, %v2839, -inf
    %2841 = vmax.xlane.f32.xlu0 %v2840
    %v2842 = vpop.xlane.xlu0 %2841
    %v2843 = vsub.f32 %v2839, %v2842
    %v2844 = vmul.f32 %v2843, 1.442695
    %v2845 = vpow.pop %v2844
    %v2846 = vsel %vm633, %v2845, 0.0
    %2847 = vadd.xlane.f32.xlu0 %v2846
    %v2848 = vpop.xlane.xlu0 %2847
    %v2849 = vrcp.pop %v2848
    %v2850 = vmul.f32 %v2848, %v2849
    %v2851 = vsub.f32 1.0, %v2850
    %v2852 = vmul.f32 %v2849, %v2851
    %v2853 = vadd.f32 %v2849, %v2852
    %vm2854 = vweird.f32 %v2848
    %vm2855 = vweird.f32 %v2849
    %vm2856 = vmor %vm2854, %vm2855
    %v2857 = vsel %vm2856, %v2849, %v2853
    %v2858 = vand.u32 2147483647, %v2848
    %vm2859 = vcmp.eq.f32.partialorder %v2858, 8.507059e+37
    %v2860 = vand.u32 %v2848, 2147483648
    %v2861 = vor.u32 1.1754944e-38, %v2860
    %v2862 = vsel %vm2859, %v2861, %v2857
    %v2863 = vmul.f32 %v2845, %v2862
    %2864 = vrot.lane.b32.xlu0 %v2580, 112
    %v2865 = vpop.permute.xlu0 %2864
    %2866 = vrot.lane.b32.xlu0 %v2583, 112
    %v2867 = vpop.permute.xlu0 %2866
    %2868 = vrot.lane.b32.xlu0 %v2586, 112
    %v2869 = vpop.permute.xlu0 %2868
    %2870 = vrot.lane.b32.xlu0 %v2589, 112
    %v2871 = vpop.permute.xlu0 %2870
    %2872 = vrot.lane.b32.xlu0 %v2592, 112
    %v2873 = vpop.permute.xlu0 %2872
    %2874 = vrot.lane.b32.xlu0 %v2595, 112
    %v2875 = vpop.permute.xlu0 %2874
    %v2883 = vsel %vm633, %v2863, 0
    %2885 = vmatpush.msra.mxu0 0.0
    %2886 = vmatpush.msra.mxu0 0.0
    %2887 = vmatpush.msra.mxu0 0.0
    %2888 = vmatpush.msra.mxu0 0.0
    %2889 = vmatpush.msra.mxu0 0.0
    %2890 = vmatpush.msra.mxu0 0.0
    %2891 = vmatpush.msra.mxu0 0.0
    %2892 = vmatpush.msra.mxu0 0.0
    %2893 = vmatpush.msra.mxu0 0.0
    %2894 = vmatpush.msra.mxu0 0.0
    %2895 = vmatpush.msra.mxu0 %v2875
    %2896 = vmatpush.msra.mxu0 %v2873
    %2897 = vmatpush.msra.mxu0 %v2871
    %2898 = vmatpush.msra.mxu0 %v2869
    %2899 = vmatpush.msra.mxu0 %v2867
    %2900 = vmatpush.msra.mxu0 %v2865
    %2901 = vmatmul.f32.gmra.mxu0 %v2883
    %v2902 = vpop.f32.mrf.mxu0
    %v2903 = vadd.f32 0.0, %v2902
    %2904 = vdwg.mxu0
    %v2905 = vld [vmem:[#allocation2 + $0x270] sm:$0xff]
    %v2907 = vsel %vm128, %v2903, 0
    %2909 = vmatpush.msra.mxu0 0.0
    %2910 = vmatpush.msra.mxu0 0.0
    %2911 = vmatpush.msra.mxu0 0.0
    %2912 = vmatpush.msra.mxu0 0.0
    %2913 = vmatpush.msra.mxu0 0.0
    %2914 = vmatpush.msra.mxu0 0.0
    %2915 = vmatpush.msra.mxu0 0.0
    %2916 = vmatpush.msra.mxu0 0.0
    %2917 = vmatpush.msra.mxu0 0.0
    %2918 = vmatpush.msra.mxu0 0.0
    %2919 = vmatpush.msra.mxu0 0.0
    %2920 = vmatpush.msra.mxu0 0.0
    %2921 = vmatpush.msra.mxu0 0.0
    %2922 = vmatpush.msra.mxu0 0.0
    %2923 = vmatpush.msra.mxu0 0.0
    %2924 = vmatpush.msra.mxu0 %v2905
    %2925 = vmatmul.f32.gmra.mxu0 %v2907
    %v2926 = vpop.f32.mrf.mxu0
    %v2927 = vadd.f32 0.0, %v2926
    %2928 = vdwg.mxu0
    %v2929 = vadd.f32 %v2812, %v2927
    %2930 = vrot.lane.b32.xlu0 %v2472, 104
    %v2931 = vpop.permute.xlu0 %2930
    %v2932 = vsel %vm128, %v2931, 0
    %2934 = vmatpush.msra.mxu0 0.0
    %2935 = vmatpush.msra.mxu0 0.0
    %2936 = vmatpush.msra.mxu0 0.0
    %2937 = vmatpush.msra.mxu0 0.0
    %2938 = vmatpush.msra.mxu0 0.0
    %2939 = vmatpush.msra.mxu0 0.0
    %2940 = vmatpush.msra.mxu0 0.0
    %2941 = vmatpush.msra.mxu0 0.0
    %2942 = vmatpush.msra.mxu0 0.0
    %2943 = vmatpush.msra.mxu0 0.0
    %2944 = vmatpush.msra.mxu0 0.0
    %2945 = vmatpush.msra.mxu0 0.0
    %2946 = vmatpush.msra.mxu0 0.0
    %2947 = vmatpush.msra.mxu0 0.0
    %2948 = vmatpush.msra.mxu0 0.0
    %2949 = vmatpush.msra.mxu0 %v2555
    %2950 = vmatmul.f32.gmra.mxu0 %v2932
    %v2951 = vpop.f32.mrf.mxu0
    %v2952 = vadd.f32 0.0, %v2951
    %2953 = vdwg.mxu0
    %v2954 = vmul.f32 %v2952, 0.35355338
    %v2955 = vadd.f32 %v2954, %v391
    %v2956 = vsel %vm633, %v2955, -inf
    %2957 = vmax.xlane.f32.xlu0 %v2956
    %v2958 = vpop.xlane.xlu0 %2957
    %v2959 = vsub.f32 %v2955, %v2958
    %v2960 = vmul.f32 %v2959, 1.442695
    %v2961 = vpow.pop %v2960
    %v2962 = vsel %vm633, %v2961, 0.0
    %2963 = vadd.xlane.f32.xlu0 %v2962
    %v2964 = vpop.xlane.xlu0 %2963
    %v2965 = vrcp.pop %v2964
    %v2966 = vmul.f32 %v2964, %v2965
    %v2967 = vsub.f32 1.0, %v2966
    %v2968 = vmul.f32 %v2965, %v2967
    %v2969 = vadd.f32 %v2965, %v2968
    %vm2970 = vweird.f32 %v2964
    %vm2971 = vweird.f32 %v2965
    %vm2972 = vmor %vm2970, %vm2971
    %v2973 = vsel %vm2972, %v2965, %v2969
    %v2974 = vand.u32 2147483647, %v2964
    %vm2975 = vcmp.eq.f32.partialorder %v2974, 8.507059e+37
    %v2976 = vand.u32 %v2964, 2147483648
    %v2977 = vor.u32 1.1754944e-38, %v2976
    %v2978 = vsel %vm2975, %v2977, %v2973
    %v2979 = vmul.f32 %v2961, %v2978
    %2980 = vrot.lane.b32.xlu0 %v2580, 104
    %v2981 = vpop.permute.xlu0 %2980
    %2982 = vrot.lane.b32.xlu0 %v2583, 104
    %v2983 = vpop.permute.xlu0 %2982
    %2984 = vrot.lane.b32.xlu0 %v2586, 104
    %v2985 = vpop.permute.xlu0 %2984
    %2986 = vrot.lane.b32.xlu0 %v2589, 104
    %v2987 = vpop.permute.xlu0 %2986
    %2988 = vrot.lane.b32.xlu0 %v2592, 104
    %v2989 = vpop.permute.xlu0 %2988
    %2990 = vrot.lane.b32.xlu0 %v2595, 104
    %v2991 = vpop.permute.xlu0 %2990
    %v2999 = vsel %vm633, %v2979, 0
    %3001 = vmatpush.msra.mxu0 0.0
    %3002 = vmatpush.msra.mxu0 0.0
    %3003 = vmatpush.msra.mxu0 0.0
    %3004 = vmatpush.msra.mxu0 0.0
    %3005 = vmatpush.msra.mxu0 0.0
    %3006 = vmatpush.msra.mxu0 0.0
    %3007 = vmatpush.msra.mxu0 0.0
    %3008 = vmatpush.msra.mxu0 0.0
    %3009 = vmatpush.msra.mxu0 0.0
    %3010 = vmatpush.msra.mxu0 0.0
    %3011 = vmatpush.msra.mxu0 %v2991
    %3012 = vmatpush.msra.mxu0 %v2989
    %3013 = vmatpush.msra.mxu0 %v2987
    %3014 = vmatpush.msra.mxu0 %v2985
    %3015 = vmatpush.msra.mxu0 %v2983
    %3016 = vmatpush.msra.mxu0 %v2981
    %3017 = vmatmul.f32.gmra.mxu0 %v2999
    %v3018 = vpop.f32.mrf.mxu0
    %v3019 = vadd.f32 0.0, %v3018
    %3020 = vdwg.mxu0
    %v3021 = vld [vmem:[#allocation2 + $0x278] sm:$0xff]
    %v3023 = vsel %vm128, %v3019, 0
    %3025 = vmatpush.msra.mxu0 0.0
    %3026 = vmatpush.msra.mxu0 0.0
    %3027 = vmatpush.msra.mxu0 0.0
    %3028 = vmatpush.msra.mxu0 0.0
    %3029 = vmatpush.msra.mxu0 0.0
    %3030 = vmatpush.msra.mxu0 0.0
    %3031 = vmatpush.msra.mxu0 0.0
    %3032 = vmatpush.msra.mxu0 0.0
    %3033 = vmatpush.msra.mxu0 0.0
    %3034 = vmatpush.msra.mxu0 0.0
    %3035 = vmatpush.msra.mxu0 0.0
    %3036 = vmatpush.msra.mxu0 0.0
    %3037 = vmatpush.msra.mxu0 0.0
    %3038 = vmatpush.msra.mxu0 0.0
    %3039 = vmatpush.msra.mxu0 0.0
    %3040 = vmatpush.msra.mxu0 %v3021
    %3041 = vmatmul.f32.gmra.mxu0 %v3023
    %v3042 = vpop.f32.mrf.mxu0
    %v3043 = vadd.f32 0.0, %v3042
    %3044 = vdwg.mxu0
    %v3045 = vadd.f32 %v2929, %v3043
    %v3046 = vperm.slane %v2435, 0
    %v3047 = vadd.f32 %v3045, %v3046
    %v3048 = vadd.f32 %v3047, %v2431
    %v3049 = vsel %vm231, %v3048, 0.0
    %3050 = vadd.xlane.f32.xlu0 %v3049
    %v3051 = vpop.xlane.xlu0 %3050
    %v3052 = vmul.f32 %v3051, %v256
    %v3053 = vsub.f32 %v3048, %v3052
    %v3054 = vmul.f32 %v3053, %v3053
    %v3055 = vsel %vm231, %v3054, 0.0
    %3056 = vadd.xlane.f32.xlu0 %v3055
    %v3057 = vpop.xlane.xlu0 %3056
    %v3058 = vmul.f32 %v3057, %v256
    %v3059 = vadd.f32 %v3058, 1e-12
    %v3060 = vrsqrt.pop %v3059
    %v3061 = vmul.f32 %v3060, %v3059
    %v3062 = vmul.f32 %v3061, %v3060
    %v3063 = vmul.f32 0.5, %v3062
    %v3064 = vsub.f32 1.5, %v3063
    %v3065 = vmul.f32 %v3060, %v3064
    %vm3066 = vweird.f32 %v3059
    %vm3067 = vweird.f32 %v3060
    %vm3068 = vmor %vm3066, %vm3067
    %v3069 = vsel %vm3068, %v3060, %v3065
    %v3070 = vmul.f32 %v3053, %v3069
    %v3071 = vperm.slane %v2436, 0
    %v3072 = vmul.f32 %v3070, %v3071
    %v3073 = vperm.slane %v2437, 0
    %v3074 = vadd.f32 %v3072, %v3073
    %v3075 = vld [vmem:[#allocation2 + $0x280] sm:$0xff]
    %v3076 = vld [vmem:[#allocation2 + $0x288] sm:$0xff]
    %v3077 = vld [vmem:[#allocation2 + $0x290] sm:$0xff]
    %v3078 = vld [vmem:[#allocation2 + $0x298] sm:$0xff]
    %v3079 = vperm.slane %v2440, 0
    %v3081 = vsel %vm231, %v3074, 0
    %3083 = vmatpush.msra.mxu0 0.0
    %3084 = vmatpush.msra.mxu0 0.0
    %3085 = vmatpush.msra.mxu0 0.0
    %3086 = vmatpush.msra.mxu0 0.0
    %3087 = vmatpush.msra.mxu0 0.0
    %3088 = vmatpush.msra.mxu0 0.0
    %3089 = vmatpush.msra.mxu0 0.0
    %3090 = vmatpush.msra.mxu0 0.0
    %3091 = vmatpush.msra.mxu0 0.0
    %3092 = vmatpush.msra.mxu0 0.0
    %3093 = vmatpush.msra.mxu0 0.0
    %3094 = vmatpush.msra.mxu0 0.0
    %3095 = vmatpush.msra.mxu0 %v3078
    %3096 = vmatpush.msra.mxu0 %v3077
    %3097 = vmatpush.msra.mxu0 %v3076
    %3098 = vmatpush.msra.mxu0 %v3075
    %3099 = vmatmul.f32.gmra.mxu0 %v3081
    %v3100 = vpop.f32.mrf.mxu0
    %v3101 = vadd.f32 %v3079, %v3100
    %3102 = vdwg.mxu0
    %v3103 = vmul.f32 %v3101, 0.5
    %v3104 = vmul.f32 %v3101, 0.044715
    %v3105 = vmul.f32 %v3104, %v3101
    %v3106 = vmul.f32 %v3105, %v3101
    %v3107 = vadd.f32 %v3101, %v3106
    %v3108 = vmul.f32 %v3107, 0.7978846
    %v3109 = vtanh.pop %v3108
    %v3110 = vadd.f32 %v3109, 1.0
    %v3111 = vmul.f32 %v3103, %v3110
    %v3112 = vld [vmem:[#allocation2 + $0x2a0] sm:$0xff]
    %v3113 = vld [vmem:[#allocation2 + $0x2a8] sm:$0xff]
    %v3114 = vld [vmem:[#allocation2 + $0x2b0] sm:$0xff]
    %v3115 = vld [vmem:[#allocation2 + $0x2b8] sm:$0xff]
    %v3116 = vld [vmem:[#allocation2 + $0x2c0] sm:$0xff]
    %v3117 = vld [vmem:[#allocation2 + $0x2c8] sm:$0xff]
    %v3118 = vld [vmem:[#allocation2 + $0x2d0] sm:$0xff]
    %v3119 = vld [vmem:[#allocation2 + $0x2d8] sm:$0xff]
    %v3120 = vperm.slane %v2441, 0
    %v3122 = vsel %vm2203, %v3111, 0
    %3124 = vmatpush.msra.mxu0 0.0
    %3125 = vmatpush.msra.mxu0 0.0
    %3126 = vmatpush.msra.mxu0 0.0
    %3127 = vmatpush.msra.mxu0 0.0
    %3128 = vmatpush.msra.mxu0 0.0
    %3129 = vmatpush.msra.mxu0 0.0
    %3130 = vmatpush.msra.mxu0 0.0
    %3131 = vmatpush.msra.mxu0 0.0
    %3132 = vmatpush.msra.mxu0 %v3119
    %3133 = vmatpush.msra.mxu0 %v3118
    %3134 = vmatpush.msra.mxu0 %v3117
    %3135 = vmatpush.msra.mxu0 %v3116
    %3136 = vmatpush.msra.mxu0 %v3115
    %3137 = vmatpush.msra.mxu0 %v3114
    %3138 = vmatpush.msra.mxu0 %v3113
    %3139 = vmatpush.msra.mxu0 %v3112
    %3140 = vmatmul.f32.gmra.mxu0 %v3122
    %v3141 = vpop.f32.mrf.mxu0
    %v3142 = vadd.f32 %v3120, %v3141
    %3143 = vdwg.mxu0
    %v3144 = vadd.f32 %v3142, %v3074
    %v3145 = vsel %vm231, %v3144, 0.0
    %3146 = vadd.xlane.f32.xlu0 %v3145
    %v3147 = vpop.xlane.xlu0 %3146
    %v3148 = vmul.f32 %v3147, %v256
    %v3149 = vsub.f32 %v3144, %v3148
    %v3150 = vmul.f32 %v3149, %v3149
    %v3151 = vsel %vm231, %v3150, 0.0
    %3152 = vadd.xlane.f32.xlu0 %v3151
    %v3153 = vpop.xlane.xlu0 %3152
    %v3154 = vmul.f32 %v3153, %v256
    %v3155 = vadd.f32 %v3154, 1e-12
    %v3156 = vrsqrt.pop %v3155
    %v3157 = vmul.f32 %v3156, %v3155
    %v3158 = vmul.f32 %v3157, %v3156
    %v3159 = vmul.f32 0.5, %v3158
    %v3160 = vsub.f32 1.5, %v3159
    %v3161 = vmul.f32 %v3156, %v3160
    %vm3162 = vweird.f32 %v3155
    %vm3163 = vweird.f32 %v3156
    %vm3164 = vmor %vm3162, %vm3163
    %v3165 = vsel %vm3164, %v3156, %v3161
    %v3166 = vmul.f32 %v3149, %v3165
    %v3167 = vperm.slane %v2438, 0
    %v3168 = vmul.f32 %v3166, %v3167
    %v3169 = vperm.slane %v2439, 0
    %v3170 = vadd.f32 %v3168, %v3169
    %v3171 = vld [vmem:[#allocation2 + $0xc8] sm:$0xff]
    %v3172 = vld [vmem:[#allocation2 + $0xd0] sm:$0xff]
    %v3173 = vld [vmem:[#allocation2 + $0xd8] sm:$0xff]
    %v3174 = vld [vmem:[#allocation2 + $0xe0] sm:$0xff]
    %v3175 = vld [vmem:[#allocation2 + $0xe8] sm:$0x1]
    %v3176 = vperm.slane %v3175, 0
    %v3178 = vsel %vm231, %v3170, 0
    %3180 = vmatpush.msra.mxu0 0.0
    %3181 = vmatpush.msra.mxu0 0.0
    %3182 = vmatpush.msra.mxu0 0.0
    %3183 = vmatpush.msra.mxu0 0.0
    %3184 = vmatpush.msra.mxu0 0.0
    %3185 = vmatpush.msra.mxu0 0.0
    %3186 = vmatpush.msra.mxu0 0.0
    %3187 = vmatpush.msra.mxu0 0.0
    %3188 = vmatpush.msra.mxu0 0.0
    %3189 = vmatpush.msra.mxu0 0.0
    %3190 = vmatpush.msra.mxu0 0.0
    %3191 = vmatpush.msra.mxu0 0.0
    %3192 = vmatpush.msra.mxu0 %v3174
    %3193 = vmatpush.msra.mxu0 %v3173
    %3194 = vmatpush.msra.mxu0 %v3172
    %3195 = vmatpush.msra.mxu0 %v3171
    %3196 = vmatmul.f32.gmra.mxu0 %v3178
    %v3197 = vpop.f32.mrf.mxu0
    %v3198 = vadd.f32 %v3176, %v3197
    %3199 = vdwg.mxu0
    %v3200 = vtanh.pop %v3198
    %3201 = vst [vmem:[#allocation5] sm:$0xff] %v3200
    // Predicated region
    $region18: #{tpu_custom_call.1} parent=1 // pred_check
      _
    $region19: #{tpu_custom_call.1} parent=1 // pred_check_branch
      %3203 = sbr.rel (0) target = $region21
    $region20: #{tpu_custom_call.1} parent=1 // pred_region
      %3205 = vsyncadd [#allocation4], 0
      %s3207 = sshll.u32 [#allocation5], 4
      %s3208 = int_to_ptr.vmem [resolvable:$true] %s3207
      %s3209 = sshll.u32 %s3, 4
      %s3210 = int_to_ptr.hbm [resolvable:$true] %s3209
      %3212 = dma.vmem_to_hbm [thread:$0]  %s3208, 128, %s3210, [#allocation4]
    $region21: #{tpu_custom_call.1} parent=1 // pred_fallthru
      _
    // Predicated region
    $region22: #{tpu_custom_call.1} parent=1 // pred_check
      _
    $region23: #{tpu_custom_call.1} parent=1 // pred_check_branch
      %3214 = sbr.rel (0) target = $region25
    $region24: #{tpu_custom_call.1} parent=1 // pred_region
      %3216 = dma.done [#allocation4], 128
    $region25: #{tpu_custom_call.1} parent=1 // pred_fallthru
      _
    %3217 = vsyncpa [#allocation3], 1
    %3218 = vsyncpa [#allocation4], 1

</llo_original>
